<compile_context>
chip_gen: v6e
topology: v6e:2x2x1
jax: 0.10.0
libtpu: 0.0.40
codegen_flags: <defaults>
</compile_context>

<pallas_src>
import functools

import jax
import jax.numpy as jnp
from jax.experimental import pallas as pl
from jax.experimental.pallas import tpu as pltpu

MIN_VALUE = 1.0   # module global min_value
MAX_VALUE = 1.0   # module global max_value

IN_FEATURES = 64 * 64     # 4096
OUT_FEATURES = 100 * 100  # 10000


def _linear_clamp_kernel(x_ref, w_ref, b_ref, o_ref, *, min_value, max_value):
    # Single K-wide matmul per N tile: no accumulator, no init/finalize gating.
    y = jnp.dot(x_ref[...], w_ref[...], preferred_element_type=jnp.float32)
    y = y + b_ref[...]
    y = jnp.maximum(y, min_value)   # torch.clamp_min
    y = jnp.minimum(y, max_value)   # torch.clamp_max
    o_ref[...] = y.astype(o_ref.dtype)


def linear_clamp(x, w_kn, bias, *, min_value=MIN_VALUE, max_value=MAX_VALUE,
                 tn=512):
    """y = clamp(x @ w_kn + bias, min_value, max_value)

    x:    (M, K) float32
    w_kn: (K, N) float32  (already transposed from PyTorch's (N, K))
    bias: (N,)   float32

    tn=512 keeps the weight tile at K*tn*4 = 8 MiB (16 MiB double-buffered),
    which fits comfortably inside the explicit 48 MiB VMEM limit on every
    generation (v7x has 64 MiB physical per TC).
    """
    M, K = x.shape
    K2, N = w_kn.shape
    assert K == K2 and bias.shape == (N,)

    # Pad N up to a multiple of the lane tile so BlockSpecs are legal.
    n_pad = pl.cdiv(N, tn) * tn
    if n_pad != N:
        w_kn = jnp.pad(w_kn, ((0, 0), (0, n_pad - N)))
        bias = jnp.pad(bias, (0, n_pad - N))

    bias2d = bias.reshape(1, n_pad)

    kernel = functools.partial(_linear_clamp_kernel,
                               min_value=min_value, max_value=max_value)

    out = pl.pallas_call(
        kernel,
        out_shape=jax.ShapeDtypeStruct((M, n_pad), x.dtype),
        grid_spec=pltpu.PrefetchScalarGridSpec(
            num_scalar_prefetch=0,
            grid=(n_pad // tn,),
            in_specs=[
                # x: full row, resident across the whole grid (index map is
                # constant, so it is only DMA'd once).
                pl.BlockSpec((M, K), lambda n: (0, 0)),
                # Weight: (K, tn) column slab per step — the only real stream.
                pl.BlockSpec((K, tn), lambda n: (0, n)),
                # Bias slab matching the output tile.
                pl.BlockSpec((1, tn), lambda n: (0, n)),
            ],
            out_specs=pl.BlockSpec((M, tn), lambda n: (0, n)),
        ),
        compiler_params=pltpu.CompilerParams(
            dimension_semantics=("parallel",),
            vmem_limit_bytes=48 * 1024 * 1024,
        ),
    )(x, w_kn, bias2d)

    return out[:, :N]


def init_params(key, in_features, out_features):
    # Deterministic init mimicking nn.Linear default: U(-1/sqrt(in), 1/sqrt(in)).
    kw, kb = jax.random.split(key)
    bound = 1.0 / jnp.sqrt(jnp.float32(in_features))
    weight = jax.random.uniform(kw, (out_features, in_features),
                                dtype=jnp.float32, minval=-bound, maxval=bound)
    bias = jax.random.uniform(kb, (out_features,),
                              dtype=jnp.float32, minval=-bound, maxval=bound)
    return weight, bias


if __name__ == "__main__":
    key = jax.random.PRNGKey(0)
    kx, kp = jax.random.split(key)

    # x1 = torch.randn(1, 64*64)
    x1 = jax.random.normal(kx, (1, IN_FEATURES), dtype=jnp.float32)

    weight, bias = init_params(kp, IN_FEATURES, OUT_FEATURES)  # (N, K), (N,)
    w_kn = weight.T  # (K, N) layout for the kernel

    out = linear_clamp(x1, w_kn, bias)
    jax.block_until_ready(out)

    # Reference check in plain JAX.
    ref = jnp.minimum(jnp.maximum(x1 @ w_kn + bias, MIN_VALUE), MAX_VALUE)
    assert out.shape == (1, OUT_FEATURES)
    assert jnp.allclose(out, ref, atol=1e-5, rtol=1e-5)
    # Note: with min_value == max_value == 1.0 the output is the constant 1.0;
    # the matmul path is kept so the kernel stays correct for any clamp bounds.

    print("KERNEL_OK")
</pallas_src>

<mosaic_0001>
module attributes {stable_mosaic.version = 11 : i64} {
  func.func @_linear_clamp_kernel(%arg0: i32, %arg1: memref<1x4096xf32, #tpu.memory_space<vmem>>, %arg2: memref<4096x512xf32, #tpu.memory_space<vmem>>, %arg3: memref<1x512xf32, #tpu.memory_space<vmem>>, %arg4: memref<1x512xf32, #tpu.memory_space<vmem>>) attributes {dimension_semantics = [#tpu.dimension_semantics<parallel>], iteration_bounds = array<i64: 20>, scalar_prefetch = 0 : i64, scratch_operands = 0 : i64, tpu.core_type = #tpu.core_type<tc>, window_params = [{pipeline_mode = #tpu.pipeline_mode<synchronous>, transform_indices = @transform_0, window_bounds = array<i64: 1, 4096>}, {transform_indices = @transform_1, window_bounds = array<i64: 4096, 512>}, {transform_indices = @transform_2, window_bounds = array<i64: 1, 512>}, {transform_indices = @transform_3, window_bounds = array<i64: 1, 512>}]} {
    %c0 = arith.constant 0 : index
    %c0_0 = arith.constant 0 : index
    %0 = vector.load %arg1[%c0, %c0_0] : memref<1x4096xf32, #tpu.memory_space<vmem>>, vector<1x4096xf32>
    %c0_1 = arith.constant 0 : index
    %c0_2 = arith.constant 0 : index
    %1 = vector.load %arg2[%c0_1, %c0_2] : memref<4096x512xf32, #tpu.memory_space<vmem>>, vector<4096x512xf32>
    %cst = arith.constant dense<0.000000e+00> : vector<1x512xf32>
    %2 = tpu.matmul %0, %1, %cst {dimension_numbers = #tpu.dot_dimension_numbers<[1], [0], [0], [1], [0, 0, 1, 1], [], []>} : vector<1x4096xf32>, vector<4096x512xf32>, vector<1x512xf32> -> vector<1x512xf32>
    %c0_3 = arith.constant 0 : index
    %c0_4 = arith.constant 0 : index
    %3 = vector.load %arg3[%c0_3, %c0_4] : memref<1x512xf32, #tpu.memory_space<vmem>>, vector<1x512xf32>
    %4 = arith.addf %2, %3 : vector<1x512xf32>
    %cst_5 = arith.constant 1.000000e+00 : f32
    %5 = vector.broadcast %cst_5 : f32 to vector<1x512xf32>
    %6 = arith.maximumf %4, %5 : vector<1x512xf32>
    %cst_6 = arith.constant 1.000000e+00 : f32
    %7 = vector.broadcast %cst_6 : f32 to vector<1x512xf32>
    %8 = arith.minimumf %6, %7 : vector<1x512xf32>
    %c0_7 = arith.constant 0 : index
    %c0_8 = arith.constant 0 : index
    %9 = vector.load %arg4[%c0_7, %c0_8] : memref<1x512xf32, #tpu.memory_space<vmem>>, vector<1x512xf32>
    tpu.vector_store %arg4[%c0_7, %c0_8], %8 {strides = array<i32>} : memref<1x512xf32, #tpu.memory_space<vmem>>, vector<1x512xf32>,
    return
  }
  func.func @transform_0(%arg0: i32) -> (i32, i32) {
    %c0_i32 = arith.constant 0 : i32
    %c0_i32_0 = arith.constant 0 : i32
    %c0_i32_1 = arith.constant 0 : i32
    return %c0_i32, %c0_i32_0 : i32, i32
  }
  func.func @transform_1(%arg0: i32) -> (i32, i32) {
    %c0_i32 = arith.constant 0 : i32
    %c0_i32_0 = arith.constant 0 : i32
    return %c0_i32, %arg0 : i32, i32
  }
  func.func @transform_2(%arg0: i32) -> (i32, i32) {
    %c0_i32 = arith.constant 0 : i32
    %c0_i32_0 = arith.constant 0 : i32
    return %c0_i32, %arg0 : i32, i32
  }
  func.func @transform_3(%arg0: i32) -> (i32, i32) {
    %c0_i32 = arith.constant 0 : i32
    %c0_i32_0 = arith.constant 0 : i32
    return %c0_i32, %arg0 : i32, i32
  }
}

</mosaic_0001>

<llo_original>
// kernel: tpu_custom_call.1
$region0: #{tpu_custom_call.1}
  #allocation0 [shape = 'u32[]', space=smem, size = 0x4, offset = 0x4, fixed_abs, tag = 'smem constant byte address 0x4 - core index']
  #allocation1 [shape = 'u32[144,128]{1,0:T(1,128)}', space=vmem, size = 0x12000, scoped, tag = 'internal scratch']
  %s0 = inlined_call_operand.hbm [shape: f32[1,4096], index: 0, kind: input, shape index: {}]
  %s1 = inlined_call_operand.hbm [shape: f32[4096,10240], index: 1, kind: input, shape index: {}]
  %s2 = inlined_call_operand.hbm [shape: f32[1,10240], index: 2, kind: input, shape index: {}]
  %s3 = inlined_call_operand.hbm [shape: f32[1,10240], index: 3, kind: output, shape index: {}]
  %s4 = sld [smem:[#allocation0]]
  $region57: #{tpu_custom_call.1} parent=0
    _
  %s6 = ssub.s32 1, %s4
  %s7 = scalar_select 0, %s6, %s4
  $region1: #{tpu_custom_call.1} parent=0
    #allocation2 [shape = 'u8[16384]{0}', space=vmem, size = 0x4000, scoped, tag = 'input window, operand 0, single buffered']
    #allocation3 [shape = 's32[2]{0}', space=sflag, size = 0x8, scoped, tag = 'scoped memory for tpu_custom_call.1']
    #allocation4 [shape = 's32[2]{0}', space=sflag, size = 0x8, scoped, tag = 'scoped memory for tpu_custom_call.1']
    #allocation5 [shape = 'u8[16777216]{0}', space=vmem, size = 0x1000000, scoped, tag = 'input window, operand 1']
    #allocation6 [shape = 's32[2]{0}', space=sflag, size = 0x8, scoped, tag = 'scoped memory for tpu_custom_call.1']
    #allocation7 [shape = 'u8[4096]{0}', space=vmem, size = 0x1000, scoped, tag = 'input window, operand 2']
    #allocation8 [shape = 'u8[4096]{0}', space=vmem, size = 0x1000, scoped, tag = 'output window, operand 0']
    %8 = vsyncpa [#allocation3], 0
    %9 = vsyncpa [#allocation6], 0
    %s10 = scalar_lea.sflag [#allocation6], 1
    %11 = vsyncpa %s10, 0
    %12 = vsyncpa [#allocation4], 0
    %s13 = scalar_lea.sflag [#allocation4], 1
    %14 = vsyncpa %s13, 0
    loop: start=0, step=1, limit=22
    $region2: #{tpu_custom_call.1} parent=1 // loop_pre_header
      _
    $region3: #{tpu_custom_call.1} parent=1 // loop_header
      %s16 = sphi 0, %s20
      %p17 = scmp.ge.s32.totalorder %s16, 22
      %s24 = sphi 0, %s24
      %s26 = sphi 0, %s24
      %s27 = sphi 0, %s26
      %s41 = sphi 0, %s27
      %s47 = sphi 0, %s49
      %s50 = sphi 0, %s47
      %s51 = sphi 0, %s50
      %s67 = sphi 0, %s51
      %s73 = sphi 0, %s75
      %s76 = sphi 0, %s73
      %s77 = sphi 0, %s76
      %s93 = sphi 0, %s77
      %s99 = sphi 0, %s101
      %s102 = sphi 0, %s99
      %s103 = sphi 0, %s102
      %s119 = sphi 0, %s103
    $region4: #{tpu_custom_call.1} parent=1 // loop_header_branch
      %19 = sbr.rel (%p17) target = $region8
    $region5: #{tpu_custom_call.1} parent=1 // loop_body
      %s21 = ssub.s32 %s16, 1
      %s22 = ssub.s32 %s16, 2
      %s23 = sadd.s32 %s16, 1
      %s25 = sadd.s32 %s24, 1
      %p28 = scmp.eq.s32.totalorder %s16, 19
      %p29 = scmp.ne.s32.totalorder %s24, %s26
      %p30 = scmp.eq.s32.totalorder %s16, 0
      %p31 = por %p29, %p30
      %p32 = scmp.ne.s32.totalorder %s24, %s26
      %p33 = scmp.eq.s32.totalorder %s21, 19
      %p34 = por %p32, %p33
      %p35 = scmp.ne.s32.totalorder %s26, %s27
      %p36 = scmp.eq.s32.totalorder %s21, 0
      %p37 = por %p35, %p36
      %p38 = scmp.ne.s32.totalorder %s26, %s27
      %p39 = scmp.eq.s32.totalorder %s22, 19
      %p40 = por %p38, %p39
      %p42 = scmp.ne.s32.totalorder %s27, %s41
      %p43 = scmp.eq.s32.totalorder %s22, 0
      %p44 = por %p42, %p43
      %s45 = ssub.s32 %s16, %s23
      %p46 = scmp.eq.s32.totalorder %s45, 0
      %s48 = sadd.s32 %s47, 1
      %s49 = scalar_select %p46, %s47, %s48
      %p52 = pneg %p46
      %p53 = scmp.eq.s32.totalorder %s16, 19
      %p54 = por %p52, %p53
      %p55 = scmp.ne.s32.totalorder %s47, %s50
      %p56 = scmp.eq.s32.totalorder %s16, 0
      %p57 = por %p55, %p56
      %p58 = scmp.ne.s32.totalorder %s47, %s50
      %p59 = scmp.eq.s32.totalorder %s21, 19
      %p60 = por %p58, %p59
      %p61 = scmp.ne.s32.totalorder %s50, %s51
      %p62 = scmp.eq.s32.totalorder %s21, 0
      %p63 = por %p61, %p62
      %p64 = scmp.ne.s32.totalorder %s50, %s51
      %p65 = scmp.eq.s32.totalorder %s22, 19
      %p66 = por %p64, %p65
      %p68 = scmp.ne.s32.totalorder %s51, %s67
      %p69 = scmp.eq.s32.totalorder %s22, 0
      %p70 = por %p68, %p69
      %s71 = ssub.s32 %s16, %s23
      %p72 = scmp.eq.s32.totalorder %s71, 0
      %s74 = sadd.s32 %s73, 1
      %s75 = scalar_select %p72, %s73, %s74
      %p78 = pneg %p72
      %p79 = scmp.eq.s32.totalorder %s16, 19
      %p80 = por %p78, %p79
      %p81 = scmp.ne.s32.totalorder %s73, %s76
      %p82 = scmp.eq.s32.totalorder %s16, 0
      %p83 = por %p81, %p82
      %p84 = scmp.ne.s32.totalorder %s73, %s76
      %p85 = scmp.eq.s32.totalorder %s21, 19
      %p86 = por %p84, %p85
      %p87 = scmp.ne.s32.totalorder %s76, %s77
      %p88 = scmp.eq.s32.totalorder %s21, 0
      %p89 = por %p87, %p88
      %p90 = scmp.ne.s32.totalorder %s76, %s77
      %p91 = scmp.eq.s32.totalorder %s22, 19
      %p92 = por %p90, %p91
      %p94 = scmp.ne.s32.totalorder %s77, %s93
      %p95 = scmp.eq.s32.totalorder %s22, 0
      %p96 = por %p94, %p95
      %s97 = ssub.s32 %s16, %s23
      %p98 = scmp.eq.s32.totalorder %s97, 0
      %s100 = sadd.s32 %s99, 1
      %s101 = scalar_select %p98, %s99, %s100
      %p104 = pneg %p98
      %p105 = scmp.eq.s32.totalorder %s16, 19
      %p106 = por %p104, %p105
      %p107 = scmp.ne.s32.totalorder %s99, %s102
      %p108 = scmp.eq.s32.totalorder %s16, 0
      %p109 = por %p107, %p108
      %p110 = scmp.ne.s32.totalorder %s99, %s102
      %p111 = scmp.eq.s32.totalorder %s21, 19
      %p112 = por %p110, %p111
      %p113 = scmp.ne.s32.totalorder %s102, %s103
      %p114 = scmp.eq.s32.totalorder %s21, 0
      %p115 = por %p113, %p114
      %p116 = scmp.ne.s32.totalorder %s102, %s103
      %p117 = scmp.eq.s32.totalorder %s22, 19
      %p118 = por %p116, %p117
      %p120 = scmp.ne.s32.totalorder %s103, %s119
      %p121 = scmp.eq.s32.totalorder %s22, 0
      %p122 = por %p120, %p121
      %p123 = scmp.le.s32.totalorder 1, %s16
      %p124 = scmp.lt.s32.totalorder %s16, 21
      %p125 = pnand %p123, %p124
      %p126 = pneg %p125
      // Predicated region
      $region9: #{tpu_custom_call.1} parent=5 // pred_check
        _
      $region10: #{tpu_custom_call.1} parent=5 // pred_check_branch
        %128 = sbr.rel (%p125) target = $region12
      $region11: #{tpu_custom_call.1} parent=5 // pred_region
        %s129 = ssub.s32 %s16, 1
        // Predicated region
        $region13: #{tpu_custom_call.1} parent=11 // pred_check
          %p130 = pneg %p37
        $region14: #{tpu_custom_call.1} parent=11 // pred_check_branch
          %132 = sbr.rel (%p130) target = $region16
        $region15: #{tpu_custom_call.1} parent=11 // pred_region
          %s134 = ssub.s32 512, 512
          %135 = vsyncadd [#allocation3], %s134
          %s137 = sshll.u32 [#allocation2], 4
          %s138 = int_to_ptr.vmem [resolvable:$true] %s137
          %140 = dma.hbm_to_vmem [thread:$0]  %s0, 512, %s138, [#allocation3]
        $region16: #{tpu_custom_call.1} parent=11 // pred_fallthru
          _
      $region12: #{tpu_custom_call.1} parent=5 // pred_fallthru
        _
      %p141 = scmp.lt.s32.totalorder %s16, 20
      // Predicated region
      $region17: #{tpu_custom_call.1} parent=5 // pred_check
        %p142 = pneg %p141
      $region18: #{tpu_custom_call.1} parent=5 // pred_check_branch
        %144 = sbr.rel (%p142) target = $region20
      $region19: #{tpu_custom_call.1} parent=5 // pred_region
        // Predicated region
        $region21: #{tpu_custom_call.1} parent=19 // pred_check
          %p145 = pneg %p57
        $region22: #{tpu_custom_call.1} parent=19 // pred_check_branch
          %147 = sbr.rel (%p145) target = $region24
        $region23: #{tpu_custom_call.1} parent=19 // pred_region
          %s148 = sand.u32 %s16, 1
          %s149 = scalar_lea.sflag [#allocation6], %s148
          %s150 = sand.u32 %s47, 1
          %s151 = smul.addr %s150, 16384
          %s152 = scalar_lea.vmem [#allocation5], %s151
          %s153 = smul.u32 4, %s16
          %s155 = ssub.s32 262144, 262144
          %156 = vsyncadd %s149, %s155
          %s157 = smul.addr %s153, 128
          %s158 = scalar_lea.hbm %s1, %s157
          %s159 = sshll.u32 %s152, 4
          %s160 = int_to_ptr.vmem [resolvable:$true] %s159
          %165 = dma.hbm_to_vmem [thread:$0]  %s158, 262144, %s160, %s149, 10240, 512, 32
        $region24: #{tpu_custom_call.1} parent=19 // pred_fallthru
          _
        // Predicated region
        $region25: #{tpu_custom_call.1} parent=19 // pred_check
          %p166 = pneg %p83
        $region26: #{tpu_custom_call.1} parent=19 // pred_check_branch
          %168 = sbr.rel (%p166) target = $region28
        $region27: #{tpu_custom_call.1} parent=19 // pred_region
          %s169 = sand.u32 %s16, 1
          %s170 = scalar_lea.sflag [#allocation6], %s169
          %s171 = sand.u32 %s73, 1
          %s172 = smul.addr %s171, 4
          %s173 = scalar_lea.vmem [#allocation7], %s172
          %s174 = smul.u32 4, %s16
          %s176 = ssub.s32 64, 64
          %177 = vsyncadd %s170, %s176
          %s178 = smul.addr %s174, 16
          %s179 = scalar_lea.hbm %s2, %s178
          %s181 = sshll.u32 %s173, 4
          %s182 = int_to_ptr.vmem [resolvable:$true] %s181
          %184 = dma.hbm_to_vmem [thread:$0]  %s179, 64, %s182, %s170
        $region28: #{tpu_custom_call.1} parent=19 // pred_fallthru
          _
      $region20: #{tpu_custom_call.1} parent=5 // pred_fallthru
        _
      %p185 = scmp.le.s32.totalorder 1, %s16
      %p186 = scmp.lt.s32.totalorder %s16, 21
      %p187 = pnand %p185, %p186
      %p188 = pneg %p187
      // Predicated region
      $region29: #{tpu_custom_call.1} parent=5 // pred_check
        _
      $region30: #{tpu_custom_call.1} parent=5 // pred_check_branch
        %190 = sbr.rel (%p187) target = $region32
      $region31: #{tpu_custom_call.1} parent=5 // pred_region
        %s191 = ssub.s32 %s16, 1
        // Predicated region
        $region33: #{tpu_custom_call.1} parent=31 // pred_check
          %p192 = pneg %p37
        $region34: #{tpu_custom_call.1} parent=31 // pred_check_branch
          %194 = sbr.rel (%p192) target = $region36
        $region35: #{tpu_custom_call.1} parent=31 // pred_region
          %195 = dma.done [#allocation3], 512
        $region36: #{tpu_custom_call.1} parent=31 // pred_fallthru
          _
        %s196 = sand.u32 %s21, 1
        %s197 = scalar_lea.sflag [#allocation6], %s196
        %s198 = sand.u32 %s50, 1
        %s199 = smul.addr %s198, 16384
        %s200 = scalar_lea.vmem [#allocation5], %s199
        // Predicated region
        $region37: #{tpu_custom_call.1} parent=31 // pred_check
          %p201 = pneg %p63
        $region38: #{tpu_custom_call.1} parent=31 // pred_check_branch
          %203 = sbr.rel (%p201) target = $region40
        $region39: #{tpu_custom_call.1} parent=31 // pred_region
          %204 = dma.done %s197, 262144
        $region40: #{tpu_custom_call.1} parent=31 // pred_fallthru
          _
        %s205 = sand.u32 %s21, 1
        %s206 = scalar_lea.sflag [#allocation6], %s205
        %s207 = sand.u32 %s76, 1
        %s208 = smul.addr %s207, 4
        %s209 = scalar_lea.vmem [#allocation7], %s208
        // Predicated region
        $region41: #{tpu_custom_call.1} parent=31 // pred_check
          %p210 = pneg %p89
        $region42: #{tpu_custom_call.1} parent=31 // pred_check_branch
          %212 = sbr.rel (%p210) target = $region44
        $region43: #{tpu_custom_call.1} parent=31 // pred_region
          %213 = dma.done %s206, 64
        $region44: #{tpu_custom_call.1} parent=31 // pred_fallthru
          _
        %p214 = pneg %p37
        %p215 = pneg %p34
        %s216 = sand.u32 %s21, 1
        %s217 = scalar_lea.sflag [#allocation6], %s216
        %s218 = sand.u32 %s50, 1
        %s219 = smul.addr %s218, 16384
        %s220 = scalar_lea.vmem [#allocation5], %s219
        %p221 = pneg %p63
        %p222 = pneg %p60
        %s223 = sand.u32 %s21, 1
        %s224 = scalar_lea.sflag [#allocation6], %s223
        %s225 = sand.u32 %s76, 1
        %s226 = smul.addr %s225, 4
        %s227 = scalar_lea.vmem [#allocation7], %s226
        %p228 = pneg %p89
        %p229 = pneg %p86
        %p230 = pneg %p115
        %p231 = pneg %p112
        %s232 = sand.u32 %s102, 1
        %s233 = scalar_lea.sflag [#allocation4], %s232
        %s234 = sand.u32 %s102, 1
        %s235 = smul.addr %s234, 4
        %s236 = scalar_lea.vmem [#allocation8], %s235
        %s237 = smul.u32 4, %s21
        %s238 = smul.u32 4, %s21
        %s239 = smul.u32 4, %s21
        %v240 = vld [vmem:[#allocation2] sm:$0xff]
        %v241 = vld [vmem:[#allocation2 + $0x8] sm:$0xff]
        %v242 = vld [vmem:[#allocation2 + $0x10] sm:$0xff]
        %v243 = vld [vmem:[#allocation2 + $0x18] sm:$0xff]
        %v244 = vld [vmem:[%s200] sm:$0xff]
        %v245 = vld [vmem:[%s200 + $0x8] sm:$0xff]
        %v246 = vld [vmem:[%s200 + $0x10] sm:$0xff]
        %v247 = vld [vmem:[%s200 + $0x18] sm:$0xff]
        %v248 = vld [vmem:[%s200 + $0x20] sm:$0xff]
        %v249 = vld [vmem:[%s200 + $0x28] sm:$0xff]
        %v250 = vld [vmem:[%s200 + $0x30] sm:$0xff]
        %v251 = vld [vmem:[%s200 + $0x38] sm:$0xff]
        %v252 = vld [vmem:[%s200 + $0x40] sm:$0xff]
        %v253 = vld [vmem:[%s200 + $0x48] sm:$0xff]
        %v254 = vld [vmem:[%s200 + $0x50] sm:$0xff]
        %v255 = vld [vmem:[%s200 + $0x58] sm:$0xff]
        %v256 = vld [vmem:[%s200 + $0x60] sm:$0xff]
        %v257 = vld [vmem:[%s200 + $0x68] sm:$0xff]
        %v258 = vld [vmem:[%s200 + $0x70] sm:$0xff]
        %v259 = vld [vmem:[%s200 + $0x78] sm:$0xff]
        %v260 = vld [vmem:[%s200 + $0x80] sm:$0xff]
        %v261 = vld [vmem:[%s200 + $0x88] sm:$0xff]
        %v262 = vld [vmem:[%s200 + $0x90] sm:$0xff]
        %v263 = vld [vmem:[%s200 + $0x98] sm:$0xff]
        %v264 = vld [vmem:[%s200 + $0xa0] sm:$0xff]
        %v265 = vld [vmem:[%s200 + $0xa8] sm:$0xff]
        %v266 = vld [vmem:[%s200 + $0xb0] sm:$0xff]
        %v267 = vld [vmem:[%s200 + $0xb8] sm:$0xff]
        %v268 = vld [vmem:[%s200 + $0xc0] sm:$0xff]
        %v269 = vld [vmem:[%s200 + $0xc8] sm:$0xff]
        %v270 = vld [vmem:[%s200 + $0xd0] sm:$0xff]
        %v271 = vld [vmem:[%s200 + $0xd8] sm:$0xff]
        %v272 = vld [vmem:[%s200 + $0xe0] sm:$0xff]
        %v273 = vld [vmem:[%s200 + $0xe8] sm:$0xff]
        %v274 = vld [vmem:[%s200 + $0xf0] sm:$0xff]
        %v275 = vld [vmem:[%s200 + $0xf8] sm:$0xff]
        %v276 = vld [vmem:[%s200 + $0x100] sm:$0xff]
        %v277 = vld [vmem:[%s200 + $0x108] sm:$0xff]
        %v278 = vld [vmem:[%s200 + $0x110] sm:$0xff]
        %v279 = vld [vmem:[%s200 + $0x118] sm:$0xff]
        %v280 = vld [vmem:[%s200 + $0x120] sm:$0xff]
        %v281 = vld [vmem:[%s200 + $0x128] sm:$0xff]
        %v282 = vld [vmem:[%s200 + $0x130] sm:$0xff]
        %v283 = vld [vmem:[%s200 + $0x138] sm:$0xff]
        %v284 = vld [vmem:[%s200 + $0x140] sm:$0xff]
        %v285 = vld [vmem:[%s200 + $0x148] sm:$0xff]
        %v286 = vld [vmem:[%s200 + $0x150] sm:$0xff]
        %v287 = vld [vmem:[%s200 + $0x158] sm:$0xff]
        %v288 = vld [vmem:[%s200 + $0x160] sm:$0xff]
        %v289 = vld [vmem:[%s200 + $0x168] sm:$0xff]
        %v290 = vld [vmem:[%s200 + $0x170] sm:$0xff]
        %v291 = vld [vmem:[%s200 + $0x178] sm:$0xff]
        %v292 = vld [vmem:[%s200 + $0x180] sm:$0xff]
        %v293 = vld [vmem:[%s200 + $0x188] sm:$0xff]
        %v294 = vld [vmem:[%s200 + $0x190] sm:$0xff]
        %v295 = vld [vmem:[%s200 + $0x198] sm:$0xff]
        %v296 = vld [vmem:[%s200 + $0x1a0] sm:$0xff]
        %v297 = vld [vmem:[%s200 + $0x1a8] sm:$0xff]
        %v298 = vld [vmem:[%s200 + $0x1b0] sm:$0xff]
        %v299 = vld [vmem:[%s200 + $0x1b8] sm:$0xff]
        %v300 = vld [vmem:[%s200 + $0x1c0] sm:$0xff]
        %v301 = vld [vmem:[%s200 + $0x1c8] sm:$0xff]
        %v302 = vld [vmem:[%s200 + $0x1d0] sm:$0xff]
        %v303 = vld [vmem:[%s200 + $0x1d8] sm:$0xff]
        %v304 = vld [vmem:[%s200 + $0x1e0] sm:$0xff]
        %v305 = vld [vmem:[%s200 + $0x1e8] sm:$0xff]
        %v306 = vld [vmem:[%s200 + $0x1f0] sm:$0xff]
        %v307 = vld [vmem:[%s200 + $0x1f8] sm:$0xff]
        %v308 = vld [vmem:[%s200 + $0x200] sm:$0xff]
        %v309 = vld [vmem:[%s200 + $0x208] sm:$0xff]
        %v310 = vld [vmem:[%s200 + $0x210] sm:$0xff]
        %v311 = vld [vmem:[%s200 + $0x218] sm:$0xff]
        %v312 = vld [vmem:[%s200 + $0x220] sm:$0xff]
        %v313 = vld [vmem:[%s200 + $0x228] sm:$0xff]
        %v314 = vld [vmem:[%s200 + $0x230] sm:$0xff]
        %v315 = vld [vmem:[%s200 + $0x238] sm:$0xff]
        %v316 = vld [vmem:[%s200 + $0x240] sm:$0xff]
        %v317 = vld [vmem:[%s200 + $0x248] sm:$0xff]
        %v318 = vld [vmem:[%s200 + $0x250] sm:$0xff]
        %v319 = vld [vmem:[%s200 + $0x258] sm:$0xff]
        %v320 = vld [vmem:[%s200 + $0x260] sm:$0xff]
        %v321 = vld [vmem:[%s200 + $0x268] sm:$0xff]
        %v322 = vld [vmem:[%s200 + $0x270] sm:$0xff]
        %v323 = vld [vmem:[%s200 + $0x278] sm:$0xff]
        %v324 = vld [vmem:[%s200 + $0x280] sm:$0xff]
        %v325 = vld [vmem:[%s200 + $0x288] sm:$0xff]
        %v326 = vld [vmem:[%s200 + $0x290] sm:$0xff]
        %v327 = vld [vmem:[%s200 + $0x298] sm:$0xff]
        %v328 = vld [vmem:[%s200 + $0x2a0] sm:$0xff]
        %v329 = vld [vmem:[%s200 + $0x2a8] sm:$0xff]
        %v330 = vld [vmem:[%s200 + $0x2b0] sm:$0xff]
        %v331 = vld [vmem:[%s200 + $0x2b8] sm:$0xff]
        %v332 = vld [vmem:[%s200 + $0x2c0] sm:$0xff]
        %v333 = vld [vmem:[%s200 + $0x2c8] sm:$0xff]
        %v334 = vld [vmem:[%s200 + $0x2d0] sm:$0xff]
        %v335 = vld [vmem:[%s200 + $0x2d8] sm:$0xff]
        %v336 = vld [vmem:[%s200 + $0x2e0] sm:$0xff]
        %v337 = vld [vmem:[%s200 + $0x2e8] sm:$0xff]
        %v338 = vld [vmem:[%s200 + $0x2f0] sm:$0xff]
        %v339 = vld [vmem:[%s200 + $0x2f8] sm:$0xff]
        %v340 = vld [vmem:[%s200 + $0x300] sm:$0xff]
        %v341 = vld [vmem:[%s200 + $0x308] sm:$0xff]
        %v342 = vld [vmem:[%s200 + $0x310] sm:$0xff]
        %v343 = vld [vmem:[%s200 + $0x318] sm:$0xff]
        %v344 = vld [vmem:[%s200 + $0x320] sm:$0xff]
        %v345 = vld [vmem:[%s200 + $0x328] sm:$0xff]
        %v346 = vld [vmem:[%s200 + $0x330] sm:$0xff]
        %v347 = vld [vmem:[%s200 + $0x338] sm:$0xff]
        %v348 = vld [vmem:[%s200 + $0x340] sm:$0xff]
        %v349 = vld [vmem:[%s200 + $0x348] sm:$0xff]
        %v350 = vld [vmem:[%s200 + $0x350] sm:$0xff]
        %v351 = vld [vmem:[%s200 + $0x358] sm:$0xff]
        %v352 = vld [vmem:[%s200 + $0x360] sm:$0xff]
        %v353 = vld [vmem:[%s200 + $0x368] sm:$0xff]
        %v354 = vld [vmem:[%s200 + $0x370] sm:$0xff]
        %v355 = vld [vmem:[%s200 + $0x378] sm:$0xff]
        %v356 = vld [vmem:[%s200 + $0x380] sm:$0xff]
        %v357 = vld [vmem:[%s200 + $0x388] sm:$0xff]
        %v358 = vld [vmem:[%s200 + $0x390] sm:$0xff]
        %v359 = vld [vmem:[%s200 + $0x398] sm:$0xff]
        %v360 = vld [vmem:[%s200 + $0x3a0] sm:$0xff]
        %v361 = vld [vmem:[%s200 + $0x3a8] sm:$0xff]
        %v362 = vld [vmem:[%s200 + $0x3b0] sm:$0xff]
        %v363 = vld [vmem:[%s200 + $0x3b8] sm:$0xff]
        %v364 = vld [vmem:[%s200 + $0x3c0] sm:$0xff]
        %v365 = vld [vmem:[%s200 + $0x3c8] sm:$0xff]
        %v366 = vld [vmem:[%s200 + $0x3d0] sm:$0xff]
        %v367 = vld [vmem:[%s200 + $0x3d8] sm:$0xff]
        %v368 = vld [vmem:[%s200 + $0x3e0] sm:$0xff]
        %v369 = vld [vmem:[%s200 + $0x3e8] sm:$0xff]
        %v370 = vld [vmem:[%s200 + $0x3f0] sm:$0xff]
        %v371 = vld [vmem:[%s200 + $0x3f8] sm:$0xff]
        %v372 = vld [vmem:[%s200 + $0x400] sm:$0xff]
        %v373 = vld [vmem:[%s200 + $0x408] sm:$0xff]
        %v374 = vld [vmem:[%s200 + $0x410] sm:$0xff]
        %v375 = vld [vmem:[%s200 + $0x418] sm:$0xff]
        %v376 = vld [vmem:[%s200 + $0x420] sm:$0xff]
        %v377 = vld [vmem:[%s200 + $0x428] sm:$0xff]
        %v378 = vld [vmem:[%s200 + $0x430] sm:$0xff]
        %v379 = vld [vmem:[%s200 + $0x438] sm:$0xff]
        %v380 = vld [vmem:[%s200 + $0x440] sm:$0xff]
        %v381 = vld [vmem:[%s200 + $0x448] sm:$0xff]
        %v382 = vld [vmem:[%s200 + $0x450] sm:$0xff]
        %v383 = vld [vmem:[%s200 + $0x458] sm:$0xff]
        %v384 = vld [vmem:[%s200 + $0x460] sm:$0xff]
        %v385 = vld [vmem:[%s200 + $0x468] sm:$0xff]
        %v386 = vld [vmem:[%s200 + $0x470] sm:$0xff]
        %v387 = vld [vmem:[%s200 + $0x478] sm:$0xff]
        %v388 = vld [vmem:[%s200 + $0x480] sm:$0xff]
        %v389 = vld [vmem:[%s200 + $0x488] sm:$0xff]
        %v390 = vld [vmem:[%s200 + $0x490] sm:$0xff]
        %v391 = vld [vmem:[%s200 + $0x498] sm:$0xff]
        %v392 = vld [vmem:[%s200 + $0x4a0] sm:$0xff]
        %v393 = vld [vmem:[%s200 + $0x4a8] sm:$0xff]
        %v394 = vld [vmem:[%s200 + $0x4b0] sm:$0xff]
        %v395 = vld [vmem:[%s200 + $0x4b8] sm:$0xff]
        %v396 = vld [vmem:[%s200 + $0x4c0] sm:$0xff]
        %v397 = vld [vmem:[%s200 + $0x4c8] sm:$0xff]
        %v398 = vld [vmem:[%s200 + $0x4d0] sm:$0xff]
        %v399 = vld [vmem:[%s200 + $0x4d8] sm:$0xff]
        %v400 = vld [vmem:[%s200 + $0x4e0] sm:$0xff]
        %v401 = vld [vmem:[%s200 + $0x4e8] sm:$0xff]
        %v402 = vld [vmem:[%s200 + $0x4f0] sm:$0xff]
        %v403 = vld [vmem:[%s200 + $0x4f8] sm:$0xff]
        %v404 = vld [vmem:[%s200 + $0x500] sm:$0xff]
        %v405 = vld [vmem:[%s200 + $0x508] sm:$0xff]
        %v406 = vld [vmem:[%s200 + $0x510] sm:$0xff]
        %v407 = vld [vmem:[%s200 + $0x518] sm:$0xff]
        %v408 = vld [vmem:[%s200 + $0x520] sm:$0xff]
        %v409 = vld [vmem:[%s200 + $0x528] sm:$0xff]
        %v410 = vld [vmem:[%s200 + $0x530] sm:$0xff]
        %v411 = vld [vmem:[%s200 + $0x538] sm:$0xff]
        %v412 = vld [vmem:[%s200 + $0x540] sm:$0xff]
        %v413 = vld [vmem:[%s200 + $0x548] sm:$0xff]
        %v414 = vld [vmem:[%s200 + $0x550] sm:$0xff]
        %v415 = vld [vmem:[%s200 + $0x558] sm:$0xff]
        %v416 = vld [vmem:[%s200 + $0x560] sm:$0xff]
        %v417 = vld [vmem:[%s200 + $0x568] sm:$0xff]
        %v418 = vld [vmem:[%s200 + $0x570] sm:$0xff]
        %v419 = vld [vmem:[%s200 + $0x578] sm:$0xff]
        %v420 = vld [vmem:[%s200 + $0x580] sm:$0xff]
        %v421 = vld [vmem:[%s200 + $0x588] sm:$0xff]
        %v422 = vld [vmem:[%s200 + $0x590] sm:$0xff]
        %v423 = vld [vmem:[%s200 + $0x598] sm:$0xff]
        %v424 = vld [vmem:[%s200 + $0x5a0] sm:$0xff]
        %v425 = vld [vmem:[%s200 + $0x5a8] sm:$0xff]
        %v426 = vld [vmem:[%s200 + $0x5b0] sm:$0xff]
        %v427 = vld [vmem:[%s200 + $0x5b8] sm:$0xff]
        %v428 = vld [vmem:[%s200 + $0x5c0] sm:$0xff]
        %v429 = vld [vmem:[%s200 + $0x5c8] sm:$0xff]
        %v430 = vld [vmem:[%s200 + $0x5d0] sm:$0xff]
        %v431 = vld [vmem:[%s200 + $0x5d8] sm:$0xff]
        %v432 = vld [vmem:[%s200 + $0x5e0] sm:$0xff]
        %v433 = vld [vmem:[%s200 + $0x5e8] sm:$0xff]
        %v434 = vld [vmem:[%s200 + $0x5f0] sm:$0xff]
        %v435 = vld [vmem:[%s200 + $0x5f8] sm:$0xff]
        %v436 = vld [vmem:[%s200 + $0x600] sm:$0xff]
        %v437 = vld [vmem:[%s200 + $0x608] sm:$0xff]
        %v438 = vld [vmem:[%s200 + $0x610] sm:$0xff]
        %v439 = vld [vmem:[%s200 + $0x618] sm:$0xff]
        %v440 = vld [vmem:[%s200 + $0x620] sm:$0xff]
        %v441 = vld [vmem:[%s200 + $0x628] sm:$0xff]
        %v442 = vld [vmem:[%s200 + $0x630] sm:$0xff]
        %v443 = vld [vmem:[%s200 + $0x638] sm:$0xff]
        %v444 = vld [vmem:[%s200 + $0x640] sm:$0xff]
        %v445 = vld [vmem:[%s200 + $0x648] sm:$0xff]
        %v446 = vld [vmem:[%s200 + $0x650] sm:$0xff]
        %v447 = vld [vmem:[%s200 + $0x658] sm:$0xff]
        %v448 = vld [vmem:[%s200 + $0x660] sm:$0xff]
        %v449 = vld [vmem:[%s200 + $0x668] sm:$0xff]
        %v450 = vld [vmem:[%s200 + $0x670] sm:$0xff]
        %v451 = vld [vmem:[%s200 + $0x678] sm:$0xff]
        %v452 = vld [vmem:[%s200 + $0x680] sm:$0xff]
        %v453 = vld [vmem:[%s200 + $0x688] sm:$0xff]
        %v454 = vld [vmem:[%s200 + $0x690] sm:$0xff]
        %v455 = vld [vmem:[%s200 + $0x698] sm:$0xff]
        %v456 = vld [vmem:[%s200 + $0x6a0] sm:$0xff]
        %v457 = vld [vmem:[%s200 + $0x6a8] sm:$0xff]
        %v458 = vld [vmem:[%s200 + $0x6b0] sm:$0xff]
        %v459 = vld [vmem:[%s200 + $0x6b8] sm:$0xff]
        %v460 = vld [vmem:[%s200 + $0x6c0] sm:$0xff]
        %v461 = vld [vmem:[%s200 + $0x6c8] sm:$0xff]
        %v462 = vld [vmem:[%s200 + $0x6d0] sm:$0xff]
        %v463 = vld [vmem:[%s200 + $0x6d8] sm:$0xff]
        %v464 = vld [vmem:[%s200 + $0x6e0] sm:$0xff]
        %v465 = vld [vmem:[%s200 + $0x6e8] sm:$0xff]
        %v466 = vld [vmem:[%s200 + $0x6f0] sm:$0xff]
        %v467 = vld [vmem:[%s200 + $0x6f8] sm:$0xff]
        %v468 = vld [vmem:[%s200 + $0x700] sm:$0xff]
        %v469 = vld [vmem:[%s200 + $0x708] sm:$0xff]
        %v470 = vld [vmem:[%s200 + $0x710] sm:$0xff]
        %v471 = vld [vmem:[%s200 + $0x718] sm:$0xff]
        %v472 = vld [vmem:[%s200 + $0x720] sm:$0xff]
        %v473 = vld [vmem:[%s200 + $0x728] sm:$0xff]
        %v474 = vld [vmem:[%s200 + $0x730] sm:$0xff]
        %v475 = vld [vmem:[%s200 + $0x738] sm:$0xff]
        %v476 = vld [vmem:[%s200 + $0x740] sm:$0xff]
        %v477 = vld [vmem:[%s200 + $0x748] sm:$0xff]
        %v478 = vld [vmem:[%s200 + $0x750] sm:$0xff]
        %v479 = vld [vmem:[%s200 + $0x758] sm:$0xff]
        %v480 = vld [vmem:[%s200 + $0x760] sm:$0xff]
        %v481 = vld [vmem:[%s200 + $0x768] sm:$0xff]
        %v482 = vld [vmem:[%s200 + $0x770] sm:$0xff]
        %v483 = vld [vmem:[%s200 + $0x778] sm:$0xff]
        %v484 = vld [vmem:[%s200 + $0x780] sm:$0xff]
        %v485 = vld [vmem:[%s200 + $0x788] sm:$0xff]
        %v486 = vld [vmem:[%s200 + $0x790] sm:$0xff]
        %v487 = vld [vmem:[%s200 + $0x798] sm:$0xff]
        %v488 = vld [vmem:[%s200 + $0x7a0] sm:$0xff]
        %v489 = vld [vmem:[%s200 + $0x7a8] sm:$0xff]
        %v490 = vld [vmem:[%s200 + $0x7b0] sm:$0xff]
        %v491 = vld [vmem:[%s200 + $0x7b8] sm:$0xff]
        %v492 = vld [vmem:[%s200 + $0x7c0] sm:$0xff]
        %v493 = vld [vmem:[%s200 + $0x7c8] sm:$0xff]
        %v494 = vld [vmem:[%s200 + $0x7d0] sm:$0xff]
        %v495 = vld [vmem:[%s200 + $0x7d8] sm:$0xff]
        %v496 = vld [vmem:[%s200 + $0x7e0] sm:$0xff]
        %v497 = vld [vmem:[%s200 + $0x7e8] sm:$0xff]
        %v498 = vld [vmem:[%s200 + $0x7f0] sm:$0xff]
        %v499 = vld [vmem:[%s200 + $0x7f8] sm:$0xff]
        %v500 = vld [vmem:[%s200 + $0x800] sm:$0xff]
        %v501 = vld [vmem:[%s200 + $0x808] sm:$0xff]
        %v502 = vld [vmem:[%s200 + $0x810] sm:$0xff]
        %v503 = vld [vmem:[%s200 + $0x818] sm:$0xff]
        %v504 = vld [vmem:[%s200 + $0x820] sm:$0xff]
        %v505 = vld [vmem:[%s200 + $0x828] sm:$0xff]
        %v506 = vld [vmem:[%s200 + $0x830] sm:$0xff]
        %v507 = vld [vmem:[%s200 + $0x838] sm:$0xff]
        %v508 = vld [vmem:[%s200 + $0x840] sm:$0xff]
        %v509 = vld [vmem:[%s200 + $0x848] sm:$0xff]
        %v510 = vld [vmem:[%s200 + $0x850] sm:$0xff]
        %v511 = vld [vmem:[%s200 + $0x858] sm:$0xff]
        %v512 = vld [vmem:[%s200 + $0x860] sm:$0xff]
        %v513 = vld [vmem:[%s200 + $0x868] sm:$0xff]
        %v514 = vld [vmem:[%s200 + $0x870] sm:$0xff]
        %v515 = vld [vmem:[%s200 + $0x878] sm:$0xff]
        %v516 = vld [vmem:[%s200 + $0x880] sm:$0xff]
        %v517 = vld [vmem:[%s200 + $0x888] sm:$0xff]
        %v518 = vld [vmem:[%s200 + $0x890] sm:$0xff]
        %v519 = vld [vmem:[%s200 + $0x898] sm:$0xff]
        %v520 = vld [vmem:[%s200 + $0x8a0] sm:$0xff]
        %v521 = vld [vmem:[%s200 + $0x8a8] sm:$0xff]
        %v522 = vld [vmem:[%s200 + $0x8b0] sm:$0xff]
        %v523 = vld [vmem:[%s200 + $0x8b8] sm:$0xff]
        %v524 = vld [vmem:[%s200 + $0x8c0] sm:$0xff]
        %v525 = vld [vmem:[%s200 + $0x8c8] sm:$0xff]
        %v526 = vld [vmem:[%s200 + $0x8d0] sm:$0xff]
        %v527 = vld [vmem:[%s200 + $0x8d8] sm:$0xff]
        %v528 = vld [vmem:[%s200 + $0x8e0] sm:$0xff]
        %v529 = vld [vmem:[%s200 + $0x8e8] sm:$0xff]
        %v530 = vld [vmem:[%s200 + $0x8f0] sm:$0xff]
        %v531 = vld [vmem:[%s200 + $0x8f8] sm:$0xff]
        %v532 = vld [vmem:[%s200 + $0x900] sm:$0xff]
        %v533 = vld [vmem:[%s200 + $0x908] sm:$0xff]
        %v534 = vld [vmem:[%s200 + $0x910] sm:$0xff]
        %v535 = vld [vmem:[%s200 + $0x918] sm:$0xff]
        %v536 = vld [vmem:[%s200 + $0x920] sm:$0xff]
        %v537 = vld [vmem:[%s200 + $0x928] sm:$0xff]
        %v538 = vld [vmem:[%s200 + $0x930] sm:$0xff]
        %v539 = vld [vmem:[%s200 + $0x938] sm:$0xff]
        %v540 = vld [vmem:[%s200 + $0x940] sm:$0xff]
        %v541 = vld [vmem:[%s200 + $0x948] sm:$0xff]
        %v542 = vld [vmem:[%s200 + $0x950] sm:$0xff]
        %v543 = vld [vmem:[%s200 + $0x958] sm:$0xff]
        %v544 = vld [vmem:[%s200 + $0x960] sm:$0xff]
        %v545 = vld [vmem:[%s200 + $0x968] sm:$0xff]
        %v546 = vld [vmem:[%s200 + $0x970] sm:$0xff]
        %v547 = vld [vmem:[%s200 + $0x978] sm:$0xff]
        %v548 = vld [vmem:[%s200 + $0x980] sm:$0xff]
        %v549 = vld [vmem:[%s200 + $0x988] sm:$0xff]
        %v550 = vld [vmem:[%s200 + $0x990] sm:$0xff]
        %v551 = vld [vmem:[%s200 + $0x998] sm:$0xff]
        %v552 = vld [vmem:[%s200 + $0x9a0] sm:$0xff]
        %v553 = vld [vmem:[%s200 + $0x9a8] sm:$0xff]
        %v554 = vld [vmem:[%s200 + $0x9b0] sm:$0xff]
        %v555 = vld [vmem:[%s200 + $0x9b8] sm:$0xff]
        %v556 = vld [vmem:[%s200 + $0x9c0] sm:$0xff]
        %v557 = vld [vmem:[%s200 + $0x9c8] sm:$0xff]
        %v558 = vld [vmem:[%s200 + $0x9d0] sm:$0xff]
        %v559 = vld [vmem:[%s200 + $0x9d8] sm:$0xff]
        %v560 = vld [vmem:[%s200 + $0x9e0] sm:$0xff]
        %v561 = vld [vmem:[%s200 + $0x9e8] sm:$0xff]
        %v562 = vld [vmem:[%s200 + $0x9f0] sm:$0xff]
        %v563 = vld [vmem:[%s200 + $0x9f8] sm:$0xff]
        %v564 = vld [vmem:[%s200 + $0xa00] sm:$0xff]
        %v565 = vld [vmem:[%s200 + $0xa08] sm:$0xff]
        %v566 = vld [vmem:[%s200 + $0xa10] sm:$0xff]
        %v567 = vld [vmem:[%s200 + $0xa18] sm:$0xff]
        %v568 = vld [vmem:[%s200 + $0xa20] sm:$0xff]
        %v569 = vld [vmem:[%s200 + $0xa28] sm:$0xff]
        %v570 = vld [vmem:[%s200 + $0xa30] sm:$0xff]
        %v571 = vld [vmem:[%s200 + $0xa38] sm:$0xff]
        %v572 = vld [vmem:[%s200 + $0xa40] sm:$0xff]
        %v573 = vld [vmem:[%s200 + $0xa48] sm:$0xff]
        %v574 = vld [vmem:[%s200 + $0xa50] sm:$0xff]
        %v575 = vld [vmem:[%s200 + $0xa58] sm:$0xff]
        %v576 = vld [vmem:[%s200 + $0xa60] sm:$0xff]
        %v577 = vld [vmem:[%s200 + $0xa68] sm:$0xff]
        %v578 = vld [vmem:[%s200 + $0xa70] sm:$0xff]
        %v579 = vld [vmem:[%s200 + $0xa78] sm:$0xff]
        %v580 = vld [vmem:[%s200 + $0xa80] sm:$0xff]
        %v581 = vld [vmem:[%s200 + $0xa88] sm:$0xff]
        %v582 = vld [vmem:[%s200 + $0xa90] sm:$0xff]
        %v583 = vld [vmem:[%s200 + $0xa98] sm:$0xff]
        %v584 = vld [vmem:[%s200 + $0xaa0] sm:$0xff]
        %v585 = vld [vmem:[%s200 + $0xaa8] sm:$0xff]
        %v586 = vld [vmem:[%s200 + $0xab0] sm:$0xff]
        %v587 = vld [vmem:[%s200 + $0xab8] sm:$0xff]
        %v588 = vld [vmem:[%s200 + $0xac0] sm:$0xff]
        %v589 = vld [vmem:[%s200 + $0xac8] sm:$0xff]
        %v590 = vld [vmem:[%s200 + $0xad0] sm:$0xff]
        %v591 = vld [vmem:[%s200 + $0xad8] sm:$0xff]
        %v592 = vld [vmem:[%s200 + $0xae0] sm:$0xff]
        %v593 = vld [vmem:[%s200 + $0xae8] sm:$0xff]
        %v594 = vld [vmem:[%s200 + $0xaf0] sm:$0xff]
        %v595 = vld [vmem:[%s200 + $0xaf8] sm:$0xff]
        %v596 = vld [vmem:[%s200 + $0xb00] sm:$0xff]
        %v597 = vld [vmem:[%s200 + $0xb08] sm:$0xff]
        %v598 = vld [vmem:[%s200 + $0xb10] sm:$0xff]
        %v599 = vld [vmem:[%s200 + $0xb18] sm:$0xff]
        %v600 = vld [vmem:[%s200 + $0xb20] sm:$0xff]
        %v601 = vld [vmem:[%s200 + $0xb28] sm:$0xff]
        %v602 = vld [vmem:[%s200 + $0xb30] sm:$0xff]
        %v603 = vld [vmem:[%s200 + $0xb38] sm:$0xff]
        %v604 = vld [vmem:[%s200 + $0xb40] sm:$0xff]
        %v605 = vld [vmem:[%s200 + $0xb48] sm:$0xff]
        %v606 = vld [vmem:[%s200 + $0xb50] sm:$0xff]
        %v607 = vld [vmem:[%s200 + $0xb58] sm:$0xff]
        %v608 = vld [vmem:[%s200 + $0xb60] sm:$0xff]
        %v609 = vld [vmem:[%s200 + $0xb68] sm:$0xff]
        %v610 = vld [vmem:[%s200 + $0xb70] sm:$0xff]
        %v611 = vld [vmem:[%s200 + $0xb78] sm:$0xff]
        %v612 = vld [vmem:[%s200 + $0xb80] sm:$0xff]
        %v613 = vld [vmem:[%s200 + $0xb88] sm:$0xff]
        %v614 = vld [vmem:[%s200 + $0xb90] sm:$0xff]
        %v615 = vld [vmem:[%s200 + $0xb98] sm:$0xff]
        %v616 = vld [vmem:[%s200 + $0xba0] sm:$0xff]
        %v617 = vld [vmem:[%s200 + $0xba8] sm:$0xff]
        %v618 = vld [vmem:[%s200 + $0xbb0] sm:$0xff]
        %v619 = vld [vmem:[%s200 + $0xbb8] sm:$0xff]
        %v620 = vld [vmem:[%s200 + $0xbc0] sm:$0xff]
        %v621 = vld [vmem:[%s200 + $0xbc8] sm:$0xff]
        %v622 = vld [vmem:[%s200 + $0xbd0] sm:$0xff]
        %v623 = vld [vmem:[%s200 + $0xbd8] sm:$0xff]
        %v624 = vld [vmem:[%s200 + $0xbe0] sm:$0xff]
        %v625 = vld [vmem:[%s200 + $0xbe8] sm:$0xff]
        %v626 = vld [vmem:[%s200 + $0xbf0] sm:$0xff]
        %v627 = vld [vmem:[%s200 + $0xbf8] sm:$0xff]
        %v628 = vld [vmem:[%s200 + $0xc00] sm:$0xff]
        %v629 = vld [vmem:[%s200 + $0xc08] sm:$0xff]
        %v630 = vld [vmem:[%s200 + $0xc10] sm:$0xff]
        %v631 = vld [vmem:[%s200 + $0xc18] sm:$0xff]
        %v632 = vld [vmem:[%s200 + $0xc20] sm:$0xff]
        %v633 = vld [vmem:[%s200 + $0xc28] sm:$0xff]
        %v634 = vld [vmem:[%s200 + $0xc30] sm:$0xff]
        %v635 = vld [vmem:[%s200 + $0xc38] sm:$0xff]
        %v636 = vld [vmem:[%s200 + $0xc40] sm:$0xff]
        %v637 = vld [vmem:[%s200 + $0xc48] sm:$0xff]
        %v638 = vld [vmem:[%s200 + $0xc50] sm:$0xff]
        %v639 = vld [vmem:[%s200 + $0xc58] sm:$0xff]
        %v640 = vld [vmem:[%s200 + $0xc60] sm:$0xff]
        %v641 = vld [vmem:[%s200 + $0xc68] sm:$0xff]
        %v642 = vld [vmem:[%s200 + $0xc70] sm:$0xff]
        %v643 = vld [vmem:[%s200 + $0xc78] sm:$0xff]
        %v644 = vld [vmem:[%s200 + $0xc80] sm:$0xff]
        %v645 = vld [vmem:[%s200 + $0xc88] sm:$0xff]
        %v646 = vld [vmem:[%s200 + $0xc90] sm:$0xff]
        %v647 = vld [vmem:[%s200 + $0xc98] sm:$0xff]
        %v648 = vld [vmem:[%s200 + $0xca0] sm:$0xff]
        %v649 = vld [vmem:[%s200 + $0xca8] sm:$0xff]
        %v650 = vld [vmem:[%s200 + $0xcb0] sm:$0xff]
        %v651 = vld [vmem:[%s200 + $0xcb8] sm:$0xff]
        %v652 = vld [vmem:[%s200 + $0xcc0] sm:$0xff]
        %v653 = vld [vmem:[%s200 + $0xcc8] sm:$0xff]
        %v654 = vld [vmem:[%s200 + $0xcd0] sm:$0xff]
        %v655 = vld [vmem:[%s200 + $0xcd8] sm:$0xff]
        %v656 = vld [vmem:[%s200 + $0xce0] sm:$0xff]
        %v657 = vld [vmem:[%s200 + $0xce8] sm:$0xff]
        %v658 = vld [vmem:[%s200 + $0xcf0] sm:$0xff]
        %v659 = vld [vmem:[%s200 + $0xcf8] sm:$0xff]
        %v660 = vld [vmem:[%s200 + $0xd00] sm:$0xff]
        %v661 = vld [vmem:[%s200 + $0xd08] sm:$0xff]
        %v662 = vld [vmem:[%s200 + $0xd10] sm:$0xff]
        %v663 = vld [vmem:[%s200 + $0xd18] sm:$0xff]
        %v664 = vld [vmem:[%s200 + $0xd20] sm:$0xff]
        %v665 = vld [vmem:[%s200 + $0xd28] sm:$0xff]
        %v666 = vld [vmem:[%s200 + $0xd30] sm:$0xff]
        %v667 = vld [vmem:[%s200 + $0xd38] sm:$0xff]
        %v668 = vld [vmem:[%s200 + $0xd40] sm:$0xff]
        %v669 = vld [vmem:[%s200 + $0xd48] sm:$0xff]
        %v670 = vld [vmem:[%s200 + $0xd50] sm:$0xff]
        %v671 = vld [vmem:[%s200 + $0xd58] sm:$0xff]
        %v672 = vld [vmem:[%s200 + $0xd60] sm:$0xff]
        %v673 = vld [vmem:[%s200 + $0xd68] sm:$0xff]
        %v674 = vld [vmem:[%s200 + $0xd70] sm:$0xff]
        %v675 = vld [vmem:[%s200 + $0xd78] sm:$0xff]
        %v676 = vld [vmem:[%s200 + $0xd80] sm:$0xff]
        %v677 = vld [vmem:[%s200 + $0xd88] sm:$0xff]
        %v678 = vld [vmem:[%s200 + $0xd90] sm:$0xff]
        %v679 = vld [vmem:[%s200 + $0xd98] sm:$0xff]
        %v680 = vld [vmem:[%s200 + $0xda0] sm:$0xff]
        %v681 = vld [vmem:[%s200 + $0xda8] sm:$0xff]
        %v682 = vld [vmem:[%s200 + $0xdb0] sm:$0xff]
        %v683 = vld [vmem:[%s200 + $0xdb8] sm:$0xff]
        %v684 = vld [vmem:[%s200 + $0xdc0] sm:$0xff]
        %v685 = vld [vmem:[%s200 + $0xdc8] sm:$0xff]
        %v686 = vld [vmem:[%s200 + $0xdd0] sm:$0xff]
        %v687 = vld [vmem:[%s200 + $0xdd8] sm:$0xff]
        %v688 = vld [vmem:[%s200 + $0xde0] sm:$0xff]
        %v689 = vld [vmem:[%s200 + $0xde8] sm:$0xff]
        %v690 = vld [vmem:[%s200 + $0xdf0] sm:$0xff]
        %v691 = vld [vmem:[%s200 + $0xdf8] sm:$0xff]
        %v692 = vld [vmem:[%s200 + $0xe00] sm:$0xff]
        %v693 = vld [vmem:[%s200 + $0xe08] sm:$0xff]
        %v694 = vld [vmem:[%s200 + $0xe10] sm:$0xff]
        %v695 = vld [vmem:[%s200 + $0xe18] sm:$0xff]
        %v696 = vld [vmem:[%s200 + $0xe20] sm:$0xff]
        %v697 = vld [vmem:[%s200 + $0xe28] sm:$0xff]
        %v698 = vld [vmem:[%s200 + $0xe30] sm:$0xff]
        %v699 = vld [vmem:[%s200 + $0xe38] sm:$0xff]
        %v700 = vld [vmem:[%s200 + $0xe40] sm:$0xff]
        %v701 = vld [vmem:[%s200 + $0xe48] sm:$0xff]
        %v702 = vld [vmem:[%s200 + $0xe50] sm:$0xff]
        %v703 = vld [vmem:[%s200 + $0xe58] sm:$0xff]
        %v704 = vld [vmem:[%s200 + $0xe60] sm:$0xff]
        %v705 = vld [vmem:[%s200 + $0xe68] sm:$0xff]
        %v706 = vld [vmem:[%s200 + $0xe70] sm:$0xff]
        %v707 = vld [vmem:[%s200 + $0xe78] sm:$0xff]
        %v708 = vld [vmem:[%s200 + $0xe80] sm:$0xff]
        %v709 = vld [vmem:[%s200 + $0xe88] sm:$0xff]
        %v710 = vld [vmem:[%s200 + $0xe90] sm:$0xff]
        %v711 = vld [vmem:[%s200 + $0xe98] sm:$0xff]
        %v712 = vld [vmem:[%s200 + $0xea0] sm:$0xff]
        %v713 = vld [vmem:[%s200 + $0xea8] sm:$0xff]
        %v714 = vld [vmem:[%s200 + $0xeb0] sm:$0xff]
        %v715 = vld [vmem:[%s200 + $0xeb8] sm:$0xff]
        %v716 = vld [vmem:[%s200 + $0xec0] sm:$0xff]
        %v717 = vld [vmem:[%s200 + $0xec8] sm:$0xff]
        %v718 = vld [vmem:[%s200 + $0xed0] sm:$0xff]
        %v719 = vld [vmem:[%s200 + $0xed8] sm:$0xff]
        %v720 = vld [vmem:[%s200 + $0xee0] sm:$0xff]
        %v721 = vld [vmem:[%s200 + $0xee8] sm:$0xff]
        %v722 = vld [vmem:[%s200 + $0xef0] sm:$0xff]
        %v723 = vld [vmem:[%s200 + $0xef8] sm:$0xff]
        %v724 = vld [vmem:[%s200 + $0xf00] sm:$0xff]
        %v725 = vld [vmem:[%s200 + $0xf08] sm:$0xff]
        %v726 = vld [vmem:[%s200 + $0xf10] sm:$0xff]
        %v727 = vld [vmem:[%s200 + $0xf18] sm:$0xff]
        %v728 = vld [vmem:[%s200 + $0xf20] sm:$0xff]
        %v729 = vld [vmem:[%s200 + $0xf28] sm:$0xff]
        %v730 = vld [vmem:[%s200 + $0xf30] sm:$0xff]
        %v731 = vld [vmem:[%s200 + $0xf38] sm:$0xff]
        %v732 = vld [vmem:[%s200 + $0xf40] sm:$0xff]
        %v733 = vld [vmem:[%s200 + $0xf48] sm:$0xff]
        %v734 = vld [vmem:[%s200 + $0xf50] sm:$0xff]
        %v735 = vld [vmem:[%s200 + $0xf58] sm:$0xff]
        %v736 = vld [vmem:[%s200 + $0xf60] sm:$0xff]
        %v737 = vld [vmem:[%s200 + $0xf68] sm:$0xff]
        %v738 = vld [vmem:[%s200 + $0xf70] sm:$0xff]
        %v739 = vld [vmem:[%s200 + $0xf78] sm:$0xff]
        %v740 = vld [vmem:[%s200 + $0xf80] sm:$0xff]
        %v741 = vld [vmem:[%s200 + $0xf88] sm:$0xff]
        %v742 = vld [vmem:[%s200 + $0xf90] sm:$0xff]
        %v743 = vld [vmem:[%s200 + $0xf98] sm:$0xff]
        %v744 = vld [vmem:[%s200 + $0xfa0] sm:$0xff]
        %v745 = vld [vmem:[%s200 + $0xfa8] sm:$0xff]
        %v746 = vld [vmem:[%s200 + $0xfb0] sm:$0xff]
        %v747 = vld [vmem:[%s200 + $0xfb8] sm:$0xff]
        %v748 = vld [vmem:[%s200 + $0xfc0] sm:$0xff]
        %v749 = vld [vmem:[%s200 + $0xfc8] sm:$0xff]
        %v750 = vld [vmem:[%s200 + $0xfd0] sm:$0xff]
        %v751 = vld [vmem:[%s200 + $0xfd8] sm:$0xff]
        %v752 = vld [vmem:[%s200 + $0xfe0] sm:$0xff]
        %v753 = vld [vmem:[%s200 + $0xfe8] sm:$0xff]
        %v754 = vld [vmem:[%s200 + $0xff0] sm:$0xff]
        %v755 = vld [vmem:[%s200 + $0xff8] sm:$0xff]
        %v756 = vld [vmem:[%s200 + $0x1000] sm:$0xff]
        %v757 = vld [vmem:[%s200 + $0x1008] sm:$0xff]
        %v758 = vld [vmem:[%s200 + $0x1010] sm:$0xff]
        %v759 = vld [vmem:[%s200 + $0x1018] sm:$0xff]
        %v760 = vld [vmem:[%s200 + $0x1020] sm:$0xff]
        %v761 = vld [vmem:[%s200 + $0x1028] sm:$0xff]
        %v762 = vld [vmem:[%s200 + $0x1030] sm:$0xff]
        %v763 = vld [vmem:[%s200 + $0x1038] sm:$0xff]
        %v764 = vld [vmem:[%s200 + $0x1040] sm:$0xff]
        %v765 = vld [vmem:[%s200 + $0x1048] sm:$0xff]
        %v766 = vld [vmem:[%s200 + $0x1050] sm:$0xff]
        %v767 = vld [vmem:[%s200 + $0x1058] sm:$0xff]
        %v768 = vld [vmem:[%s200 + $0x1060] sm:$0xff]
        %v769 = vld [vmem:[%s200 + $0x1068] sm:$0xff]
        %v770 = vld [vmem:[%s200 + $0x1070] sm:$0xff]
        %v771 = vld [vmem:[%s200 + $0x1078] sm:$0xff]
        %v772 = vld [vmem:[%s200 + $0x1080] sm:$0xff]
        %v773 = vld [vmem:[%s200 + $0x1088] sm:$0xff]
        %v774 = vld [vmem:[%s200 + $0x1090] sm:$0xff]
        %v775 = vld [vmem:[%s200 + $0x1098] sm:$0xff]
        %v776 = vld [vmem:[%s200 + $0x10a0] sm:$0xff]
        %v777 = vld [vmem:[%s200 + $0x10a8] sm:$0xff]
        %v778 = vld [vmem:[%s200 + $0x10b0] sm:$0xff]
        %v779 = vld [vmem:[%s200 + $0x10b8] sm:$0xff]
        %v780 = vld [vmem:[%s200 + $0x10c0] sm:$0xff]
        %v781 = vld [vmem:[%s200 + $0x10c8] sm:$0xff]
        %v782 = vld [vmem:[%s200 + $0x10d0] sm:$0xff]
        %v783 = vld [vmem:[%s200 + $0x10d8] sm:$0xff]
        %v784 = vld [vmem:[%s200 + $0x10e0] sm:$0xff]
        %v785 = vld [vmem:[%s200 + $0x10e8] sm:$0xff]
        %v786 = vld [vmem:[%s200 + $0x10f0] sm:$0xff]
        %v787 = vld [vmem:[%s200 + $0x10f8] sm:$0xff]
        %v788 = vld [vmem:[%s200 + $0x1100] sm:$0xff]
        %v789 = vld [vmem:[%s200 + $0x1108] sm:$0xff]
        %v790 = vld [vmem:[%s200 + $0x1110] sm:$0xff]
        %v791 = vld [vmem:[%s200 + $0x1118] sm:$0xff]
        %v792 = vld [vmem:[%s200 + $0x1120] sm:$0xff]
        %v793 = vld [vmem:[%s200 + $0x1128] sm:$0xff]
        %v794 = vld [vmem:[%s200 + $0x1130] sm:$0xff]
        %v795 = vld [vmem:[%s200 + $0x1138] sm:$0xff]
        %v796 = vld [vmem:[%s200 + $0x1140] sm:$0xff]
        %v797 = vld [vmem:[%s200 + $0x1148] sm:$0xff]
        %v798 = vld [vmem:[%s200 + $0x1150] sm:$0xff]
        %v799 = vld [vmem:[%s200 + $0x1158] sm:$0xff]
        %v800 = vld [vmem:[%s200 + $0x1160] sm:$0xff]
        %v801 = vld [vmem:[%s200 + $0x1168] sm:$0xff]
        %v802 = vld [vmem:[%s200 + $0x1170] sm:$0xff]
        %v803 = vld [vmem:[%s200 + $0x1178] sm:$0xff]
        %v804 = vld [vmem:[%s200 + $0x1180] sm:$0xff]
        %v805 = vld [vmem:[%s200 + $0x1188] sm:$0xff]
        %v806 = vld [vmem:[%s200 + $0x1190] sm:$0xff]
        %v807 = vld [vmem:[%s200 + $0x1198] sm:$0xff]
        %v808 = vld [vmem:[%s200 + $0x11a0] sm:$0xff]
        %v809 = vld [vmem:[%s200 + $0x11a8] sm:$0xff]
        %v810 = vld [vmem:[%s200 + $0x11b0] sm:$0xff]
        %v811 = vld [vmem:[%s200 + $0x11b8] sm:$0xff]
        %v812 = vld [vmem:[%s200 + $0x11c0] sm:$0xff]
        %v813 = vld [vmem:[%s200 + $0x11c8] sm:$0xff]
        %v814 = vld [vmem:[%s200 + $0x11d0] sm:$0xff]
        %v815 = vld [vmem:[%s200 + $0x11d8] sm:$0xff]
        %v816 = vld [vmem:[%s200 + $0x11e0] sm:$0xff]
        %v817 = vld [vmem:[%s200 + $0x11e8] sm:$0xff]
        %v818 = vld [vmem:[%s200 + $0x11f0] sm:$0xff]
        %v819 = vld [vmem:[%s200 + $0x11f8] sm:$0xff]
        %v820 = vld [vmem:[%s200 + $0x1200] sm:$0xff]
        %v821 = vld [vmem:[%s200 + $0x1208] sm:$0xff]
        %v822 = vld [vmem:[%s200 + $0x1210] sm:$0xff]
        %v823 = vld [vmem:[%s200 + $0x1218] sm:$0xff]
        %v824 = vld [vmem:[%s200 + $0x1220] sm:$0xff]
        %v825 = vld [vmem:[%s200 + $0x1228] sm:$0xff]
        %v826 = vld [vmem:[%s200 + $0x1230] sm:$0xff]
        %v827 = vld [vmem:[%s200 + $0x1238] sm:$0xff]
        %v828 = vld [vmem:[%s200 + $0x1240] sm:$0xff]
        %v829 = vld [vmem:[%s200 + $0x1248] sm:$0xff]
        %v830 = vld [vmem:[%s200 + $0x1250] sm:$0xff]
        %v831 = vld [vmem:[%s200 + $0x1258] sm:$0xff]
        %v832 = vld [vmem:[%s200 + $0x1260] sm:$0xff]
        %v833 = vld [vmem:[%s200 + $0x1268] sm:$0xff]
        %v834 = vld [vmem:[%s200 + $0x1270] sm:$0xff]
        %v835 = vld [vmem:[%s200 + $0x1278] sm:$0xff]
        %v836 = vld [vmem:[%s200 + $0x1280] sm:$0xff]
        %v837 = vld [vmem:[%s200 + $0x1288] sm:$0xff]
        %v838 = vld [vmem:[%s200 + $0x1290] sm:$0xff]
        %v839 = vld [vmem:[%s200 + $0x1298] sm:$0xff]
        %v840 = vld [vmem:[%s200 + $0x12a0] sm:$0xff]
        %v841 = vld [vmem:[%s200 + $0x12a8] sm:$0xff]
        %v842 = vld [vmem:[%s200 + $0x12b0] sm:$0xff]
        %v843 = vld [vmem:[%s200 + $0x12b8] sm:$0xff]
        %v844 = vld [vmem:[%s200 + $0x12c0] sm:$0xff]
        %v845 = vld [vmem:[%s200 + $0x12c8] sm:$0xff]
        %v846 = vld [vmem:[%s200 + $0x12d0] sm:$0xff]
        %v847 = vld [vmem:[%s200 + $0x12d8] sm:$0xff]
        %v848 = vld [vmem:[%s200 + $0x12e0] sm:$0xff]
        %v849 = vld [vmem:[%s200 + $0x12e8] sm:$0xff]
        %v850 = vld [vmem:[%s200 + $0x12f0] sm:$0xff]
        %v851 = vld [vmem:[%s200 + $0x12f8] sm:$0xff]
        %v852 = vld [vmem:[%s200 + $0x1300] sm:$0xff]
        %v853 = vld [vmem:[%s200 + $0x1308] sm:$0xff]
        %v854 = vld [vmem:[%s200 + $0x1310] sm:$0xff]
        %v855 = vld [vmem:[%s200 + $0x1318] sm:$0xff]
        %v856 = vld [vmem:[%s200 + $0x1320] sm:$0xff]
        %v857 = vld [vmem:[%s200 + $0x1328] sm:$0xff]
        %v858 = vld [vmem:[%s200 + $0x1330] sm:$0xff]
        %v859 = vld [vmem:[%s200 + $0x1338] sm:$0xff]
        %v860 = vld [vmem:[%s200 + $0x1340] sm:$0xff]
        %v861 = vld [vmem:[%s200 + $0x1348] sm:$0xff]
        %v862 = vld [vmem:[%s200 + $0x1350] sm:$0xff]
        %v863 = vld [vmem:[%s200 + $0x1358] sm:$0xff]
        %v864 = vld [vmem:[%s200 + $0x1360] sm:$0xff]
        %v865 = vld [vmem:[%s200 + $0x1368] sm:$0xff]
        %v866 = vld [vmem:[%s200 + $0x1370] sm:$0xff]
        %v867 = vld [vmem:[%s200 + $0x1378] sm:$0xff]
        %v868 = vld [vmem:[%s200 + $0x1380] sm:$0xff]
        %v869 = vld [vmem:[%s200 + $0x1388] sm:$0xff]
        %v870 = vld [vmem:[%s200 + $0x1390] sm:$0xff]
        %v871 = vld [vmem:[%s200 + $0x1398] sm:$0xff]
        %v872 = vld [vmem:[%s200 + $0x13a0] sm:$0xff]
        %v873 = vld [vmem:[%s200 + $0x13a8] sm:$0xff]
        %v874 = vld [vmem:[%s200 + $0x13b0] sm:$0xff]
        %v875 = vld [vmem:[%s200 + $0x13b8] sm:$0xff]
        %v876 = vld [vmem:[%s200 + $0x13c0] sm:$0xff]
        %v877 = vld [vmem:[%s200 + $0x13c8] sm:$0xff]
        %v878 = vld [vmem:[%s200 + $0x13d0] sm:$0xff]
        %v879 = vld [vmem:[%s200 + $0x13d8] sm:$0xff]
        %v880 = vld [vmem:[%s200 + $0x13e0] sm:$0xff]
        %v881 = vld [vmem:[%s200 + $0x13e8] sm:$0xff]
        %v882 = vld [vmem:[%s200 + $0x13f0] sm:$0xff]
        %v883 = vld [vmem:[%s200 + $0x13f8] sm:$0xff]
        %v884 = vld [vmem:[%s200 + $0x1400] sm:$0xff]
        %v885 = vld [vmem:[%s200 + $0x1408] sm:$0xff]
        %v886 = vld [vmem:[%s200 + $0x1410] sm:$0xff]
        %v887 = vld [vmem:[%s200 + $0x1418] sm:$0xff]
        %v888 = vld [vmem:[%s200 + $0x1420] sm:$0xff]
        %v889 = vld [vmem:[%s200 + $0x1428] sm:$0xff]
        %v890 = vld [vmem:[%s200 + $0x1430] sm:$0xff]
        %v891 = vld [vmem:[%s200 + $0x1438] sm:$0xff]
        %v892 = vld [vmem:[%s200 + $0x1440] sm:$0xff]
        %v893 = vld [vmem:[%s200 + $0x1448] sm:$0xff]
        %v894 = vld [vmem:[%s200 + $0x1450] sm:$0xff]
        %v895 = vld [vmem:[%s200 + $0x1458] sm:$0xff]
        %v896 = vld [vmem:[%s200 + $0x1460] sm:$0xff]
        %v897 = vld [vmem:[%s200 + $0x1468] sm:$0xff]
        %v898 = vld [vmem:[%s200 + $0x1470] sm:$0xff]
        %v899 = vld [vmem:[%s200 + $0x1478] sm:$0xff]
        %v900 = vld [vmem:[%s200 + $0x1480] sm:$0xff]
        %v901 = vld [vmem:[%s200 + $0x1488] sm:$0xff]
        %v902 = vld [vmem:[%s200 + $0x1490] sm:$0xff]
        %v903 = vld [vmem:[%s200 + $0x1498] sm:$0xff]
        %v904 = vld [vmem:[%s200 + $0x14a0] sm:$0xff]
        %v905 = vld [vmem:[%s200 + $0x14a8] sm:$0xff]
        %v906 = vld [vmem:[%s200 + $0x14b0] sm:$0xff]
        %v907 = vld [vmem:[%s200 + $0x14b8] sm:$0xff]
        %v908 = vld [vmem:[%s200 + $0x14c0] sm:$0xff]
        %v909 = vld [vmem:[%s200 + $0x14c8] sm:$0xff]
        %v910 = vld [vmem:[%s200 + $0x14d0] sm:$0xff]
        %v911 = vld [vmem:[%s200 + $0x14d8] sm:$0xff]
        %v912 = vld [vmem:[%s200 + $0x14e0] sm:$0xff]
        %v913 = vld [vmem:[%s200 + $0x14e8] sm:$0xff]
        %v914 = vld [vmem:[%s200 + $0x14f0] sm:$0xff]
        %v915 = vld [vmem:[%s200 + $0x14f8] sm:$0xff]
        %v916 = vld [vmem:[%s200 + $0x1500] sm:$0xff]
        %v917 = vld [vmem:[%s200 + $0x1508] sm:$0xff]
        %v918 = vld [vmem:[%s200 + $0x1510] sm:$0xff]
        %v919 = vld [vmem:[%s200 + $0x1518] sm:$0xff]
        %v920 = vld [vmem:[%s200 + $0x1520] sm:$0xff]
        %v921 = vld [vmem:[%s200 + $0x1528] sm:$0xff]
        %v922 = vld [vmem:[%s200 + $0x1530] sm:$0xff]
        %v923 = vld [vmem:[%s200 + $0x1538] sm:$0xff]
        %v924 = vld [vmem:[%s200 + $0x1540] sm:$0xff]
        %v925 = vld [vmem:[%s200 + $0x1548] sm:$0xff]
        %v926 = vld [vmem:[%s200 + $0x1550] sm:$0xff]
        %v927 = vld [vmem:[%s200 + $0x1558] sm:$0xff]
        %v928 = vld [vmem:[%s200 + $0x1560] sm:$0xff]
        %v929 = vld [vmem:[%s200 + $0x1568] sm:$0xff]
        %v930 = vld [vmem:[%s200 + $0x1570] sm:$0xff]
        %v931 = vld [vmem:[%s200 + $0x1578] sm:$0xff]
        %v932 = vld [vmem:[%s200 + $0x1580] sm:$0xff]
        %v933 = vld [vmem:[%s200 + $0x1588] sm:$0xff]
        %v934 = vld [vmem:[%s200 + $0x1590] sm:$0xff]
        %v935 = vld [vmem:[%s200 + $0x1598] sm:$0xff]
        %v936 = vld [vmem:[%s200 + $0x15a0] sm:$0xff]
        %v937 = vld [vmem:[%s200 + $0x15a8] sm:$0xff]
        %v938 = vld [vmem:[%s200 + $0x15b0] sm:$0xff]
        %v939 = vld [vmem:[%s200 + $0x15b8] sm:$0xff]
        %v940 = vld [vmem:[%s200 + $0x15c0] sm:$0xff]
        %v941 = vld [vmem:[%s200 + $0x15c8] sm:$0xff]
        %v942 = vld [vmem:[%s200 + $0x15d0] sm:$0xff]
        %v943 = vld [vmem:[%s200 + $0x15d8] sm:$0xff]
        %v944 = vld [vmem:[%s200 + $0x15e0] sm:$0xff]
        %v945 = vld [vmem:[%s200 + $0x15e8] sm:$0xff]
        %v946 = vld [vmem:[%s200 + $0x15f0] sm:$0xff]
        %v947 = vld [vmem:[%s200 + $0x15f8] sm:$0xff]
        %v948 = vld [vmem:[%s200 + $0x1600] sm:$0xff]
        %v949 = vld [vmem:[%s200 + $0x1608] sm:$0xff]
        %v950 = vld [vmem:[%s200 + $0x1610] sm:$0xff]
        %v951 = vld [vmem:[%s200 + $0x1618] sm:$0xff]
        %v952 = vld [vmem:[%s200 + $0x1620] sm:$0xff]
        %v953 = vld [vmem:[%s200 + $0x1628] sm:$0xff]
        %v954 = vld [vmem:[%s200 + $0x1630] sm:$0xff]
        %v955 = vld [vmem:[%s200 + $0x1638] sm:$0xff]
        %v956 = vld [vmem:[%s200 + $0x1640] sm:$0xff]
        %v957 = vld [vmem:[%s200 + $0x1648] sm:$0xff]
        %v958 = vld [vmem:[%s200 + $0x1650] sm:$0xff]
        %v959 = vld [vmem:[%s200 + $0x1658] sm:$0xff]
        %v960 = vld [vmem:[%s200 + $0x1660] sm:$0xff]
        %v961 = vld [vmem:[%s200 + $0x1668] sm:$0xff]
        %v962 = vld [vmem:[%s200 + $0x1670] sm:$0xff]
        %v963 = vld [vmem:[%s200 + $0x1678] sm:$0xff]
        %v964 = vld [vmem:[%s200 + $0x1680] sm:$0xff]
        %v965 = vld [vmem:[%s200 + $0x1688] sm:$0xff]
        %v966 = vld [vmem:[%s200 + $0x1690] sm:$0xff]
        %v967 = vld [vmem:[%s200 + $0x1698] sm:$0xff]
        %v968 = vld [vmem:[%s200 + $0x16a0] sm:$0xff]
        %v969 = vld [vmem:[%s200 + $0x16a8] sm:$0xff]
        %v970 = vld [vmem:[%s200 + $0x16b0] sm:$0xff]
        %v971 = vld [vmem:[%s200 + $0x16b8] sm:$0xff]
        %v972 = vld [vmem:[%s200 + $0x16c0] sm:$0xff]
        %v973 = vld [vmem:[%s200 + $0x16c8] sm:$0xff]
        %v974 = vld [vmem:[%s200 + $0x16d0] sm:$0xff]
        %v975 = vld [vmem:[%s200 + $0x16d8] sm:$0xff]
        %v976 = vld [vmem:[%s200 + $0x16e0] sm:$0xff]
        %v977 = vld [vmem:[%s200 + $0x16e8] sm:$0xff]
        %v978 = vld [vmem:[%s200 + $0x16f0] sm:$0xff]
        %v979 = vld [vmem:[%s200 + $0x16f8] sm:$0xff]
        %v980 = vld [vmem:[%s200 + $0x1700] sm:$0xff]
        %v981 = vld [vmem:[%s200 + $0x1708] sm:$0xff]
        %v982 = vld [vmem:[%s200 + $0x1710] sm:$0xff]
        %v983 = vld [vmem:[%s200 + $0x1718] sm:$0xff]
        %v984 = vld [vmem:[%s200 + $0x1720] sm:$0xff]
        %v985 = vld [vmem:[%s200 + $0x1728] sm:$0xff]
        %v986 = vld [vmem:[%s200 + $0x1730] sm:$0xff]
        %v987 = vld [vmem:[%s200 + $0x1738] sm:$0xff]
        %v988 = vld [vmem:[%s200 + $0x1740] sm:$0xff]
        %v989 = vld [vmem:[%s200 + $0x1748] sm:$0xff]
        %v990 = vld [vmem:[%s200 + $0x1750] sm:$0xff]
        %v991 = vld [vmem:[%s200 + $0x1758] sm:$0xff]
        %v992 = vld [vmem:[%s200 + $0x1760] sm:$0xff]
        %v993 = vld [vmem:[%s200 + $0x1768] sm:$0xff]
        %v994 = vld [vmem:[%s200 + $0x1770] sm:$0xff]
        %v995 = vld [vmem:[%s200 + $0x1778] sm:$0xff]
        %v996 = vld [vmem:[%s200 + $0x1780] sm:$0xff]
        %v997 = vld [vmem:[%s200 + $0x1788] sm:$0xff]
        %v998 = vld [vmem:[%s200 + $0x1790] sm:$0xff]
        %v999 = vld [vmem:[%s200 + $0x1798] sm:$0xff]
        %v1000 = vld [vmem:[%s200 + $0x17a0] sm:$0xff]
        %v1001 = vld [vmem:[%s200 + $0x17a8] sm:$0xff]
        %v1002 = vld [vmem:[%s200 + $0x17b0] sm:$0xff]
        %v1003 = vld [vmem:[%s200 + $0x17b8] sm:$0xff]
        %v1004 = vld [vmem:[%s200 + $0x17c0] sm:$0xff]
        %v1005 = vld [vmem:[%s200 + $0x17c8] sm:$0xff]
        %v1006 = vld [vmem:[%s200 + $0x17d0] sm:$0xff]
        %v1007 = vld [vmem:[%s200 + $0x17d8] sm:$0xff]
        %v1008 = vld [vmem:[%s200 + $0x17e0] sm:$0xff]
        %v1009 = vld [vmem:[%s200 + $0x17e8] sm:$0xff]
        %v1010 = vld [vmem:[%s200 + $0x17f0] sm:$0xff]
        %v1011 = vld [vmem:[%s200 + $0x17f8] sm:$0xff]
        %v1012 = vld [vmem:[%s200 + $0x1800] sm:$0xff]
        %v1013 = vld [vmem:[%s200 + $0x1808] sm:$0xff]
        %v1014 = vld [vmem:[%s200 + $0x1810] sm:$0xff]
        %v1015 = vld [vmem:[%s200 + $0x1818] sm:$0xff]
        %v1016 = vld [vmem:[%s200 + $0x1820] sm:$0xff]
        %v1017 = vld [vmem:[%s200 + $0x1828] sm:$0xff]
        %v1018 = vld [vmem:[%s200 + $0x1830] sm:$0xff]
        %v1019 = vld [vmem:[%s200 + $0x1838] sm:$0xff]
        %v1020 = vld [vmem:[%s200 + $0x1840] sm:$0xff]
        %v1021 = vld [vmem:[%s200 + $0x1848] sm:$0xff]
        %v1022 = vld [vmem:[%s200 + $0x1850] sm:$0xff]
        %v1023 = vld [vmem:[%s200 + $0x1858] sm:$0xff]
        %v1024 = vld [vmem:[%s200 + $0x1860] sm:$0xff]
        %v1025 = vld [vmem:[%s200 + $0x1868] sm:$0xff]
        %v1026 = vld [vmem:[%s200 + $0x1870] sm:$0xff]
        %v1027 = vld [vmem:[%s200 + $0x1878] sm:$0xff]
        %v1028 = vld [vmem:[%s200 + $0x1880] sm:$0xff]
        %v1029 = vld [vmem:[%s200 + $0x1888] sm:$0xff]
        %v1030 = vld [vmem:[%s200 + $0x1890] sm:$0xff]
        %v1031 = vld [vmem:[%s200 + $0x1898] sm:$0xff]
        %v1032 = vld [vmem:[%s200 + $0x18a0] sm:$0xff]
        %v1033 = vld [vmem:[%s200 + $0x18a8] sm:$0xff]
        %v1034 = vld [vmem:[%s200 + $0x18b0] sm:$0xff]
        %v1035 = vld [vmem:[%s200 + $0x18b8] sm:$0xff]
        %v1036 = vld [vmem:[%s200 + $0x18c0] sm:$0xff]
        %v1037 = vld [vmem:[%s200 + $0x18c8] sm:$0xff]
        %v1038 = vld [vmem:[%s200 + $0x18d0] sm:$0xff]
        %v1039 = vld [vmem:[%s200 + $0x18d8] sm:$0xff]
        %v1040 = vld [vmem:[%s200 + $0x18e0] sm:$0xff]
        %v1041 = vld [vmem:[%s200 + $0x18e8] sm:$0xff]
        %v1042 = vld [vmem:[%s200 + $0x18f0] sm:$0xff]
        %v1043 = vld [vmem:[%s200 + $0x18f8] sm:$0xff]
        %v1044 = vld [vmem:[%s200 + $0x1900] sm:$0xff]
        %v1045 = vld [vmem:[%s200 + $0x1908] sm:$0xff]
        %v1046 = vld [vmem:[%s200 + $0x1910] sm:$0xff]
        %v1047 = vld [vmem:[%s200 + $0x1918] sm:$0xff]
        %v1048 = vld [vmem:[%s200 + $0x1920] sm:$0xff]
        %v1049 = vld [vmem:[%s200 + $0x1928] sm:$0xff]
        %v1050 = vld [vmem:[%s200 + $0x1930] sm:$0xff]
        %v1051 = vld [vmem:[%s200 + $0x1938] sm:$0xff]
        %v1052 = vld [vmem:[%s200 + $0x1940] sm:$0xff]
        %v1053 = vld [vmem:[%s200 + $0x1948] sm:$0xff]
        %v1054 = vld [vmem:[%s200 + $0x1950] sm:$0xff]
        %v1055 = vld [vmem:[%s200 + $0x1958] sm:$0xff]
        %v1056 = vld [vmem:[%s200 + $0x1960] sm:$0xff]
        %v1057 = vld [vmem:[%s200 + $0x1968] sm:$0xff]
        %v1058 = vld [vmem:[%s200 + $0x1970] sm:$0xff]
        %v1059 = vld [vmem:[%s200 + $0x1978] sm:$0xff]
        %v1060 = vld [vmem:[%s200 + $0x1980] sm:$0xff]
        %v1061 = vld [vmem:[%s200 + $0x1988] sm:$0xff]
        %v1062 = vld [vmem:[%s200 + $0x1990] sm:$0xff]
        %v1063 = vld [vmem:[%s200 + $0x1998] sm:$0xff]
        %v1064 = vld [vmem:[%s200 + $0x19a0] sm:$0xff]
        %v1065 = vld [vmem:[%s200 + $0x19a8] sm:$0xff]
        %v1066 = vld [vmem:[%s200 + $0x19b0] sm:$0xff]
        %v1067 = vld [vmem:[%s200 + $0x19b8] sm:$0xff]
        %v1068 = vld [vmem:[%s200 + $0x19c0] sm:$0xff]
        %v1069 = vld [vmem:[%s200 + $0x19c8] sm:$0xff]
        %v1070 = vld [vmem:[%s200 + $0x19d0] sm:$0xff]
        %v1071 = vld [vmem:[%s200 + $0x19d8] sm:$0xff]
        %v1072 = vld [vmem:[%s200 + $0x19e0] sm:$0xff]
        %v1073 = vld [vmem:[%s200 + $0x19e8] sm:$0xff]
        %v1074 = vld [vmem:[%s200 + $0x19f0] sm:$0xff]
        %v1075 = vld [vmem:[%s200 + $0x19f8] sm:$0xff]
        %v1076 = vld [vmem:[%s200 + $0x1a00] sm:$0xff]
        %v1077 = vld [vmem:[%s200 + $0x1a08] sm:$0xff]
        %v1078 = vld [vmem:[%s200 + $0x1a10] sm:$0xff]
        %v1079 = vld [vmem:[%s200 + $0x1a18] sm:$0xff]
        %v1080 = vld [vmem:[%s200 + $0x1a20] sm:$0xff]
        %v1081 = vld [vmem:[%s200 + $0x1a28] sm:$0xff]
        %v1082 = vld [vmem:[%s200 + $0x1a30] sm:$0xff]
        %v1083 = vld [vmem:[%s200 + $0x1a38] sm:$0xff]
        %v1084 = vld [vmem:[%s200 + $0x1a40] sm:$0xff]
        %v1085 = vld [vmem:[%s200 + $0x1a48] sm:$0xff]
        %v1086 = vld [vmem:[%s200 + $0x1a50] sm:$0xff]
        %v1087 = vld [vmem:[%s200 + $0x1a58] sm:$0xff]
        %v1088 = vld [vmem:[%s200 + $0x1a60] sm:$0xff]
        %v1089 = vld [vmem:[%s200 + $0x1a68] sm:$0xff]
        %v1090 = vld [vmem:[%s200 + $0x1a70] sm:$0xff]
        %v1091 = vld [vmem:[%s200 + $0x1a78] sm:$0xff]
        %v1092 = vld [vmem:[%s200 + $0x1a80] sm:$0xff]
        %v1093 = vld [vmem:[%s200 + $0x1a88] sm:$0xff]
        %v1094 = vld [vmem:[%s200 + $0x1a90] sm:$0xff]
        %v1095 = vld [vmem:[%s200 + $0x1a98] sm:$0xff]
        %v1096 = vld [vmem:[%s200 + $0x1aa0] sm:$0xff]
        %v1097 = vld [vmem:[%s200 + $0x1aa8] sm:$0xff]
        %v1098 = vld [vmem:[%s200 + $0x1ab0] sm:$0xff]
        %v1099 = vld [vmem:[%s200 + $0x1ab8] sm:$0xff]
        %v1100 = vld [vmem:[%s200 + $0x1ac0] sm:$0xff]
        %v1101 = vld [vmem:[%s200 + $0x1ac8] sm:$0xff]
        %v1102 = vld [vmem:[%s200 + $0x1ad0] sm:$0xff]
        %v1103 = vld [vmem:[%s200 + $0x1ad8] sm:$0xff]
        %v1104 = vld [vmem:[%s200 + $0x1ae0] sm:$0xff]
        %v1105 = vld [vmem:[%s200 + $0x1ae8] sm:$0xff]
        %v1106 = vld [vmem:[%s200 + $0x1af0] sm:$0xff]
        %v1107 = vld [vmem:[%s200 + $0x1af8] sm:$0xff]
        %v1108 = vld [vmem:[%s200 + $0x1b00] sm:$0xff]
        %v1109 = vld [vmem:[%s200 + $0x1b08] sm:$0xff]
        %v1110 = vld [vmem:[%s200 + $0x1b10] sm:$0xff]
        %v1111 = vld [vmem:[%s200 + $0x1b18] sm:$0xff]
        %v1112 = vld [vmem:[%s200 + $0x1b20] sm:$0xff]
        %v1113 = vld [vmem:[%s200 + $0x1b28] sm:$0xff]
        %v1114 = vld [vmem:[%s200 + $0x1b30] sm:$0xff]
        %v1115 = vld [vmem:[%s200 + $0x1b38] sm:$0xff]
        %v1116 = vld [vmem:[%s200 + $0x1b40] sm:$0xff]
        %v1117 = vld [vmem:[%s200 + $0x1b48] sm:$0xff]
        %v1118 = vld [vmem:[%s200 + $0x1b50] sm:$0xff]
        %v1119 = vld [vmem:[%s200 + $0x1b58] sm:$0xff]
        %v1120 = vld [vmem:[%s200 + $0x1b60] sm:$0xff]
        %v1121 = vld [vmem:[%s200 + $0x1b68] sm:$0xff]
        %v1122 = vld [vmem:[%s200 + $0x1b70] sm:$0xff]
        %v1123 = vld [vmem:[%s200 + $0x1b78] sm:$0xff]
        %v1124 = vld [vmem:[%s200 + $0x1b80] sm:$0xff]
        %v1125 = vld [vmem:[%s200 + $0x1b88] sm:$0xff]
        %v1126 = vld [vmem:[%s200 + $0x1b90] sm:$0xff]
        %v1127 = vld [vmem:[%s200 + $0x1b98] sm:$0xff]
        %v1128 = vld [vmem:[%s200 + $0x1ba0] sm:$0xff]
        %v1129 = vld [vmem:[%s200 + $0x1ba8] sm:$0xff]
        %v1130 = vld [vmem:[%s200 + $0x1bb0] sm:$0xff]
        %v1131 = vld [vmem:[%s200 + $0x1bb8] sm:$0xff]
        %v1132 = vld [vmem:[%s200 + $0x1bc0] sm:$0xff]
        %v1133 = vld [vmem:[%s200 + $0x1bc8] sm:$0xff]
        %v1134 = vld [vmem:[%s200 + $0x1bd0] sm:$0xff]
        %v1135 = vld [vmem:[%s200 + $0x1bd8] sm:$0xff]
        %v1136 = vld [vmem:[%s200 + $0x1be0] sm:$0xff]
        %v1137 = vld [vmem:[%s200 + $0x1be8] sm:$0xff]
        %v1138 = vld [vmem:[%s200 + $0x1bf0] sm:$0xff]
        %v1139 = vld [vmem:[%s200 + $0x1bf8] sm:$0xff]
        %v1140 = vld [vmem:[%s200 + $0x1c00] sm:$0xff]
        %v1141 = vld [vmem:[%s200 + $0x1c08] sm:$0xff]
        %v1142 = vld [vmem:[%s200 + $0x1c10] sm:$0xff]
        %v1143 = vld [vmem:[%s200 + $0x1c18] sm:$0xff]
        %v1144 = vld [vmem:[%s200 + $0x1c20] sm:$0xff]
        %v1145 = vld [vmem:[%s200 + $0x1c28] sm:$0xff]
        %v1146 = vld [vmem:[%s200 + $0x1c30] sm:$0xff]
        %v1147 = vld [vmem:[%s200 + $0x1c38] sm:$0xff]
        %v1148 = vld [vmem:[%s200 + $0x1c40] sm:$0xff]
        %v1149 = vld [vmem:[%s200 + $0x1c48] sm:$0xff]
        %v1150 = vld [vmem:[%s200 + $0x1c50] sm:$0xff]
        %v1151 = vld [vmem:[%s200 + $0x1c58] sm:$0xff]
        %v1152 = vld [vmem:[%s200 + $0x1c60] sm:$0xff]
        %v1153 = vld [vmem:[%s200 + $0x1c68] sm:$0xff]
        %v1154 = vld [vmem:[%s200 + $0x1c70] sm:$0xff]
        %v1155 = vld [vmem:[%s200 + $0x1c78] sm:$0xff]
        %v1156 = vld [vmem:[%s200 + $0x1c80] sm:$0xff]
        %v1157 = vld [vmem:[%s200 + $0x1c88] sm:$0xff]
        %v1158 = vld [vmem:[%s200 + $0x1c90] sm:$0xff]
        %v1159 = vld [vmem:[%s200 + $0x1c98] sm:$0xff]
        %v1160 = vld [vmem:[%s200 + $0x1ca0] sm:$0xff]
        %v1161 = vld [vmem:[%s200 + $0x1ca8] sm:$0xff]
        %v1162 = vld [vmem:[%s200 + $0x1cb0] sm:$0xff]
        %v1163 = vld [vmem:[%s200 + $0x1cb8] sm:$0xff]
        %v1164 = vld [vmem:[%s200 + $0x1cc0] sm:$0xff]
        %v1165 = vld [vmem:[%s200 + $0x1cc8] sm:$0xff]
        %v1166 = vld [vmem:[%s200 + $0x1cd0] sm:$0xff]
        %v1167 = vld [vmem:[%s200 + $0x1cd8] sm:$0xff]
        %v1168 = vld [vmem:[%s200 + $0x1ce0] sm:$0xff]
        %v1169 = vld [vmem:[%s200 + $0x1ce8] sm:$0xff]
        %v1170 = vld [vmem:[%s200 + $0x1cf0] sm:$0xff]
        %v1171 = vld [vmem:[%s200 + $0x1cf8] sm:$0xff]
        %v1172 = vld [vmem:[%s200 + $0x1d00] sm:$0xff]
        %v1173 = vld [vmem:[%s200 + $0x1d08] sm:$0xff]
        %v1174 = vld [vmem:[%s200 + $0x1d10] sm:$0xff]
        %v1175 = vld [vmem:[%s200 + $0x1d18] sm:$0xff]
        %v1176 = vld [vmem:[%s200 + $0x1d20] sm:$0xff]
        %v1177 = vld [vmem:[%s200 + $0x1d28] sm:$0xff]
        %v1178 = vld [vmem:[%s200 + $0x1d30] sm:$0xff]
        %v1179 = vld [vmem:[%s200 + $0x1d38] sm:$0xff]
        %v1180 = vld [vmem:[%s200 + $0x1d40] sm:$0xff]
        %v1181 = vld [vmem:[%s200 + $0x1d48] sm:$0xff]
        %v1182 = vld [vmem:[%s200 + $0x1d50] sm:$0xff]
        %v1183 = vld [vmem:[%s200 + $0x1d58] sm:$0xff]
        %v1184 = vld [vmem:[%s200 + $0x1d60] sm:$0xff]
        %v1185 = vld [vmem:[%s200 + $0x1d68] sm:$0xff]
        %v1186 = vld [vmem:[%s200 + $0x1d70] sm:$0xff]
        %v1187 = vld [vmem:[%s200 + $0x1d78] sm:$0xff]
        %v1188 = vld [vmem:[%s200 + $0x1d80] sm:$0xff]
        %v1189 = vld [vmem:[%s200 + $0x1d88] sm:$0xff]
        %v1190 = vld [vmem:[%s200 + $0x1d90] sm:$0xff]
        %v1191 = vld [vmem:[%s200 + $0x1d98] sm:$0xff]
        %v1192 = vld [vmem:[%s200 + $0x1da0] sm:$0xff]
        %v1193 = vld [vmem:[%s200 + $0x1da8] sm:$0xff]
        %v1194 = vld [vmem:[%s200 + $0x1db0] sm:$0xff]
        %v1195 = vld [vmem:[%s200 + $0x1db8] sm:$0xff]
        %v1196 = vld [vmem:[%s200 + $0x1dc0] sm:$0xff]
        %v1197 = vld [vmem:[%s200 + $0x1dc8] sm:$0xff]
        %v1198 = vld [vmem:[%s200 + $0x1dd0] sm:$0xff]
        %v1199 = vld [vmem:[%s200 + $0x1dd8] sm:$0xff]
        %v1200 = vld [vmem:[%s200 + $0x1de0] sm:$0xff]
        %v1201 = vld [vmem:[%s200 + $0x1de8] sm:$0xff]
        %v1202 = vld [vmem:[%s200 + $0x1df0] sm:$0xff]
        %v1203 = vld [vmem:[%s200 + $0x1df8] sm:$0xff]
        %v1204 = vld [vmem:[%s200 + $0x1e00] sm:$0xff]
        %v1205 = vld [vmem:[%s200 + $0x1e08] sm:$0xff]
        %v1206 = vld [vmem:[%s200 + $0x1e10] sm:$0xff]
        %v1207 = vld [vmem:[%s200 + $0x1e18] sm:$0xff]
        %v1208 = vld [vmem:[%s200 + $0x1e20] sm:$0xff]
        %v1209 = vld [vmem:[%s200 + $0x1e28] sm:$0xff]
        %v1210 = vld [vmem:[%s200 + $0x1e30] sm:$0xff]
        %v1211 = vld [vmem:[%s200 + $0x1e38] sm:$0xff]
        %v1212 = vld [vmem:[%s200 + $0x1e40] sm:$0xff]
        %v1213 = vld [vmem:[%s200 + $0x1e48] sm:$0xff]
        %v1214 = vld [vmem:[%s200 + $0x1e50] sm:$0xff]
        %v1215 = vld [vmem:[%s200 + $0x1e58] sm:$0xff]
        %v1216 = vld [vmem:[%s200 + $0x1e60] sm:$0xff]
        %v1217 = vld [vmem:[%s200 + $0x1e68] sm:$0xff]
        %v1218 = vld [vmem:[%s200 + $0x1e70] sm:$0xff]
        %v1219 = vld [vmem:[%s200 + $0x1e78] sm:$0xff]
        %v1220 = vld [vmem:[%s200 + $0x1e80] sm:$0xff]
        %v1221 = vld [vmem:[%s200 + $0x1e88] sm:$0xff]
        %v1222 = vld [vmem:[%s200 + $0x1e90] sm:$0xff]
        %v1223 = vld [vmem:[%s200 + $0x1e98] sm:$0xff]
        %v1224 = vld [vmem:[%s200 + $0x1ea0] sm:$0xff]
        %v1225 = vld [vmem:[%s200 + $0x1ea8] sm:$0xff]
        %v1226 = vld [vmem:[%s200 + $0x1eb0] sm:$0xff]
        %v1227 = vld [vmem:[%s200 + $0x1eb8] sm:$0xff]
        %v1228 = vld [vmem:[%s200 + $0x1ec0] sm:$0xff]
        %v1229 = vld [vmem:[%s200 + $0x1ec8] sm:$0xff]
        %v1230 = vld [vmem:[%s200 + $0x1ed0] sm:$0xff]
        %v1231 = vld [vmem:[%s200 + $0x1ed8] sm:$0xff]
        %v1232 = vld [vmem:[%s200 + $0x1ee0] sm:$0xff]
        %v1233 = vld [vmem:[%s200 + $0x1ee8] sm:$0xff]
        %v1234 = vld [vmem:[%s200 + $0x1ef0] sm:$0xff]
        %v1235 = vld [vmem:[%s200 + $0x1ef8] sm:$0xff]
        %v1236 = vld [vmem:[%s200 + $0x1f00] sm:$0xff]
        %v1237 = vld [vmem:[%s200 + $0x1f08] sm:$0xff]
        %v1238 = vld [vmem:[%s200 + $0x1f10] sm:$0xff]
        %v1239 = vld [vmem:[%s200 + $0x1f18] sm:$0xff]
        %v1240 = vld [vmem:[%s200 + $0x1f20] sm:$0xff]
        %v1241 = vld [vmem:[%s200 + $0x1f28] sm:$0xff]
        %v1242 = vld [vmem:[%s200 + $0x1f30] sm:$0xff]
        %v1243 = vld [vmem:[%s200 + $0x1f38] sm:$0xff]
        %v1244 = vld [vmem:[%s200 + $0x1f40] sm:$0xff]
        %v1245 = vld [vmem:[%s200 + $0x1f48] sm:$0xff]
        %v1246 = vld [vmem:[%s200 + $0x1f50] sm:$0xff]
        %v1247 = vld [vmem:[%s200 + $0x1f58] sm:$0xff]
        %v1248 = vld [vmem:[%s200 + $0x1f60] sm:$0xff]
        %v1249 = vld [vmem:[%s200 + $0x1f68] sm:$0xff]
        %v1250 = vld [vmem:[%s200 + $0x1f70] sm:$0xff]
        %v1251 = vld [vmem:[%s200 + $0x1f78] sm:$0xff]
        %v1252 = vld [vmem:[%s200 + $0x1f80] sm:$0xff]
        %v1253 = vld [vmem:[%s200 + $0x1f88] sm:$0xff]
        %v1254 = vld [vmem:[%s200 + $0x1f90] sm:$0xff]
        %v1255 = vld [vmem:[%s200 + $0x1f98] sm:$0xff]
        %v1256 = vld [vmem:[%s200 + $0x1fa0] sm:$0xff]
        %v1257 = vld [vmem:[%s200 + $0x1fa8] sm:$0xff]
        %v1258 = vld [vmem:[%s200 + $0x1fb0] sm:$0xff]
        %v1259 = vld [vmem:[%s200 + $0x1fb8] sm:$0xff]
        %v1260 = vld [vmem:[%s200 + $0x1fc0] sm:$0xff]
        %v1261 = vld [vmem:[%s200 + $0x1fc8] sm:$0xff]
        %v1262 = vld [vmem:[%s200 + $0x1fd0] sm:$0xff]
        %v1263 = vld [vmem:[%s200 + $0x1fd8] sm:$0xff]
        %v1264 = vld [vmem:[%s200 + $0x1fe0] sm:$0xff]
        %v1265 = vld [vmem:[%s200 + $0x1fe8] sm:$0xff]
        %v1266 = vld [vmem:[%s200 + $0x1ff0] sm:$0xff]
        %v1267 = vld [vmem:[%s200 + $0x1ff8] sm:$0xff]
        %v1268 = vld [vmem:[%s200 + $0x2000] sm:$0xff]
        %v1269 = vld [vmem:[%s200 + $0x2008] sm:$0xff]
        %v1270 = vld [vmem:[%s200 + $0x2010] sm:$0xff]
        %v1271 = vld [vmem:[%s200 + $0x2018] sm:$0xff]
        %v1272 = vld [vmem:[%s200 + $0x2020] sm:$0xff]
        %v1273 = vld [vmem:[%s200 + $0x2028] sm:$0xff]
        %v1274 = vld [vmem:[%s200 + $0x2030] sm:$0xff]
        %v1275 = vld [vmem:[%s200 + $0x2038] sm:$0xff]
        %v1276 = vld [vmem:[%s200 + $0x2040] sm:$0xff]
        %v1277 = vld [vmem:[%s200 + $0x2048] sm:$0xff]
        %v1278 = vld [vmem:[%s200 + $0x2050] sm:$0xff]
        %v1279 = vld [vmem:[%s200 + $0x2058] sm:$0xff]
        %v1280 = vld [vmem:[%s200 + $0x2060] sm:$0xff]
        %v1281 = vld [vmem:[%s200 + $0x2068] sm:$0xff]
        %v1282 = vld [vmem:[%s200 + $0x2070] sm:$0xff]
        %v1283 = vld [vmem:[%s200 + $0x2078] sm:$0xff]
        %v1284 = vld [vmem:[%s200 + $0x2080] sm:$0xff]
        %v1285 = vld [vmem:[%s200 + $0x2088] sm:$0xff]
        %v1286 = vld [vmem:[%s200 + $0x2090] sm:$0xff]
        %v1287 = vld [vmem:[%s200 + $0x2098] sm:$0xff]
        %v1288 = vld [vmem:[%s200 + $0x20a0] sm:$0xff]
        %v1289 = vld [vmem:[%s200 + $0x20a8] sm:$0xff]
        %v1290 = vld [vmem:[%s200 + $0x20b0] sm:$0xff]
        %v1291 = vld [vmem:[%s200 + $0x20b8] sm:$0xff]
        %v1292 = vld [vmem:[%s200 + $0x20c0] sm:$0xff]
        %v1293 = vld [vmem:[%s200 + $0x20c8] sm:$0xff]
        %v1294 = vld [vmem:[%s200 + $0x20d0] sm:$0xff]
        %v1295 = vld [vmem:[%s200 + $0x20d8] sm:$0xff]
        %v1296 = vld [vmem:[%s200 + $0x20e0] sm:$0xff]
        %v1297 = vld [vmem:[%s200 + $0x20e8] sm:$0xff]
        %v1298 = vld [vmem:[%s200 + $0x20f0] sm:$0xff]
        %v1299 = vld [vmem:[%s200 + $0x20f8] sm:$0xff]
        %v1300 = vld [vmem:[%s200 + $0x2100] sm:$0xff]
        %v1301 = vld [vmem:[%s200 + $0x2108] sm:$0xff]
        %v1302 = vld [vmem:[%s200 + $0x2110] sm:$0xff]
        %v1303 = vld [vmem:[%s200 + $0x2118] sm:$0xff]
        %v1304 = vld [vmem:[%s200 + $0x2120] sm:$0xff]
        %v1305 = vld [vmem:[%s200 + $0x2128] sm:$0xff]
        %v1306 = vld [vmem:[%s200 + $0x2130] sm:$0xff]
        %v1307 = vld [vmem:[%s200 + $0x2138] sm:$0xff]
        %v1308 = vld [vmem:[%s200 + $0x2140] sm:$0xff]
        %v1309 = vld [vmem:[%s200 + $0x2148] sm:$0xff]
        %v1310 = vld [vmem:[%s200 + $0x2150] sm:$0xff]
        %v1311 = vld [vmem:[%s200 + $0x2158] sm:$0xff]
        %v1312 = vld [vmem:[%s200 + $0x2160] sm:$0xff]
        %v1313 = vld [vmem:[%s200 + $0x2168] sm:$0xff]
        %v1314 = vld [vmem:[%s200 + $0x2170] sm:$0xff]
        %v1315 = vld [vmem:[%s200 + $0x2178] sm:$0xff]
        %v1316 = vld [vmem:[%s200 + $0x2180] sm:$0xff]
        %v1317 = vld [vmem:[%s200 + $0x2188] sm:$0xff]
        %v1318 = vld [vmem:[%s200 + $0x2190] sm:$0xff]
        %v1319 = vld [vmem:[%s200 + $0x2198] sm:$0xff]
        %v1320 = vld [vmem:[%s200 + $0x21a0] sm:$0xff]
        %v1321 = vld [vmem:[%s200 + $0x21a8] sm:$0xff]
        %v1322 = vld [vmem:[%s200 + $0x21b0] sm:$0xff]
        %v1323 = vld [vmem:[%s200 + $0x21b8] sm:$0xff]
        %v1324 = vld [vmem:[%s200 + $0x21c0] sm:$0xff]
        %v1325 = vld [vmem:[%s200 + $0x21c8] sm:$0xff]
        %v1326 = vld [vmem:[%s200 + $0x21d0] sm:$0xff]
        %v1327 = vld [vmem:[%s200 + $0x21d8] sm:$0xff]
        %v1328 = vld [vmem:[%s200 + $0x21e0] sm:$0xff]
        %v1329 = vld [vmem:[%s200 + $0x21e8] sm:$0xff]
        %v1330 = vld [vmem:[%s200 + $0x21f0] sm:$0xff]
        %v1331 = vld [vmem:[%s200 + $0x21f8] sm:$0xff]
        %v1332 = vld [vmem:[%s200 + $0x2200] sm:$0xff]
        %v1333 = vld [vmem:[%s200 + $0x2208] sm:$0xff]
        %v1334 = vld [vmem:[%s200 + $0x2210] sm:$0xff]
        %v1335 = vld [vmem:[%s200 + $0x2218] sm:$0xff]
        %v1336 = vld [vmem:[%s200 + $0x2220] sm:$0xff]
        %v1337 = vld [vmem:[%s200 + $0x2228] sm:$0xff]
        %v1338 = vld [vmem:[%s200 + $0x2230] sm:$0xff]
        %v1339 = vld [vmem:[%s200 + $0x2238] sm:$0xff]
        %v1340 = vld [vmem:[%s200 + $0x2240] sm:$0xff]
        %v1341 = vld [vmem:[%s200 + $0x2248] sm:$0xff]
        %v1342 = vld [vmem:[%s200 + $0x2250] sm:$0xff]
        %v1343 = vld [vmem:[%s200 + $0x2258] sm:$0xff]
        %v1344 = vld [vmem:[%s200 + $0x2260] sm:$0xff]
        %v1345 = vld [vmem:[%s200 + $0x2268] sm:$0xff]
        %v1346 = vld [vmem:[%s200 + $0x2270] sm:$0xff]
        %v1347 = vld [vmem:[%s200 + $0x2278] sm:$0xff]
        %v1348 = vld [vmem:[%s200 + $0x2280] sm:$0xff]
        %v1349 = vld [vmem:[%s200 + $0x2288] sm:$0xff]
        %v1350 = vld [vmem:[%s200 + $0x2290] sm:$0xff]
        %v1351 = vld [vmem:[%s200 + $0x2298] sm:$0xff]
        %v1352 = vld [vmem:[%s200 + $0x22a0] sm:$0xff]
        %v1353 = vld [vmem:[%s200 + $0x22a8] sm:$0xff]
        %v1354 = vld [vmem:[%s200 + $0x22b0] sm:$0xff]
        %v1355 = vld [vmem:[%s200 + $0x22b8] sm:$0xff]
        %v1356 = vld [vmem:[%s200 + $0x22c0] sm:$0xff]
        %v1357 = vld [vmem:[%s200 + $0x22c8] sm:$0xff]
        %v1358 = vld [vmem:[%s200 + $0x22d0] sm:$0xff]
        %v1359 = vld [vmem:[%s200 + $0x22d8] sm:$0xff]
        %v1360 = vld [vmem:[%s200 + $0x22e0] sm:$0xff]
        %v1361 = vld [vmem:[%s200 + $0x22e8] sm:$0xff]
        %v1362 = vld [vmem:[%s200 + $0x22f0] sm:$0xff]
        %v1363 = vld [vmem:[%s200 + $0x22f8] sm:$0xff]
        %v1364 = vld [vmem:[%s200 + $0x2300] sm:$0xff]
        %v1365 = vld [vmem:[%s200 + $0x2308] sm:$0xff]
        %v1366 = vld [vmem:[%s200 + $0x2310] sm:$0xff]
        %v1367 = vld [vmem:[%s200 + $0x2318] sm:$0xff]
        %v1368 = vld [vmem:[%s200 + $0x2320] sm:$0xff]
        %v1369 = vld [vmem:[%s200 + $0x2328] sm:$0xff]
        %v1370 = vld [vmem:[%s200 + $0x2330] sm:$0xff]
        %v1371 = vld [vmem:[%s200 + $0x2338] sm:$0xff]
        %v1372 = vld [vmem:[%s200 + $0x2340] sm:$0xff]
        %v1373 = vld [vmem:[%s200 + $0x2348] sm:$0xff]
        %v1374 = vld [vmem:[%s200 + $0x2350] sm:$0xff]
        %v1375 = vld [vmem:[%s200 + $0x2358] sm:$0xff]
        %v1376 = vld [vmem:[%s200 + $0x2360] sm:$0xff]
        %v1377 = vld [vmem:[%s200 + $0x2368] sm:$0xff]
        %v1378 = vld [vmem:[%s200 + $0x2370] sm:$0xff]
        %v1379 = vld [vmem:[%s200 + $0x2378] sm:$0xff]
        %v1380 = vld [vmem:[%s200 + $0x2380] sm:$0xff]
        %v1381 = vld [vmem:[%s200 + $0x2388] sm:$0xff]
        %v1382 = vld [vmem:[%s200 + $0x2390] sm:$0xff]
        %v1383 = vld [vmem:[%s200 + $0x2398] sm:$0xff]
        %v1384 = vld [vmem:[%s200 + $0x23a0] sm:$0xff]
        %v1385 = vld [vmem:[%s200 + $0x23a8] sm:$0xff]
        %v1386 = vld [vmem:[%s200 + $0x23b0] sm:$0xff]
        %v1387 = vld [vmem:[%s200 + $0x23b8] sm:$0xff]
        %v1388 = vld [vmem:[%s200 + $0x23c0] sm:$0xff]
        %v1389 = vld [vmem:[%s200 + $0x23c8] sm:$0xff]
        %v1390 = vld [vmem:[%s200 + $0x23d0] sm:$0xff]
        %v1391 = vld [vmem:[%s200 + $0x23d8] sm:$0xff]
        %v1392 = vld [vmem:[%s200 + $0x23e0] sm:$0xff]
        %v1393 = vld [vmem:[%s200 + $0x23e8] sm:$0xff]
        %v1394 = vld [vmem:[%s200 + $0x23f0] sm:$0xff]
        %v1395 = vld [vmem:[%s200 + $0x23f8] sm:$0xff]
        %v1396 = vld [vmem:[%s200 + $0x2400] sm:$0xff]
        %v1397 = vld [vmem:[%s200 + $0x2408] sm:$0xff]
        %v1398 = vld [vmem:[%s200 + $0x2410] sm:$0xff]
        %v1399 = vld [vmem:[%s200 + $0x2418] sm:$0xff]
        %v1400 = vld [vmem:[%s200 + $0x2420] sm:$0xff]
        %v1401 = vld [vmem:[%s200 + $0x2428] sm:$0xff]
        %v1402 = vld [vmem:[%s200 + $0x2430] sm:$0xff]
        %v1403 = vld [vmem:[%s200 + $0x2438] sm:$0xff]
        %v1404 = vld [vmem:[%s200 + $0x2440] sm:$0xff]
        %v1405 = vld [vmem:[%s200 + $0x2448] sm:$0xff]
        %v1406 = vld [vmem:[%s200 + $0x2450] sm:$0xff]
        %v1407 = vld [vmem:[%s200 + $0x2458] sm:$0xff]
        %v1408 = vld [vmem:[%s200 + $0x2460] sm:$0xff]
        %v1409 = vld [vmem:[%s200 + $0x2468] sm:$0xff]
        %v1410 = vld [vmem:[%s200 + $0x2470] sm:$0xff]
        %v1411 = vld [vmem:[%s200 + $0x2478] sm:$0xff]
        %v1412 = vld [vmem:[%s200 + $0x2480] sm:$0xff]
        %v1413 = vld [vmem:[%s200 + $0x2488] sm:$0xff]
        %v1414 = vld [vmem:[%s200 + $0x2490] sm:$0xff]
        %v1415 = vld [vmem:[%s200 + $0x2498] sm:$0xff]
        %v1416 = vld [vmem:[%s200 + $0x24a0] sm:$0xff]
        %v1417 = vld [vmem:[%s200 + $0x24a8] sm:$0xff]
        %v1418 = vld [vmem:[%s200 + $0x24b0] sm:$0xff]
        %v1419 = vld [vmem:[%s200 + $0x24b8] sm:$0xff]
        %v1420 = vld [vmem:[%s200 + $0x24c0] sm:$0xff]
        %v1421 = vld [vmem:[%s200 + $0x24c8] sm:$0xff]
        %v1422 = vld [vmem:[%s200 + $0x24d0] sm:$0xff]
        %v1423 = vld [vmem:[%s200 + $0x24d8] sm:$0xff]
        %v1424 = vld [vmem:[%s200 + $0x24e0] sm:$0xff]
        %v1425 = vld [vmem:[%s200 + $0x24e8] sm:$0xff]
        %v1426 = vld [vmem:[%s200 + $0x24f0] sm:$0xff]
        %v1427 = vld [vmem:[%s200 + $0x24f8] sm:$0xff]
        %v1428 = vld [vmem:[%s200 + $0x2500] sm:$0xff]
        %v1429 = vld [vmem:[%s200 + $0x2508] sm:$0xff]
        %v1430 = vld [vmem:[%s200 + $0x2510] sm:$0xff]
        %v1431 = vld [vmem:[%s200 + $0x2518] sm:$0xff]
        %v1432 = vld [vmem:[%s200 + $0x2520] sm:$0xff]
        %v1433 = vld [vmem:[%s200 + $0x2528] sm:$0xff]
        %v1434 = vld [vmem:[%s200 + $0x2530] sm:$0xff]
        %v1435 = vld [vmem:[%s200 + $0x2538] sm:$0xff]
        %v1436 = vld [vmem:[%s200 + $0x2540] sm:$0xff]
        %v1437 = vld [vmem:[%s200 + $0x2548] sm:$0xff]
        %v1438 = vld [vmem:[%s200 + $0x2550] sm:$0xff]
        %v1439 = vld [vmem:[%s200 + $0x2558] sm:$0xff]
        %v1440 = vld [vmem:[%s200 + $0x2560] sm:$0xff]
        %v1441 = vld [vmem:[%s200 + $0x2568] sm:$0xff]
        %v1442 = vld [vmem:[%s200 + $0x2570] sm:$0xff]
        %v1443 = vld [vmem:[%s200 + $0x2578] sm:$0xff]
        %v1444 = vld [vmem:[%s200 + $0x2580] sm:$0xff]
        %v1445 = vld [vmem:[%s200 + $0x2588] sm:$0xff]
        %v1446 = vld [vmem:[%s200 + $0x2590] sm:$0xff]
        %v1447 = vld [vmem:[%s200 + $0x2598] sm:$0xff]
        %v1448 = vld [vmem:[%s200 + $0x25a0] sm:$0xff]
        %v1449 = vld [vmem:[%s200 + $0x25a8] sm:$0xff]
        %v1450 = vld [vmem:[%s200 + $0x25b0] sm:$0xff]
        %v1451 = vld [vmem:[%s200 + $0x25b8] sm:$0xff]
        %v1452 = vld [vmem:[%s200 + $0x25c0] sm:$0xff]
        %v1453 = vld [vmem:[%s200 + $0x25c8] sm:$0xff]
        %v1454 = vld [vmem:[%s200 + $0x25d0] sm:$0xff]
        %v1455 = vld [vmem:[%s200 + $0x25d8] sm:$0xff]
        %v1456 = vld [vmem:[%s200 + $0x25e0] sm:$0xff]
        %v1457 = vld [vmem:[%s200 + $0x25e8] sm:$0xff]
        %v1458 = vld [vmem:[%s200 + $0x25f0] sm:$0xff]
        %v1459 = vld [vmem:[%s200 + $0x25f8] sm:$0xff]
        %v1460 = vld [vmem:[%s200 + $0x2600] sm:$0xff]
        %v1461 = vld [vmem:[%s200 + $0x2608] sm:$0xff]
        %v1462 = vld [vmem:[%s200 + $0x2610] sm:$0xff]
        %v1463 = vld [vmem:[%s200 + $0x2618] sm:$0xff]
        %v1464 = vld [vmem:[%s200 + $0x2620] sm:$0xff]
        %v1465 = vld [vmem:[%s200 + $0x2628] sm:$0xff]
        %v1466 = vld [vmem:[%s200 + $0x2630] sm:$0xff]
        %v1467 = vld [vmem:[%s200 + $0x2638] sm:$0xff]
        %v1468 = vld [vmem:[%s200 + $0x2640] sm:$0xff]
        %v1469 = vld [vmem:[%s200 + $0x2648] sm:$0xff]
        %v1470 = vld [vmem:[%s200 + $0x2650] sm:$0xff]
        %v1471 = vld [vmem:[%s200 + $0x2658] sm:$0xff]
        %v1472 = vld [vmem:[%s200 + $0x2660] sm:$0xff]
        %v1473 = vld [vmem:[%s200 + $0x2668] sm:$0xff]
        %v1474 = vld [vmem:[%s200 + $0x2670] sm:$0xff]
        %v1475 = vld [vmem:[%s200 + $0x2678] sm:$0xff]
        %v1476 = vld [vmem:[%s200 + $0x2680] sm:$0xff]
        %v1477 = vld [vmem:[%s200 + $0x2688] sm:$0xff]
        %v1478 = vld [vmem:[%s200 + $0x2690] sm:$0xff]
        %v1479 = vld [vmem:[%s200 + $0x2698] sm:$0xff]
        %v1480 = vld [vmem:[%s200 + $0x26a0] sm:$0xff]
        %v1481 = vld [vmem:[%s200 + $0x26a8] sm:$0xff]
        %v1482 = vld [vmem:[%s200 + $0x26b0] sm:$0xff]
        %v1483 = vld [vmem:[%s200 + $0x26b8] sm:$0xff]
        %v1484 = vld [vmem:[%s200 + $0x26c0] sm:$0xff]
        %v1485 = vld [vmem:[%s200 + $0x26c8] sm:$0xff]
        %v1486 = vld [vmem:[%s200 + $0x26d0] sm:$0xff]
        %v1487 = vld [vmem:[%s200 + $0x26d8] sm:$0xff]
        %v1488 = vld [vmem:[%s200 + $0x26e0] sm:$0xff]
        %v1489 = vld [vmem:[%s200 + $0x26e8] sm:$0xff]
        %v1490 = vld [vmem:[%s200 + $0x26f0] sm:$0xff]
        %v1491 = vld [vmem:[%s200 + $0x26f8] sm:$0xff]
        %v1492 = vld [vmem:[%s200 + $0x2700] sm:$0xff]
        %v1493 = vld [vmem:[%s200 + $0x2708] sm:$0xff]
        %v1494 = vld [vmem:[%s200 + $0x2710] sm:$0xff]
        %v1495 = vld [vmem:[%s200 + $0x2718] sm:$0xff]
        %v1496 = vld [vmem:[%s200 + $0x2720] sm:$0xff]
        %v1497 = vld [vmem:[%s200 + $0x2728] sm:$0xff]
        %v1498 = vld [vmem:[%s200 + $0x2730] sm:$0xff]
        %v1499 = vld [vmem:[%s200 + $0x2738] sm:$0xff]
        %v1500 = vld [vmem:[%s200 + $0x2740] sm:$0xff]
        %v1501 = vld [vmem:[%s200 + $0x2748] sm:$0xff]
        %v1502 = vld [vmem:[%s200 + $0x2750] sm:$0xff]
        %v1503 = vld [vmem:[%s200 + $0x2758] sm:$0xff]
        %v1504 = vld [vmem:[%s200 + $0x2760] sm:$0xff]
        %v1505 = vld [vmem:[%s200 + $0x2768] sm:$0xff]
        %v1506 = vld [vmem:[%s200 + $0x2770] sm:$0xff]
        %v1507 = vld [vmem:[%s200 + $0x2778] sm:$0xff]
        %v1508 = vld [vmem:[%s200 + $0x2780] sm:$0xff]
        %v1509 = vld [vmem:[%s200 + $0x2788] sm:$0xff]
        %v1510 = vld [vmem:[%s200 + $0x2790] sm:$0xff]
        %v1511 = vld [vmem:[%s200 + $0x2798] sm:$0xff]
        %v1512 = vld [vmem:[%s200 + $0x27a0] sm:$0xff]
        %v1513 = vld [vmem:[%s200 + $0x27a8] sm:$0xff]
        %v1514 = vld [vmem:[%s200 + $0x27b0] sm:$0xff]
        %v1515 = vld [vmem:[%s200 + $0x27b8] sm:$0xff]
        %v1516 = vld [vmem:[%s200 + $0x27c0] sm:$0xff]
        %v1517 = vld [vmem:[%s200 + $0x27c8] sm:$0xff]
        %v1518 = vld [vmem:[%s200 + $0x27d0] sm:$0xff]
        %v1519 = vld [vmem:[%s200 + $0x27d8] sm:$0xff]
        %v1520 = vld [vmem:[%s200 + $0x27e0] sm:$0xff]
        %v1521 = vld [vmem:[%s200 + $0x27e8] sm:$0xff]
        %v1522 = vld [vmem:[%s200 + $0x27f0] sm:$0xff]
        %v1523 = vld [vmem:[%s200 + $0x27f8] sm:$0xff]
        %v1524 = vld [vmem:[%s200 + $0x2800] sm:$0xff]
        %v1525 = vld [vmem:[%s200 + $0x2808] sm:$0xff]
        %v1526 = vld [vmem:[%s200 + $0x2810] sm:$0xff]
        %v1527 = vld [vmem:[%s200 + $0x2818] sm:$0xff]
        %v1528 = vld [vmem:[%s200 + $0x2820] sm:$0xff]
        %v1529 = vld [vmem:[%s200 + $0x2828] sm:$0xff]
        %v1530 = vld [vmem:[%s200 + $0x2830] sm:$0xff]
        %v1531 = vld [vmem:[%s200 + $0x2838] sm:$0xff]
        %v1532 = vld [vmem:[%s200 + $0x2840] sm:$0xff]
        %v1533 = vld [vmem:[%s200 + $0x2848] sm:$0xff]
        %v1534 = vld [vmem:[%s200 + $0x2850] sm:$0xff]
        %v1535 = vld [vmem:[%s200 + $0x2858] sm:$0xff]
        %v1536 = vld [vmem:[%s200 + $0x2860] sm:$0xff]
        %v1537 = vld [vmem:[%s200 + $0x2868] sm:$0xff]
        %v1538 = vld [vmem:[%s200 + $0x2870] sm:$0xff]
        %v1539 = vld [vmem:[%s200 + $0x2878] sm:$0xff]
        %v1540 = vld [vmem:[%s200 + $0x2880] sm:$0xff]
        %v1541 = vld [vmem:[%s200 + $0x2888] sm:$0xff]
        %v1542 = vld [vmem:[%s200 + $0x2890] sm:$0xff]
        %v1543 = vld [vmem:[%s200 + $0x2898] sm:$0xff]
        %v1544 = vld [vmem:[%s200 + $0x28a0] sm:$0xff]
        %v1545 = vld [vmem:[%s200 + $0x28a8] sm:$0xff]
        %v1546 = vld [vmem:[%s200 + $0x28b0] sm:$0xff]
        %v1547 = vld [vmem:[%s200 + $0x28b8] sm:$0xff]
        %v1548 = vld [vmem:[%s200 + $0x28c0] sm:$0xff]
        %v1549 = vld [vmem:[%s200 + $0x28c8] sm:$0xff]
        %v1550 = vld [vmem:[%s200 + $0x28d0] sm:$0xff]
        %v1551 = vld [vmem:[%s200 + $0x28d8] sm:$0xff]
        %v1552 = vld [vmem:[%s200 + $0x28e0] sm:$0xff]
        %v1553 = vld [vmem:[%s200 + $0x28e8] sm:$0xff]
        %v1554 = vld [vmem:[%s200 + $0x28f0] sm:$0xff]
        %v1555 = vld [vmem:[%s200 + $0x28f8] sm:$0xff]
        %v1556 = vld [vmem:[%s200 + $0x2900] sm:$0xff]
        %v1557 = vld [vmem:[%s200 + $0x2908] sm:$0xff]
        %v1558 = vld [vmem:[%s200 + $0x2910] sm:$0xff]
        %v1559 = vld [vmem:[%s200 + $0x2918] sm:$0xff]
        %v1560 = vld [vmem:[%s200 + $0x2920] sm:$0xff]
        %v1561 = vld [vmem:[%s200 + $0x2928] sm:$0xff]
        %v1562 = vld [vmem:[%s200 + $0x2930] sm:$0xff]
        %v1563 = vld [vmem:[%s200 + $0x2938] sm:$0xff]
        %v1564 = vld [vmem:[%s200 + $0x2940] sm:$0xff]
        %v1565 = vld [vmem:[%s200 + $0x2948] sm:$0xff]
        %v1566 = vld [vmem:[%s200 + $0x2950] sm:$0xff]
        %v1567 = vld [vmem:[%s200 + $0x2958] sm:$0xff]
        %v1568 = vld [vmem:[%s200 + $0x2960] sm:$0xff]
        %v1569 = vld [vmem:[%s200 + $0x2968] sm:$0xff]
        %v1570 = vld [vmem:[%s200 + $0x2970] sm:$0xff]
        %v1571 = vld [vmem:[%s200 + $0x2978] sm:$0xff]
        %v1572 = vld [vmem:[%s200 + $0x2980] sm:$0xff]
        %v1573 = vld [vmem:[%s200 + $0x2988] sm:$0xff]
        %v1574 = vld [vmem:[%s200 + $0x2990] sm:$0xff]
        %v1575 = vld [vmem:[%s200 + $0x2998] sm:$0xff]
        %v1576 = vld [vmem:[%s200 + $0x29a0] sm:$0xff]
        %v1577 = vld [vmem:[%s200 + $0x29a8] sm:$0xff]
        %v1578 = vld [vmem:[%s200 + $0x29b0] sm:$0xff]
        %v1579 = vld [vmem:[%s200 + $0x29b8] sm:$0xff]
        %v1580 = vld [vmem:[%s200 + $0x29c0] sm:$0xff]
        %v1581 = vld [vmem:[%s200 + $0x29c8] sm:$0xff]
        %v1582 = vld [vmem:[%s200 + $0x29d0] sm:$0xff]
        %v1583 = vld [vmem:[%s200 + $0x29d8] sm:$0xff]
        %v1584 = vld [vmem:[%s200 + $0x29e0] sm:$0xff]
        %v1585 = vld [vmem:[%s200 + $0x29e8] sm:$0xff]
        %v1586 = vld [vmem:[%s200 + $0x29f0] sm:$0xff]
        %v1587 = vld [vmem:[%s200 + $0x29f8] sm:$0xff]
        %v1588 = vld [vmem:[%s200 + $0x2a00] sm:$0xff]
        %v1589 = vld [vmem:[%s200 + $0x2a08] sm:$0xff]
        %v1590 = vld [vmem:[%s200 + $0x2a10] sm:$0xff]
        %v1591 = vld [vmem:[%s200 + $0x2a18] sm:$0xff]
        %v1592 = vld [vmem:[%s200 + $0x2a20] sm:$0xff]
        %v1593 = vld [vmem:[%s200 + $0x2a28] sm:$0xff]
        %v1594 = vld [vmem:[%s200 + $0x2a30] sm:$0xff]
        %v1595 = vld [vmem:[%s200 + $0x2a38] sm:$0xff]
        %v1596 = vld [vmem:[%s200 + $0x2a40] sm:$0xff]
        %v1597 = vld [vmem:[%s200 + $0x2a48] sm:$0xff]
        %v1598 = vld [vmem:[%s200 + $0x2a50] sm:$0xff]
        %v1599 = vld [vmem:[%s200 + $0x2a58] sm:$0xff]
        %v1600 = vld [vmem:[%s200 + $0x2a60] sm:$0xff]
        %v1601 = vld [vmem:[%s200 + $0x2a68] sm:$0xff]
        %v1602 = vld [vmem:[%s200 + $0x2a70] sm:$0xff]
        %v1603 = vld [vmem:[%s200 + $0x2a78] sm:$0xff]
        %v1604 = vld [vmem:[%s200 + $0x2a80] sm:$0xff]
        %v1605 = vld [vmem:[%s200 + $0x2a88] sm:$0xff]
        %v1606 = vld [vmem:[%s200 + $0x2a90] sm:$0xff]
        %v1607 = vld [vmem:[%s200 + $0x2a98] sm:$0xff]
        %v1608 = vld [vmem:[%s200 + $0x2aa0] sm:$0xff]
        %v1609 = vld [vmem:[%s200 + $0x2aa8] sm:$0xff]
        %v1610 = vld [vmem:[%s200 + $0x2ab0] sm:$0xff]
        %v1611 = vld [vmem:[%s200 + $0x2ab8] sm:$0xff]
        %v1612 = vld [vmem:[%s200 + $0x2ac0] sm:$0xff]
        %v1613 = vld [vmem:[%s200 + $0x2ac8] sm:$0xff]
        %v1614 = vld [vmem:[%s200 + $0x2ad0] sm:$0xff]
        %v1615 = vld [vmem:[%s200 + $0x2ad8] sm:$0xff]
        %v1616 = vld [vmem:[%s200 + $0x2ae0] sm:$0xff]
        %v1617 = vld [vmem:[%s200 + $0x2ae8] sm:$0xff]
        %v1618 = vld [vmem:[%s200 + $0x2af0] sm:$0xff]
        %v1619 = vld [vmem:[%s200 + $0x2af8] sm:$0xff]
        %v1620 = vld [vmem:[%s200 + $0x2b00] sm:$0xff]
        %v1621 = vld [vmem:[%s200 + $0x2b08] sm:$0xff]
        %v1622 = vld [vmem:[%s200 + $0x2b10] sm:$0xff]
        %v1623 = vld [vmem:[%s200 + $0x2b18] sm:$0xff]
        %v1624 = vld [vmem:[%s200 + $0x2b20] sm:$0xff]
        %v1625 = vld [vmem:[%s200 + $0x2b28] sm:$0xff]
        %v1626 = vld [vmem:[%s200 + $0x2b30] sm:$0xff]
        %v1627 = vld [vmem:[%s200 + $0x2b38] sm:$0xff]
        %v1628 = vld [vmem:[%s200 + $0x2b40] sm:$0xff]
        %v1629 = vld [vmem:[%s200 + $0x2b48] sm:$0xff]
        %v1630 = vld [vmem:[%s200 + $0x2b50] sm:$0xff]
        %v1631 = vld [vmem:[%s200 + $0x2b58] sm:$0xff]
        %v1632 = vld [vmem:[%s200 + $0x2b60] sm:$0xff]
        %v1633 = vld [vmem:[%s200 + $0x2b68] sm:$0xff]
        %v1634 = vld [vmem:[%s200 + $0x2b70] sm:$0xff]
        %v1635 = vld [vmem:[%s200 + $0x2b78] sm:$0xff]
        %v1636 = vld [vmem:[%s200 + $0x2b80] sm:$0xff]
        %v1637 = vld [vmem:[%s200 + $0x2b88] sm:$0xff]
        %v1638 = vld [vmem:[%s200 + $0x2b90] sm:$0xff]
        %v1639 = vld [vmem:[%s200 + $0x2b98] sm:$0xff]
        %v1640 = vld [vmem:[%s200 + $0x2ba0] sm:$0xff]
        %v1641 = vld [vmem:[%s200 + $0x2ba8] sm:$0xff]
        %v1642 = vld [vmem:[%s200 + $0x2bb0] sm:$0xff]
        %v1643 = vld [vmem:[%s200 + $0x2bb8] sm:$0xff]
        %v1644 = vld [vmem:[%s200 + $0x2bc0] sm:$0xff]
        %v1645 = vld [vmem:[%s200 + $0x2bc8] sm:$0xff]
        %v1646 = vld [vmem:[%s200 + $0x2bd0] sm:$0xff]
        %v1647 = vld [vmem:[%s200 + $0x2bd8] sm:$0xff]
        %v1648 = vld [vmem:[%s200 + $0x2be0] sm:$0xff]
        %v1649 = vld [vmem:[%s200 + $0x2be8] sm:$0xff]
        %v1650 = vld [vmem:[%s200 + $0x2bf0] sm:$0xff]
        %v1651 = vld [vmem:[%s200 + $0x2bf8] sm:$0xff]
        %v1652 = vld [vmem:[%s200 + $0x2c00] sm:$0xff]
        %v1653 = vld [vmem:[%s200 + $0x2c08] sm:$0xff]
        %v1654 = vld [vmem:[%s200 + $0x2c10] sm:$0xff]
        %v1655 = vld [vmem:[%s200 + $0x2c18] sm:$0xff]
        %v1656 = vld [vmem:[%s200 + $0x2c20] sm:$0xff]
        %v1657 = vld [vmem:[%s200 + $0x2c28] sm:$0xff]
        %v1658 = vld [vmem:[%s200 + $0x2c30] sm:$0xff]
        %v1659 = vld [vmem:[%s200 + $0x2c38] sm:$0xff]
        %v1660 = vld [vmem:[%s200 + $0x2c40] sm:$0xff]
        %v1661 = vld [vmem:[%s200 + $0x2c48] sm:$0xff]
        %v1662 = vld [vmem:[%s200 + $0x2c50] sm:$0xff]
        %v1663 = vld [vmem:[%s200 + $0x2c58] sm:$0xff]
        %v1664 = vld [vmem:[%s200 + $0x2c60] sm:$0xff]
        %v1665 = vld [vmem:[%s200 + $0x2c68] sm:$0xff]
        %v1666 = vld [vmem:[%s200 + $0x2c70] sm:$0xff]
        %v1667 = vld [vmem:[%s200 + $0x2c78] sm:$0xff]
        %v1668 = vld [vmem:[%s200 + $0x2c80] sm:$0xff]
        %v1669 = vld [vmem:[%s200 + $0x2c88] sm:$0xff]
        %v1670 = vld [vmem:[%s200 + $0x2c90] sm:$0xff]
        %v1671 = vld [vmem:[%s200 + $0x2c98] sm:$0xff]
        %v1672 = vld [vmem:[%s200 + $0x2ca0] sm:$0xff]
        %v1673 = vld [vmem:[%s200 + $0x2ca8] sm:$0xff]
        %v1674 = vld [vmem:[%s200 + $0x2cb0] sm:$0xff]
        %v1675 = vld [vmem:[%s200 + $0x2cb8] sm:$0xff]
        %v1676 = vld [vmem:[%s200 + $0x2cc0] sm:$0xff]
        %v1677 = vld [vmem:[%s200 + $0x2cc8] sm:$0xff]
        %v1678 = vld [vmem:[%s200 + $0x2cd0] sm:$0xff]
        %v1679 = vld [vmem:[%s200 + $0x2cd8] sm:$0xff]
        %v1680 = vld [vmem:[%s200 + $0x2ce0] sm:$0xff]
        %v1681 = vld [vmem:[%s200 + $0x2ce8] sm:$0xff]
        %v1682 = vld [vmem:[%s200 + $0x2cf0] sm:$0xff]
        %v1683 = vld [vmem:[%s200 + $0x2cf8] sm:$0xff]
        %v1684 = vld [vmem:[%s200 + $0x2d00] sm:$0xff]
        %v1685 = vld [vmem:[%s200 + $0x2d08] sm:$0xff]
        %v1686 = vld [vmem:[%s200 + $0x2d10] sm:$0xff]
        %v1687 = vld [vmem:[%s200 + $0x2d18] sm:$0xff]
        %v1688 = vld [vmem:[%s200 + $0x2d20] sm:$0xff]
        %v1689 = vld [vmem:[%s200 + $0x2d28] sm:$0xff]
        %v1690 = vld [vmem:[%s200 + $0x2d30] sm:$0xff]
        %v1691 = vld [vmem:[%s200 + $0x2d38] sm:$0xff]
        %v1692 = vld [vmem:[%s200 + $0x2d40] sm:$0xff]
        %v1693 = vld [vmem:[%s200 + $0x2d48] sm:$0xff]
        %v1694 = vld [vmem:[%s200 + $0x2d50] sm:$0xff]
        %v1695 = vld [vmem:[%s200 + $0x2d58] sm:$0xff]
        %v1696 = vld [vmem:[%s200 + $0x2d60] sm:$0xff]
        %v1697 = vld [vmem:[%s200 + $0x2d68] sm:$0xff]
        %v1698 = vld [vmem:[%s200 + $0x2d70] sm:$0xff]
        %v1699 = vld [vmem:[%s200 + $0x2d78] sm:$0xff]
        %v1700 = vld [vmem:[%s200 + $0x2d80] sm:$0xff]
        %v1701 = vld [vmem:[%s200 + $0x2d88] sm:$0xff]
        %v1702 = vld [vmem:[%s200 + $0x2d90] sm:$0xff]
        %v1703 = vld [vmem:[%s200 + $0x2d98] sm:$0xff]
        %v1704 = vld [vmem:[%s200 + $0x2da0] sm:$0xff]
        %v1705 = vld [vmem:[%s200 + $0x2da8] sm:$0xff]
        %v1706 = vld [vmem:[%s200 + $0x2db0] sm:$0xff]
        %v1707 = vld [vmem:[%s200 + $0x2db8] sm:$0xff]
        %v1708 = vld [vmem:[%s200 + $0x2dc0] sm:$0xff]
        %v1709 = vld [vmem:[%s200 + $0x2dc8] sm:$0xff]
        %v1710 = vld [vmem:[%s200 + $0x2dd0] sm:$0xff]
        %v1711 = vld [vmem:[%s200 + $0x2dd8] sm:$0xff]
        %v1712 = vld [vmem:[%s200 + $0x2de0] sm:$0xff]
        %v1713 = vld [vmem:[%s200 + $0x2de8] sm:$0xff]
        %v1714 = vld [vmem:[%s200 + $0x2df0] sm:$0xff]
        %v1715 = vld [vmem:[%s200 + $0x2df8] sm:$0xff]
        %v1716 = vld [vmem:[%s200 + $0x2e00] sm:$0xff]
        %v1717 = vld [vmem:[%s200 + $0x2e08] sm:$0xff]
        %v1718 = vld [vmem:[%s200 + $0x2e10] sm:$0xff]
        %v1719 = vld [vmem:[%s200 + $0x2e18] sm:$0xff]
        %v1720 = vld [vmem:[%s200 + $0x2e20] sm:$0xff]
        %v1721 = vld [vmem:[%s200 + $0x2e28] sm:$0xff]
        %v1722 = vld [vmem:[%s200 + $0x2e30] sm:$0xff]
        %v1723 = vld [vmem:[%s200 + $0x2e38] sm:$0xff]
        %v1724 = vld [vmem:[%s200 + $0x2e40] sm:$0xff]
        %v1725 = vld [vmem:[%s200 + $0x2e48] sm:$0xff]
        %v1726 = vld [vmem:[%s200 + $0x2e50] sm:$0xff]
        %v1727 = vld [vmem:[%s200 + $0x2e58] sm:$0xff]
        %v1728 = vld [vmem:[%s200 + $0x2e60] sm:$0xff]
        %v1729 = vld [vmem:[%s200 + $0x2e68] sm:$0xff]
        %v1730 = vld [vmem:[%s200 + $0x2e70] sm:$0xff]
        %v1731 = vld [vmem:[%s200 + $0x2e78] sm:$0xff]
        %v1732 = vld [vmem:[%s200 + $0x2e80] sm:$0xff]
        %v1733 = vld [vmem:[%s200 + $0x2e88] sm:$0xff]
        %v1734 = vld [vmem:[%s200 + $0x2e90] sm:$0xff]
        %v1735 = vld [vmem:[%s200 + $0x2e98] sm:$0xff]
        %v1736 = vld [vmem:[%s200 + $0x2ea0] sm:$0xff]
        %v1737 = vld [vmem:[%s200 + $0x2ea8] sm:$0xff]
        %v1738 = vld [vmem:[%s200 + $0x2eb0] sm:$0xff]
        %v1739 = vld [vmem:[%s200 + $0x2eb8] sm:$0xff]
        %v1740 = vld [vmem:[%s200 + $0x2ec0] sm:$0xff]
        %v1741 = vld [vmem:[%s200 + $0x2ec8] sm:$0xff]
        %v1742 = vld [vmem:[%s200 + $0x2ed0] sm:$0xff]
        %v1743 = vld [vmem:[%s200 + $0x2ed8] sm:$0xff]
        %v1744 = vld [vmem:[%s200 + $0x2ee0] sm:$0xff]
        %v1745 = vld [vmem:[%s200 + $0x2ee8] sm:$0xff]
        %v1746 = vld [vmem:[%s200 + $0x2ef0] sm:$0xff]
        %v1747 = vld [vmem:[%s200 + $0x2ef8] sm:$0xff]
        %v1748 = vld [vmem:[%s200 + $0x2f00] sm:$0xff]
        %v1749 = vld [vmem:[%s200 + $0x2f08] sm:$0xff]
        %v1750 = vld [vmem:[%s200 + $0x2f10] sm:$0xff]
        %v1751 = vld [vmem:[%s200 + $0x2f18] sm:$0xff]
        %v1752 = vld [vmem:[%s200 + $0x2f20] sm:$0xff]
        %v1753 = vld [vmem:[%s200 + $0x2f28] sm:$0xff]
        %v1754 = vld [vmem:[%s200 + $0x2f30] sm:$0xff]
        %v1755 = vld [vmem:[%s200 + $0x2f38] sm:$0xff]
        %v1756 = vld [vmem:[%s200 + $0x2f40] sm:$0xff]
        %v1757 = vld [vmem:[%s200 + $0x2f48] sm:$0xff]
        %v1758 = vld [vmem:[%s200 + $0x2f50] sm:$0xff]
        %v1759 = vld [vmem:[%s200 + $0x2f58] sm:$0xff]
        %v1760 = vld [vmem:[%s200 + $0x2f60] sm:$0xff]
        %v1761 = vld [vmem:[%s200 + $0x2f68] sm:$0xff]
        %v1762 = vld [vmem:[%s200 + $0x2f70] sm:$0xff]
        %v1763 = vld [vmem:[%s200 + $0x2f78] sm:$0xff]
        %v1764 = vld [vmem:[%s200 + $0x2f80] sm:$0xff]
        %v1765 = vld [vmem:[%s200 + $0x2f88] sm:$0xff]
        %v1766 = vld [vmem:[%s200 + $0x2f90] sm:$0xff]
        %v1767 = vld [vmem:[%s200 + $0x2f98] sm:$0xff]
        %v1768 = vld [vmem:[%s200 + $0x2fa0] sm:$0xff]
        %v1769 = vld [vmem:[%s200 + $0x2fa8] sm:$0xff]
        %v1770 = vld [vmem:[%s200 + $0x2fb0] sm:$0xff]
        %v1771 = vld [vmem:[%s200 + $0x2fb8] sm:$0xff]
        %v1772 = vld [vmem:[%s200 + $0x2fc0] sm:$0xff]
        %v1773 = vld [vmem:[%s200 + $0x2fc8] sm:$0xff]
        %v1774 = vld [vmem:[%s200 + $0x2fd0] sm:$0xff]
        %v1775 = vld [vmem:[%s200 + $0x2fd8] sm:$0xff]
        %v1776 = vld [vmem:[%s200 + $0x2fe0] sm:$0xff]
        %v1777 = vld [vmem:[%s200 + $0x2fe8] sm:$0xff]
        %v1778 = vld [vmem:[%s200 + $0x2ff0] sm:$0xff]
        %v1779 = vld [vmem:[%s200 + $0x2ff8] sm:$0xff]
        %v1780 = vld [vmem:[%s200 + $0x3000] sm:$0xff]
        %v1781 = vld [vmem:[%s200 + $0x3008] sm:$0xff]
        %v1782 = vld [vmem:[%s200 + $0x3010] sm:$0xff]
        %v1783 = vld [vmem:[%s200 + $0x3018] sm:$0xff]
        %v1784 = vld [vmem:[%s200 + $0x3020] sm:$0xff]
        %v1785 = vld [vmem:[%s200 + $0x3028] sm:$0xff]
        %v1786 = vld [vmem:[%s200 + $0x3030] sm:$0xff]
        %v1787 = vld [vmem:[%s200 + $0x3038] sm:$0xff]
        %v1788 = vld [vmem:[%s200 + $0x3040] sm:$0xff]
        %v1789 = vld [vmem:[%s200 + $0x3048] sm:$0xff]
        %v1790 = vld [vmem:[%s200 + $0x3050] sm:$0xff]
        %v1791 = vld [vmem:[%s200 + $0x3058] sm:$0xff]
        %v1792 = vld [vmem:[%s200 + $0x3060] sm:$0xff]
        %v1793 = vld [vmem:[%s200 + $0x3068] sm:$0xff]
        %v1794 = vld [vmem:[%s200 + $0x3070] sm:$0xff]
        %v1795 = vld [vmem:[%s200 + $0x3078] sm:$0xff]
        %v1796 = vld [vmem:[%s200 + $0x3080] sm:$0xff]
        %v1797 = vld [vmem:[%s200 + $0x3088] sm:$0xff]
        %v1798 = vld [vmem:[%s200 + $0x3090] sm:$0xff]
        %v1799 = vld [vmem:[%s200 + $0x3098] sm:$0xff]
        %v1800 = vld [vmem:[%s200 + $0x30a0] sm:$0xff]
        %v1801 = vld [vmem:[%s200 + $0x30a8] sm:$0xff]
        %v1802 = vld [vmem:[%s200 + $0x30b0] sm:$0xff]
        %v1803 = vld [vmem:[%s200 + $0x30b8] sm:$0xff]
        %v1804 = vld [vmem:[%s200 + $0x30c0] sm:$0xff]
        %v1805 = vld [vmem:[%s200 + $0x30c8] sm:$0xff]
        %v1806 = vld [vmem:[%s200 + $0x30d0] sm:$0xff]
        %v1807 = vld [vmem:[%s200 + $0x30d8] sm:$0xff]
        %v1808 = vld [vmem:[%s200 + $0x30e0] sm:$0xff]
        %v1809 = vld [vmem:[%s200 + $0x30e8] sm:$0xff]
        %v1810 = vld [vmem:[%s200 + $0x30f0] sm:$0xff]
        %v1811 = vld [vmem:[%s200 + $0x30f8] sm:$0xff]
        %v1812 = vld [vmem:[%s200 + $0x3100] sm:$0xff]
        %v1813 = vld [vmem:[%s200 + $0x3108] sm:$0xff]
        %v1814 = vld [vmem:[%s200 + $0x3110] sm:$0xff]
        %v1815 = vld [vmem:[%s200 + $0x3118] sm:$0xff]
        %v1816 = vld [vmem:[%s200 + $0x3120] sm:$0xff]
        %v1817 = vld [vmem:[%s200 + $0x3128] sm:$0xff]
        %v1818 = vld [vmem:[%s200 + $0x3130] sm:$0xff]
        %v1819 = vld [vmem:[%s200 + $0x3138] sm:$0xff]
        %v1820 = vld [vmem:[%s200 + $0x3140] sm:$0xff]
        %v1821 = vld [vmem:[%s200 + $0x3148] sm:$0xff]
        %v1822 = vld [vmem:[%s200 + $0x3150] sm:$0xff]
        %v1823 = vld [vmem:[%s200 + $0x3158] sm:$0xff]
        %v1824 = vld [vmem:[%s200 + $0x3160] sm:$0xff]
        %v1825 = vld [vmem:[%s200 + $0x3168] sm:$0xff]
        %v1826 = vld [vmem:[%s200 + $0x3170] sm:$0xff]
        %v1827 = vld [vmem:[%s200 + $0x3178] sm:$0xff]
        %v1828 = vld [vmem:[%s200 + $0x3180] sm:$0xff]
        %v1829 = vld [vmem:[%s200 + $0x3188] sm:$0xff]
        %v1830 = vld [vmem:[%s200 + $0x3190] sm:$0xff]
        %v1831 = vld [vmem:[%s200 + $0x3198] sm:$0xff]
        %v1832 = vld [vmem:[%s200 + $0x31a0] sm:$0xff]
        %v1833 = vld [vmem:[%s200 + $0x31a8] sm:$0xff]
        %v1834 = vld [vmem:[%s200 + $0x31b0] sm:$0xff]
        %v1835 = vld [vmem:[%s200 + $0x31b8] sm:$0xff]
        %v1836 = vld [vmem:[%s200 + $0x31c0] sm:$0xff]
        %v1837 = vld [vmem:[%s200 + $0x31c8] sm:$0xff]
        %v1838 = vld [vmem:[%s200 + $0x31d0] sm:$0xff]
        %v1839 = vld [vmem:[%s200 + $0x31d8] sm:$0xff]
        %v1840 = vld [vmem:[%s200 + $0x31e0] sm:$0xff]
        %v1841 = vld [vmem:[%s200 + $0x31e8] sm:$0xff]
        %v1842 = vld [vmem:[%s200 + $0x31f0] sm:$0xff]
        %v1843 = vld [vmem:[%s200 + $0x31f8] sm:$0xff]
        %v1844 = vld [vmem:[%s200 + $0x3200] sm:$0xff]
        %v1845 = vld [vmem:[%s200 + $0x3208] sm:$0xff]
        %v1846 = vld [vmem:[%s200 + $0x3210] sm:$0xff]
        %v1847 = vld [vmem:[%s200 + $0x3218] sm:$0xff]
        %v1848 = vld [vmem:[%s200 + $0x3220] sm:$0xff]
        %v1849 = vld [vmem:[%s200 + $0x3228] sm:$0xff]
        %v1850 = vld [vmem:[%s200 + $0x3230] sm:$0xff]
        %v1851 = vld [vmem:[%s200 + $0x3238] sm:$0xff]
        %v1852 = vld [vmem:[%s200 + $0x3240] sm:$0xff]
        %v1853 = vld [vmem:[%s200 + $0x3248] sm:$0xff]
        %v1854 = vld [vmem:[%s200 + $0x3250] sm:$0xff]
        %v1855 = vld [vmem:[%s200 + $0x3258] sm:$0xff]
        %v1856 = vld [vmem:[%s200 + $0x3260] sm:$0xff]
        %v1857 = vld [vmem:[%s200 + $0x3268] sm:$0xff]
        %v1858 = vld [vmem:[%s200 + $0x3270] sm:$0xff]
        %v1859 = vld [vmem:[%s200 + $0x3278] sm:$0xff]
        %v1860 = vld [vmem:[%s200 + $0x3280] sm:$0xff]
        %v1861 = vld [vmem:[%s200 + $0x3288] sm:$0xff]
        %v1862 = vld [vmem:[%s200 + $0x3290] sm:$0xff]
        %v1863 = vld [vmem:[%s200 + $0x3298] sm:$0xff]
        %v1864 = vld [vmem:[%s200 + $0x32a0] sm:$0xff]
        %v1865 = vld [vmem:[%s200 + $0x32a8] sm:$0xff]
        %v1866 = vld [vmem:[%s200 + $0x32b0] sm:$0xff]
        %v1867 = vld [vmem:[%s200 + $0x32b8] sm:$0xff]
        %v1868 = vld [vmem:[%s200 + $0x32c0] sm:$0xff]
        %v1869 = vld [vmem:[%s200 + $0x32c8] sm:$0xff]
        %v1870 = vld [vmem:[%s200 + $0x32d0] sm:$0xff]
        %v1871 = vld [vmem:[%s200 + $0x32d8] sm:$0xff]
        %v1872 = vld [vmem:[%s200 + $0x32e0] sm:$0xff]
        %v1873 = vld [vmem:[%s200 + $0x32e8] sm:$0xff]
        %v1874 = vld [vmem:[%s200 + $0x32f0] sm:$0xff]
        %v1875 = vld [vmem:[%s200 + $0x32f8] sm:$0xff]
        %v1876 = vld [vmem:[%s200 + $0x3300] sm:$0xff]
        %v1877 = vld [vmem:[%s200 + $0x3308] sm:$0xff]
        %v1878 = vld [vmem:[%s200 + $0x3310] sm:$0xff]
        %v1879 = vld [vmem:[%s200 + $0x3318] sm:$0xff]
        %v1880 = vld [vmem:[%s200 + $0x3320] sm:$0xff]
        %v1881 = vld [vmem:[%s200 + $0x3328] sm:$0xff]
        %v1882 = vld [vmem:[%s200 + $0x3330] sm:$0xff]
        %v1883 = vld [vmem:[%s200 + $0x3338] sm:$0xff]
        %v1884 = vld [vmem:[%s200 + $0x3340] sm:$0xff]
        %v1885 = vld [vmem:[%s200 + $0x3348] sm:$0xff]
        %v1886 = vld [vmem:[%s200 + $0x3350] sm:$0xff]
        %v1887 = vld [vmem:[%s200 + $0x3358] sm:$0xff]
        %v1888 = vld [vmem:[%s200 + $0x3360] sm:$0xff]
        %v1889 = vld [vmem:[%s200 + $0x3368] sm:$0xff]
        %v1890 = vld [vmem:[%s200 + $0x3370] sm:$0xff]
        %v1891 = vld [vmem:[%s200 + $0x3378] sm:$0xff]
        %v1892 = vld [vmem:[%s200 + $0x3380] sm:$0xff]
        %v1893 = vld [vmem:[%s200 + $0x3388] sm:$0xff]
        %v1894 = vld [vmem:[%s200 + $0x3390] sm:$0xff]
        %v1895 = vld [vmem:[%s200 + $0x3398] sm:$0xff]
        %v1896 = vld [vmem:[%s200 + $0x33a0] sm:$0xff]
        %v1897 = vld [vmem:[%s200 + $0x33a8] sm:$0xff]
        %v1898 = vld [vmem:[%s200 + $0x33b0] sm:$0xff]
        %v1899 = vld [vmem:[%s200 + $0x33b8] sm:$0xff]
        %v1900 = vld [vmem:[%s200 + $0x33c0] sm:$0xff]
        %v1901 = vld [vmem:[%s200 + $0x33c8] sm:$0xff]
        %v1902 = vld [vmem:[%s200 + $0x33d0] sm:$0xff]
        %v1903 = vld [vmem:[%s200 + $0x33d8] sm:$0xff]
        %v1904 = vld [vmem:[%s200 + $0x33e0] sm:$0xff]
        %v1905 = vld [vmem:[%s200 + $0x33e8] sm:$0xff]
        %v1906 = vld [vmem:[%s200 + $0x33f0] sm:$0xff]
        %v1907 = vld [vmem:[%s200 + $0x33f8] sm:$0xff]
        %v1908 = vld [vmem:[%s200 + $0x3400] sm:$0xff]
        %v1909 = vld [vmem:[%s200 + $0x3408] sm:$0xff]
        %v1910 = vld [vmem:[%s200 + $0x3410] sm:$0xff]
        %v1911 = vld [vmem:[%s200 + $0x3418] sm:$0xff]
        %v1912 = vld [vmem:[%s200 + $0x3420] sm:$0xff]
        %v1913 = vld [vmem:[%s200 + $0x3428] sm:$0xff]
        %v1914 = vld [vmem:[%s200 + $0x3430] sm:$0xff]
        %v1915 = vld [vmem:[%s200 + $0x3438] sm:$0xff]
        %v1916 = vld [vmem:[%s200 + $0x3440] sm:$0xff]
        %v1917 = vld [vmem:[%s200 + $0x3448] sm:$0xff]
        %v1918 = vld [vmem:[%s200 + $0x3450] sm:$0xff]
        %v1919 = vld [vmem:[%s200 + $0x3458] sm:$0xff]
        %v1920 = vld [vmem:[%s200 + $0x3460] sm:$0xff]
        %v1921 = vld [vmem:[%s200 + $0x3468] sm:$0xff]
        %v1922 = vld [vmem:[%s200 + $0x3470] sm:$0xff]
        %v1923 = vld [vmem:[%s200 + $0x3478] sm:$0xff]
        %v1924 = vld [vmem:[%s200 + $0x3480] sm:$0xff]
        %v1925 = vld [vmem:[%s200 + $0x3488] sm:$0xff]
        %v1926 = vld [vmem:[%s200 + $0x3490] sm:$0xff]
        %v1927 = vld [vmem:[%s200 + $0x3498] sm:$0xff]
        %v1928 = vld [vmem:[%s200 + $0x34a0] sm:$0xff]
        %v1929 = vld [vmem:[%s200 + $0x34a8] sm:$0xff]
        %v1930 = vld [vmem:[%s200 + $0x34b0] sm:$0xff]
        %v1931 = vld [vmem:[%s200 + $0x34b8] sm:$0xff]
        %v1932 = vld [vmem:[%s200 + $0x34c0] sm:$0xff]
        %v1933 = vld [vmem:[%s200 + $0x34c8] sm:$0xff]
        %v1934 = vld [vmem:[%s200 + $0x34d0] sm:$0xff]
        %v1935 = vld [vmem:[%s200 + $0x34d8] sm:$0xff]
        %v1936 = vld [vmem:[%s200 + $0x34e0] sm:$0xff]
        %v1937 = vld [vmem:[%s200 + $0x34e8] sm:$0xff]
        %v1938 = vld [vmem:[%s200 + $0x34f0] sm:$0xff]
        %v1939 = vld [vmem:[%s200 + $0x34f8] sm:$0xff]
        %v1940 = vld [vmem:[%s200 + $0x3500] sm:$0xff]
        %v1941 = vld [vmem:[%s200 + $0x3508] sm:$0xff]
        %v1942 = vld [vmem:[%s200 + $0x3510] sm:$0xff]
        %v1943 = vld [vmem:[%s200 + $0x3518] sm:$0xff]
        %v1944 = vld [vmem:[%s200 + $0x3520] sm:$0xff]
        %v1945 = vld [vmem:[%s200 + $0x3528] sm:$0xff]
        %v1946 = vld [vmem:[%s200 + $0x3530] sm:$0xff]
        %v1947 = vld [vmem:[%s200 + $0x3538] sm:$0xff]
        %v1948 = vld [vmem:[%s200 + $0x3540] sm:$0xff]
        %v1949 = vld [vmem:[%s200 + $0x3548] sm:$0xff]
        %v1950 = vld [vmem:[%s200 + $0x3550] sm:$0xff]
        %v1951 = vld [vmem:[%s200 + $0x3558] sm:$0xff]
        %v1952 = vld [vmem:[%s200 + $0x3560] sm:$0xff]
        %v1953 = vld [vmem:[%s200 + $0x3568] sm:$0xff]
        %v1954 = vld [vmem:[%s200 + $0x3570] sm:$0xff]
        %v1955 = vld [vmem:[%s200 + $0x3578] sm:$0xff]
        %v1956 = vld [vmem:[%s200 + $0x3580] sm:$0xff]
        %v1957 = vld [vmem:[%s200 + $0x3588] sm:$0xff]
        %v1958 = vld [vmem:[%s200 + $0x3590] sm:$0xff]
        %v1959 = vld [vmem:[%s200 + $0x3598] sm:$0xff]
        %v1960 = vld [vmem:[%s200 + $0x35a0] sm:$0xff]
        %v1961 = vld [vmem:[%s200 + $0x35a8] sm:$0xff]
        %v1962 = vld [vmem:[%s200 + $0x35b0] sm:$0xff]
        %v1963 = vld [vmem:[%s200 + $0x35b8] sm:$0xff]
        %v1964 = vld [vmem:[%s200 + $0x35c0] sm:$0xff]
        %v1965 = vld [vmem:[%s200 + $0x35c8] sm:$0xff]
        %v1966 = vld [vmem:[%s200 + $0x35d0] sm:$0xff]
        %v1967 = vld [vmem:[%s200 + $0x35d8] sm:$0xff]
        %v1968 = vld [vmem:[%s200 + $0x35e0] sm:$0xff]
        %v1969 = vld [vmem:[%s200 + $0x35e8] sm:$0xff]
        %v1970 = vld [vmem:[%s200 + $0x35f0] sm:$0xff]
        %v1971 = vld [vmem:[%s200 + $0x35f8] sm:$0xff]
        %v1972 = vld [vmem:[%s200 + $0x3600] sm:$0xff]
        %v1973 = vld [vmem:[%s200 + $0x3608] sm:$0xff]
        %v1974 = vld [vmem:[%s200 + $0x3610] sm:$0xff]
        %v1975 = vld [vmem:[%s200 + $0x3618] sm:$0xff]
        %v1976 = vld [vmem:[%s200 + $0x3620] sm:$0xff]
        %v1977 = vld [vmem:[%s200 + $0x3628] sm:$0xff]
        %v1978 = vld [vmem:[%s200 + $0x3630] sm:$0xff]
        %v1979 = vld [vmem:[%s200 + $0x3638] sm:$0xff]
        %v1980 = vld [vmem:[%s200 + $0x3640] sm:$0xff]
        %v1981 = vld [vmem:[%s200 + $0x3648] sm:$0xff]
        %v1982 = vld [vmem:[%s200 + $0x3650] sm:$0xff]
        %v1983 = vld [vmem:[%s200 + $0x3658] sm:$0xff]
        %v1984 = vld [vmem:[%s200 + $0x3660] sm:$0xff]
        %v1985 = vld [vmem:[%s200 + $0x3668] sm:$0xff]
        %v1986 = vld [vmem:[%s200 + $0x3670] sm:$0xff]
        %v1987 = vld [vmem:[%s200 + $0x3678] sm:$0xff]
        %v1988 = vld [vmem:[%s200 + $0x3680] sm:$0xff]
        %v1989 = vld [vmem:[%s200 + $0x3688] sm:$0xff]
        %v1990 = vld [vmem:[%s200 + $0x3690] sm:$0xff]
        %v1991 = vld [vmem:[%s200 + $0x3698] sm:$0xff]
        %v1992 = vld [vmem:[%s200 + $0x36a0] sm:$0xff]
        %v1993 = vld [vmem:[%s200 + $0x36a8] sm:$0xff]
        %v1994 = vld [vmem:[%s200 + $0x36b0] sm:$0xff]
        %v1995 = vld [vmem:[%s200 + $0x36b8] sm:$0xff]
        %v1996 = vld [vmem:[%s200 + $0x36c0] sm:$0xff]
        %v1997 = vld [vmem:[%s200 + $0x36c8] sm:$0xff]
        %v1998 = vld [vmem:[%s200 + $0x36d0] sm:$0xff]
        %v1999 = vld [vmem:[%s200 + $0x36d8] sm:$0xff]
        %v2000 = vld [vmem:[%s200 + $0x36e0] sm:$0xff]
        %v2001 = vld [vmem:[%s200 + $0x36e8] sm:$0xff]
        %v2002 = vld [vmem:[%s200 + $0x36f0] sm:$0xff]
        %v2003 = vld [vmem:[%s200 + $0x36f8] sm:$0xff]
        %v2004 = vld [vmem:[%s200 + $0x3700] sm:$0xff]
        %v2005 = vld [vmem:[%s200 + $0x3708] sm:$0xff]
        %v2006 = vld [vmem:[%s200 + $0x3710] sm:$0xff]
        %v2007 = vld [vmem:[%s200 + $0x3718] sm:$0xff]
        %v2008 = vld [vmem:[%s200 + $0x3720] sm:$0xff]
        %v2009 = vld [vmem:[%s200 + $0x3728] sm:$0xff]
        %v2010 = vld [vmem:[%s200 + $0x3730] sm:$0xff]
        %v2011 = vld [vmem:[%s200 + $0x3738] sm:$0xff]
        %v2012 = vld [vmem:[%s200 + $0x3740] sm:$0xff]
        %v2013 = vld [vmem:[%s200 + $0x3748] sm:$0xff]
        %v2014 = vld [vmem:[%s200 + $0x3750] sm:$0xff]
        %v2015 = vld [vmem:[%s200 + $0x3758] sm:$0xff]
        %v2016 = vld [vmem:[%s200 + $0x3760] sm:$0xff]
        %v2017 = vld [vmem:[%s200 + $0x3768] sm:$0xff]
        %v2018 = vld [vmem:[%s200 + $0x3770] sm:$0xff]
        %v2019 = vld [vmem:[%s200 + $0x3778] sm:$0xff]
        %v2020 = vld [vmem:[%s200 + $0x3780] sm:$0xff]
        %v2021 = vld [vmem:[%s200 + $0x3788] sm:$0xff]
        %v2022 = vld [vmem:[%s200 + $0x3790] sm:$0xff]
        %v2023 = vld [vmem:[%s200 + $0x3798] sm:$0xff]
        %v2024 = vld [vmem:[%s200 + $0x37a0] sm:$0xff]
        %v2025 = vld [vmem:[%s200 + $0x37a8] sm:$0xff]
        %v2026 = vld [vmem:[%s200 + $0x37b0] sm:$0xff]
        %v2027 = vld [vmem:[%s200 + $0x37b8] sm:$0xff]
        %v2028 = vld [vmem:[%s200 + $0x37c0] sm:$0xff]
        %v2029 = vld [vmem:[%s200 + $0x37c8] sm:$0xff]
        %v2030 = vld [vmem:[%s200 + $0x37d0] sm:$0xff]
        %v2031 = vld [vmem:[%s200 + $0x37d8] sm:$0xff]
        %v2032 = vld [vmem:[%s200 + $0x37e0] sm:$0xff]
        %v2033 = vld [vmem:[%s200 + $0x37e8] sm:$0xff]
        %v2034 = vld [vmem:[%s200 + $0x37f0] sm:$0xff]
        %v2035 = vld [vmem:[%s200 + $0x37f8] sm:$0xff]
        %v2036 = vld [vmem:[%s200 + $0x3800] sm:$0xff]
        %v2037 = vld [vmem:[%s200 + $0x3808] sm:$0xff]
        %v2038 = vld [vmem:[%s200 + $0x3810] sm:$0xff]
        %v2039 = vld [vmem:[%s200 + $0x3818] sm:$0xff]
        %v2040 = vld [vmem:[%s200 + $0x3820] sm:$0xff]
        %v2041 = vld [vmem:[%s200 + $0x3828] sm:$0xff]
        %v2042 = vld [vmem:[%s200 + $0x3830] sm:$0xff]
        %v2043 = vld [vmem:[%s200 + $0x3838] sm:$0xff]
        %v2044 = vld [vmem:[%s200 + $0x3840] sm:$0xff]
        %v2045 = vld [vmem:[%s200 + $0x3848] sm:$0xff]
        %v2046 = vld [vmem:[%s200 + $0x3850] sm:$0xff]
        %v2047 = vld [vmem:[%s200 + $0x3858] sm:$0xff]
        %v2048 = vld [vmem:[%s200 + $0x3860] sm:$0xff]
        %v2049 = vld [vmem:[%s200 + $0x3868] sm:$0xff]
        %v2050 = vld [vmem:[%s200 + $0x3870] sm:$0xff]
        %v2051 = vld [vmem:[%s200 + $0x3878] sm:$0xff]
        %v2052 = vld [vmem:[%s200 + $0x3880] sm:$0xff]
        %v2053 = vld [vmem:[%s200 + $0x3888] sm:$0xff]
        %v2054 = vld [vmem:[%s200 + $0x3890] sm:$0xff]
        %v2055 = vld [vmem:[%s200 + $0x3898] sm:$0xff]
        %v2056 = vld [vmem:[%s200 + $0x38a0] sm:$0xff]
        %v2057 = vld [vmem:[%s200 + $0x38a8] sm:$0xff]
        %v2058 = vld [vmem:[%s200 + $0x38b0] sm:$0xff]
        %v2059 = vld [vmem:[%s200 + $0x38b8] sm:$0xff]
        %v2060 = vld [vmem:[%s200 + $0x38c0] sm:$0xff]
        %v2061 = vld [vmem:[%s200 + $0x38c8] sm:$0xff]
        %v2062 = vld [vmem:[%s200 + $0x38d0] sm:$0xff]
        %v2063 = vld [vmem:[%s200 + $0x38d8] sm:$0xff]
        %v2064 = vld [vmem:[%s200 + $0x38e0] sm:$0xff]
        %v2065 = vld [vmem:[%s200 + $0x38e8] sm:$0xff]
        %v2066 = vld [vmem:[%s200 + $0x38f0] sm:$0xff]
        %v2067 = vld [vmem:[%s200 + $0x38f8] sm:$0xff]
        %v2068 = vld [vmem:[%s200 + $0x3900] sm:$0xff]
        %v2069 = vld [vmem:[%s200 + $0x3908] sm:$0xff]
        %v2070 = vld [vmem:[%s200 + $0x3910] sm:$0xff]
        %v2071 = vld [vmem:[%s200 + $0x3918] sm:$0xff]
        %v2072 = vld [vmem:[%s200 + $0x3920] sm:$0xff]
        %v2073 = vld [vmem:[%s200 + $0x3928] sm:$0xff]
        %v2074 = vld [vmem:[%s200 + $0x3930] sm:$0xff]
        %v2075 = vld [vmem:[%s200 + $0x3938] sm:$0xff]
        %v2076 = vld [vmem:[%s200 + $0x3940] sm:$0xff]
        %v2077 = vld [vmem:[%s200 + $0x3948] sm:$0xff]
        %v2078 = vld [vmem:[%s200 + $0x3950] sm:$0xff]
        %v2079 = vld [vmem:[%s200 + $0x3958] sm:$0xff]
        %v2080 = vld [vmem:[%s200 + $0x3960] sm:$0xff]
        %v2081 = vld [vmem:[%s200 + $0x3968] sm:$0xff]
        %v2082 = vld [vmem:[%s200 + $0x3970] sm:$0xff]
        %v2083 = vld [vmem:[%s200 + $0x3978] sm:$0xff]
        %v2084 = vld [vmem:[%s200 + $0x3980] sm:$0xff]
        %v2085 = vld [vmem:[%s200 + $0x3988] sm:$0xff]
        %v2086 = vld [vmem:[%s200 + $0x3990] sm:$0xff]
        %v2087 = vld [vmem:[%s200 + $0x3998] sm:$0xff]
        %v2088 = vld [vmem:[%s200 + $0x39a0] sm:$0xff]
        %v2089 = vld [vmem:[%s200 + $0x39a8] sm:$0xff]
        %v2090 = vld [vmem:[%s200 + $0x39b0] sm:$0xff]
        %v2091 = vld [vmem:[%s200 + $0x39b8] sm:$0xff]
        %v2092 = vld [vmem:[%s200 + $0x39c0] sm:$0xff]
        %v2093 = vld [vmem:[%s200 + $0x39c8] sm:$0xff]
        %v2094 = vld [vmem:[%s200 + $0x39d0] sm:$0xff]
        %v2095 = vld [vmem:[%s200 + $0x39d8] sm:$0xff]
        %v2096 = vld [vmem:[%s200 + $0x39e0] sm:$0xff]
        %v2097 = vld [vmem:[%s200 + $0x39e8] sm:$0xff]
        %v2098 = vld [vmem:[%s200 + $0x39f0] sm:$0xff]
        %v2099 = vld [vmem:[%s200 + $0x39f8] sm:$0xff]
        %v2100 = vld [vmem:[%s200 + $0x3a00] sm:$0xff]
        %v2101 = vld [vmem:[%s200 + $0x3a08] sm:$0xff]
        %v2102 = vld [vmem:[%s200 + $0x3a10] sm:$0xff]
        %v2103 = vld [vmem:[%s200 + $0x3a18] sm:$0xff]
        %v2104 = vld [vmem:[%s200 + $0x3a20] sm:$0xff]
        %v2105 = vld [vmem:[%s200 + $0x3a28] sm:$0xff]
        %v2106 = vld [vmem:[%s200 + $0x3a30] sm:$0xff]
        %v2107 = vld [vmem:[%s200 + $0x3a38] sm:$0xff]
        %v2108 = vld [vmem:[%s200 + $0x3a40] sm:$0xff]
        %v2109 = vld [vmem:[%s200 + $0x3a48] sm:$0xff]
        %v2110 = vld [vmem:[%s200 + $0x3a50] sm:$0xff]
        %v2111 = vld [vmem:[%s200 + $0x3a58] sm:$0xff]
        %v2112 = vld [vmem:[%s200 + $0x3a60] sm:$0xff]
        %v2113 = vld [vmem:[%s200 + $0x3a68] sm:$0xff]
        %v2114 = vld [vmem:[%s200 + $0x3a70] sm:$0xff]
        %v2115 = vld [vmem:[%s200 + $0x3a78] sm:$0xff]
        %v2116 = vld [vmem:[%s200 + $0x3a80] sm:$0xff]
        %v2117 = vld [vmem:[%s200 + $0x3a88] sm:$0xff]
        %v2118 = vld [vmem:[%s200 + $0x3a90] sm:$0xff]
        %v2119 = vld [vmem:[%s200 + $0x3a98] sm:$0xff]
        %v2120 = vld [vmem:[%s200 + $0x3aa0] sm:$0xff]
        %v2121 = vld [vmem:[%s200 + $0x3aa8] sm:$0xff]
        %v2122 = vld [vmem:[%s200 + $0x3ab0] sm:$0xff]
        %v2123 = vld [vmem:[%s200 + $0x3ab8] sm:$0xff]
        %v2124 = vld [vmem:[%s200 + $0x3ac0] sm:$0xff]
        %v2125 = vld [vmem:[%s200 + $0x3ac8] sm:$0xff]
        %v2126 = vld [vmem:[%s200 + $0x3ad0] sm:$0xff]
        %v2127 = vld [vmem:[%s200 + $0x3ad8] sm:$0xff]
        %v2128 = vld [vmem:[%s200 + $0x3ae0] sm:$0xff]
        %v2129 = vld [vmem:[%s200 + $0x3ae8] sm:$0xff]
        %v2130 = vld [vmem:[%s200 + $0x3af0] sm:$0xff]
        %v2131 = vld [vmem:[%s200 + $0x3af8] sm:$0xff]
        %v2132 = vld [vmem:[%s200 + $0x3b00] sm:$0xff]
        %v2133 = vld [vmem:[%s200 + $0x3b08] sm:$0xff]
        %v2134 = vld [vmem:[%s200 + $0x3b10] sm:$0xff]
        %v2135 = vld [vmem:[%s200 + $0x3b18] sm:$0xff]
        %v2136 = vld [vmem:[%s200 + $0x3b20] sm:$0xff]
        %v2137 = vld [vmem:[%s200 + $0x3b28] sm:$0xff]
        %v2138 = vld [vmem:[%s200 + $0x3b30] sm:$0xff]
        %v2139 = vld [vmem:[%s200 + $0x3b38] sm:$0xff]
        %v2140 = vld [vmem:[%s200 + $0x3b40] sm:$0xff]
        %v2141 = vld [vmem:[%s200 + $0x3b48] sm:$0xff]
        %v2142 = vld [vmem:[%s200 + $0x3b50] sm:$0xff]
        %v2143 = vld [vmem:[%s200 + $0x3b58] sm:$0xff]
        %v2144 = vld [vmem:[%s200 + $0x3b60] sm:$0xff]
        %v2145 = vld [vmem:[%s200 + $0x3b68] sm:$0xff]
        %v2146 = vld [vmem:[%s200 + $0x3b70] sm:$0xff]
        %v2147 = vld [vmem:[%s200 + $0x3b78] sm:$0xff]
        %v2148 = vld [vmem:[%s200 + $0x3b80] sm:$0xff]
        %v2149 = vld [vmem:[%s200 + $0x3b88] sm:$0xff]
        %v2150 = vld [vmem:[%s200 + $0x3b90] sm:$0xff]
        %v2151 = vld [vmem:[%s200 + $0x3b98] sm:$0xff]
        %v2152 = vld [vmem:[%s200 + $0x3ba0] sm:$0xff]
        %v2153 = vld [vmem:[%s200 + $0x3ba8] sm:$0xff]
        %v2154 = vld [vmem:[%s200 + $0x3bb0] sm:$0xff]
        %v2155 = vld [vmem:[%s200 + $0x3bb8] sm:$0xff]
        %v2156 = vld [vmem:[%s200 + $0x3bc0] sm:$0xff]
        %v2157 = vld [vmem:[%s200 + $0x3bc8] sm:$0xff]
        %v2158 = vld [vmem:[%s200 + $0x3bd0] sm:$0xff]
        %v2159 = vld [vmem:[%s200 + $0x3bd8] sm:$0xff]
        %v2160 = vld [vmem:[%s200 + $0x3be0] sm:$0xff]
        %v2161 = vld [vmem:[%s200 + $0x3be8] sm:$0xff]
        %v2162 = vld [vmem:[%s200 + $0x3bf0] sm:$0xff]
        %v2163 = vld [vmem:[%s200 + $0x3bf8] sm:$0xff]
        %v2164 = vld [vmem:[%s200 + $0x3c00] sm:$0xff]
        %v2165 = vld [vmem:[%s200 + $0x3c08] sm:$0xff]
        %v2166 = vld [vmem:[%s200 + $0x3c10] sm:$0xff]
        %v2167 = vld [vmem:[%s200 + $0x3c18] sm:$0xff]
        %v2168 = vld [vmem:[%s200 + $0x3c20] sm:$0xff]
        %v2169 = vld [vmem:[%s200 + $0x3c28] sm:$0xff]
        %v2170 = vld [vmem:[%s200 + $0x3c30] sm:$0xff]
        %v2171 = vld [vmem:[%s200 + $0x3c38] sm:$0xff]
        %v2172 = vld [vmem:[%s200 + $0x3c40] sm:$0xff]
        %v2173 = vld [vmem:[%s200 + $0x3c48] sm:$0xff]
        %v2174 = vld [vmem:[%s200 + $0x3c50] sm:$0xff]
        %v2175 = vld [vmem:[%s200 + $0x3c58] sm:$0xff]
        %v2176 = vld [vmem:[%s200 + $0x3c60] sm:$0xff]
        %v2177 = vld [vmem:[%s200 + $0x3c68] sm:$0xff]
        %v2178 = vld [vmem:[%s200 + $0x3c70] sm:$0xff]
        %v2179 = vld [vmem:[%s200 + $0x3c78] sm:$0xff]
        %v2180 = vld [vmem:[%s200 + $0x3c80] sm:$0xff]
        %v2181 = vld [vmem:[%s200 + $0x3c88] sm:$0xff]
        %v2182 = vld [vmem:[%s200 + $0x3c90] sm:$0xff]
        %v2183 = vld [vmem:[%s200 + $0x3c98] sm:$0xff]
        %v2184 = vld [vmem:[%s200 + $0x3ca0] sm:$0xff]
        %v2185 = vld [vmem:[%s200 + $0x3ca8] sm:$0xff]
        %v2186 = vld [vmem:[%s200 + $0x3cb0] sm:$0xff]
        %v2187 = vld [vmem:[%s200 + $0x3cb8] sm:$0xff]
        %v2188 = vld [vmem:[%s200 + $0x3cc0] sm:$0xff]
        %v2189 = vld [vmem:[%s200 + $0x3cc8] sm:$0xff]
        %v2190 = vld [vmem:[%s200 + $0x3cd0] sm:$0xff]
        %v2191 = vld [vmem:[%s200 + $0x3cd8] sm:$0xff]
        %v2192 = vld [vmem:[%s200 + $0x3ce0] sm:$0xff]
        %v2193 = vld [vmem:[%s200 + $0x3ce8] sm:$0xff]
        %v2194 = vld [vmem:[%s200 + $0x3cf0] sm:$0xff]
        %v2195 = vld [vmem:[%s200 + $0x3cf8] sm:$0xff]
        %v2196 = vld [vmem:[%s200 + $0x3d00] sm:$0xff]
        %v2197 = vld [vmem:[%s200 + $0x3d08] sm:$0xff]
        %v2198 = vld [vmem:[%s200 + $0x3d10] sm:$0xff]
        %v2199 = vld [vmem:[%s200 + $0x3d18] sm:$0xff]
        %v2200 = vld [vmem:[%s200 + $0x3d20] sm:$0xff]
        %v2201 = vld [vmem:[%s200 + $0x3d28] sm:$0xff]
        %v2202 = vld [vmem:[%s200 + $0x3d30] sm:$0xff]
        %v2203 = vld [vmem:[%s200 + $0x3d38] sm:$0xff]
        %v2204 = vld [vmem:[%s200 + $0x3d40] sm:$0xff]
        %v2205 = vld [vmem:[%s200 + $0x3d48] sm:$0xff]
        %v2206 = vld [vmem:[%s200 + $0x3d50] sm:$0xff]
        %v2207 = vld [vmem:[%s200 + $0x3d58] sm:$0xff]
        %v2208 = vld [vmem:[%s200 + $0x3d60] sm:$0xff]
        %v2209 = vld [vmem:[%s200 + $0x3d68] sm:$0xff]
        %v2210 = vld [vmem:[%s200 + $0x3d70] sm:$0xff]
        %v2211 = vld [vmem:[%s200 + $0x3d78] sm:$0xff]
        %v2212 = vld [vmem:[%s200 + $0x3d80] sm:$0xff]
        %v2213 = vld [vmem:[%s200 + $0x3d88] sm:$0xff]
        %v2214 = vld [vmem:[%s200 + $0x3d90] sm:$0xff]
        %v2215 = vld [vmem:[%s200 + $0x3d98] sm:$0xff]
        %v2216 = vld [vmem:[%s200 + $0x3da0] sm:$0xff]
        %v2217 = vld [vmem:[%s200 + $0x3da8] sm:$0xff]
        %v2218 = vld [vmem:[%s200 + $0x3db0] sm:$0xff]
        %v2219 = vld [vmem:[%s200 + $0x3db8] sm:$0xff]
        %v2220 = vld [vmem:[%s200 + $0x3dc0] sm:$0xff]
        %v2221 = vld [vmem:[%s200 + $0x3dc8] sm:$0xff]
        %v2222 = vld [vmem:[%s200 + $0x3dd0] sm:$0xff]
        %v2223 = vld [vmem:[%s200 + $0x3dd8] sm:$0xff]
        %v2224 = vld [vmem:[%s200 + $0x3de0] sm:$0xff]
        %v2225 = vld [vmem:[%s200 + $0x3de8] sm:$0xff]
        %v2226 = vld [vmem:[%s200 + $0x3df0] sm:$0xff]
        %v2227 = vld [vmem:[%s200 + $0x3df8] sm:$0xff]
        %v2228 = vld [vmem:[%s200 + $0x3e00] sm:$0xff]
        %v2229 = vld [vmem:[%s200 + $0x3e08] sm:$0xff]
        %v2230 = vld [vmem:[%s200 + $0x3e10] sm:$0xff]
        %v2231 = vld [vmem:[%s200 + $0x3e18] sm:$0xff]
        %v2232 = vld [vmem:[%s200 + $0x3e20] sm:$0xff]
        %v2233 = vld [vmem:[%s200 + $0x3e28] sm:$0xff]
        %v2234 = vld [vmem:[%s200 + $0x3e30] sm:$0xff]
        %v2235 = vld [vmem:[%s200 + $0x3e38] sm:$0xff]
        %v2236 = vld [vmem:[%s200 + $0x3e40] sm:$0xff]
        %v2237 = vld [vmem:[%s200 + $0x3e48] sm:$0xff]
        %v2238 = vld [vmem:[%s200 + $0x3e50] sm:$0xff]
        %v2239 = vld [vmem:[%s200 + $0x3e58] sm:$0xff]
        %v2240 = vld [vmem:[%s200 + $0x3e60] sm:$0xff]
        %v2241 = vld [vmem:[%s200 + $0x3e68] sm:$0xff]
        %v2242 = vld [vmem:[%s200 + $0x3e70] sm:$0xff]
        %v2243 = vld [vmem:[%s200 + $0x3e78] sm:$0xff]
        %v2244 = vld [vmem:[%s200 + $0x3e80] sm:$0xff]
        %v2245 = vld [vmem:[%s200 + $0x3e88] sm:$0xff]
        %v2246 = vld [vmem:[%s200 + $0x3e90] sm:$0xff]
        %v2247 = vld [vmem:[%s200 + $0x3e98] sm:$0xff]
        %v2248 = vld [vmem:[%s200 + $0x3ea0] sm:$0xff]
        %v2249 = vld [vmem:[%s200 + $0x3ea8] sm:$0xff]
        %v2250 = vld [vmem:[%s200 + $0x3eb0] sm:$0xff]
        %v2251 = vld [vmem:[%s200 + $0x3eb8] sm:$0xff]
        %v2252 = vld [vmem:[%s200 + $0x3ec0] sm:$0xff]
        %v2253 = vld [vmem:[%s200 + $0x3ec8] sm:$0xff]
        %v2254 = vld [vmem:[%s200 + $0x3ed0] sm:$0xff]
        %v2255 = vld [vmem:[%s200 + $0x3ed8] sm:$0xff]
        %v2256 = vld [vmem:[%s200 + $0x3ee0] sm:$0xff]
        %v2257 = vld [vmem:[%s200 + $0x3ee8] sm:$0xff]
        %v2258 = vld [vmem:[%s200 + $0x3ef0] sm:$0xff]
        %v2259 = vld [vmem:[%s200 + $0x3ef8] sm:$0xff]
        %v2260 = vld [vmem:[%s200 + $0x3f00] sm:$0xff]
        %v2261 = vld [vmem:[%s200 + $0x3f08] sm:$0xff]
        %v2262 = vld [vmem:[%s200 + $0x3f10] sm:$0xff]
        %v2263 = vld [vmem:[%s200 + $0x3f18] sm:$0xff]
        %v2264 = vld [vmem:[%s200 + $0x3f20] sm:$0xff]
        %v2265 = vld [vmem:[%s200 + $0x3f28] sm:$0xff]
        %v2266 = vld [vmem:[%s200 + $0x3f30] sm:$0xff]
        %v2267 = vld [vmem:[%s200 + $0x3f38] sm:$0xff]
        %v2268 = vld [vmem:[%s200 + $0x3f40] sm:$0xff]
        %v2269 = vld [vmem:[%s200 + $0x3f48] sm:$0xff]
        %v2270 = vld [vmem:[%s200 + $0x3f50] sm:$0xff]
        %v2271 = vld [vmem:[%s200 + $0x3f58] sm:$0xff]
        %v2272 = vld [vmem:[%s200 + $0x3f60] sm:$0xff]
        %v2273 = vld [vmem:[%s200 + $0x3f68] sm:$0xff]
        %v2274 = vld [vmem:[%s200 + $0x3f70] sm:$0xff]
        %v2275 = vld [vmem:[%s200 + $0x3f78] sm:$0xff]
        %v2276 = vld [vmem:[%s200 + $0x3f80] sm:$0xff]
        %v2277 = vld [vmem:[%s200 + $0x3f88] sm:$0xff]
        %v2278 = vld [vmem:[%s200 + $0x3f90] sm:$0xff]
        %v2279 = vld [vmem:[%s200 + $0x3f98] sm:$0xff]
        %v2280 = vld [vmem:[%s200 + $0x3fa0] sm:$0xff]
        %v2281 = vld [vmem:[%s200 + $0x3fa8] sm:$0xff]
        %v2282 = vld [vmem:[%s200 + $0x3fb0] sm:$0xff]
        %v2283 = vld [vmem:[%s200 + $0x3fb8] sm:$0xff]
        %v2284 = vld [vmem:[%s200 + $0x3fc0] sm:$0xff]
        %v2285 = vld [vmem:[%s200 + $0x3fc8] sm:$0xff]
        %v2286 = vld [vmem:[%s200 + $0x3fd0] sm:$0xff]
        %v2287 = vld [vmem:[%s200 + $0x3fd8] sm:$0xff]
        %v2288 = vld [vmem:[%s200 + $0x3fe0] sm:$0xff]
        %v2289 = vld [vmem:[%s200 + $0x3fe8] sm:$0xff]
        %v2290 = vld [vmem:[%s200 + $0x3ff0] sm:$0xff]
        %v2291 = vld [vmem:[%s200 + $0x3ff8] sm:$0xff]
        %v2292 = vld [vmem:[%s209] sm:$0xf]
        %v2297 = vlaneseq
        %v2298 = vshrl.u32 %v2297, 7
        %v2299 = vsub.s32 0, %v2298
        %v2300 = vrot.slane %v240, %v2299
        %v2301 = vlaneseq
        %v2302 = vshrl.u32 %v2301, 7
        %v2303 = vsub.s32 1, %v2302
        %v2304 = vrot.slane %v240, %v2303
        %v2305 = vlaneseq
        %v2306 = vshrl.u32 %v2305, 7
        %v2307 = vsub.s32 2, %v2306
        %v2308 = vrot.slane %v240, %v2307
        %v2309 = vlaneseq
        %v2310 = vshrl.u32 %v2309, 7
        %v2311 = vsub.s32 3, %v2310
        %v2312 = vrot.slane %v240, %v2311
        %v2313 = vlaneseq
        %v2314 = vshrl.u32 %v2313, 7
        %v2315 = vsub.s32 4, %v2314
        %v2316 = vrot.slane %v240, %v2315
        %v2317 = vlaneseq
        %v2318 = vshrl.u32 %v2317, 7
        %v2319 = vsub.s32 5, %v2318
        %v2320 = vrot.slane %v240, %v2319
        %v2321 = vlaneseq
        %v2322 = vshrl.u32 %v2321, 7
        %v2323 = vsub.s32 6, %v2322
        %v2324 = vrot.slane %v240, %v2323
        %v2325 = vlaneseq
        %v2326 = vshrl.u32 %v2325, 7
        %v2327 = vsub.s32 7, %v2326
        %v2328 = vrot.slane %v240, %v2327
        %v2329 = vlaneseq
        %v2330 = vshrl.u32 %v2329, 7
        %v2331 = vsub.s32 0, %v2330
        %v2332 = vrot.slane %v241, %v2331
        %v2333 = vlaneseq
        %v2334 = vshrl.u32 %v2333, 7
        %v2335 = vsub.s32 1, %v2334
        %v2336 = vrot.slane %v241, %v2335
        %v2337 = vlaneseq
        %v2338 = vshrl.u32 %v2337, 7
        %v2339 = vsub.s32 2, %v2338
        %v2340 = vrot.slane %v241, %v2339
        %v2341 = vlaneseq
        %v2342 = vshrl.u32 %v2341, 7
        %v2343 = vsub.s32 3, %v2342
        %v2344 = vrot.slane %v241, %v2343
        %v2345 = vlaneseq
        %v2346 = vshrl.u32 %v2345, 7
        %v2347 = vsub.s32 4, %v2346
        %v2348 = vrot.slane %v241, %v2347
        %v2349 = vlaneseq
        %v2350 = vshrl.u32 %v2349, 7
        %v2351 = vsub.s32 5, %v2350
        %v2352 = vrot.slane %v241, %v2351
        %v2353 = vlaneseq
        %v2354 = vshrl.u32 %v2353, 7
        %v2355 = vsub.s32 6, %v2354
        %v2356 = vrot.slane %v241, %v2355
        %v2357 = vlaneseq
        %v2358 = vshrl.u32 %v2357, 7
        %v2359 = vsub.s32 7, %v2358
        %v2360 = vrot.slane %v241, %v2359
        %v2361 = vlaneseq
        %v2362 = vshrl.u32 %v2361, 7
        %v2363 = vsub.s32 0, %v2362
        %v2364 = vrot.slane %v242, %v2363
        %v2365 = vlaneseq
        %v2366 = vshrl.u32 %v2365, 7
        %v2367 = vsub.s32 1, %v2366
        %v2368 = vrot.slane %v242, %v2367
        %v2369 = vlaneseq
        %v2370 = vshrl.u32 %v2369, 7
        %v2371 = vsub.s32 2, %v2370
        %v2372 = vrot.slane %v242, %v2371
        %v2373 = vlaneseq
        %v2374 = vshrl.u32 %v2373, 7
        %v2375 = vsub.s32 3, %v2374
        %v2376 = vrot.slane %v242, %v2375
        %v2377 = vlaneseq
        %v2378 = vshrl.u32 %v2377, 7
        %v2379 = vsub.s32 4, %v2378
        %v2380 = vrot.slane %v242, %v2379
        %v2381 = vlaneseq
        %v2382 = vshrl.u32 %v2381, 7
        %v2383 = vsub.s32 5, %v2382
        %v2384 = vrot.slane %v242, %v2383
        %v2385 = vlaneseq
        %v2386 = vshrl.u32 %v2385, 7
        %v2387 = vsub.s32 6, %v2386
        %v2388 = vrot.slane %v242, %v2387
        %v2389 = vlaneseq
        %v2390 = vshrl.u32 %v2389, 7
        %v2391 = vsub.s32 7, %v2390
        %v2392 = vrot.slane %v242, %v2391
        %v2393 = vlaneseq
        %v2394 = vshrl.u32 %v2393, 7
        %v2395 = vsub.s32 0, %v2394
        %v2396 = vrot.slane %v243, %v2395
        %v2397 = vlaneseq
        %v2398 = vshrl.u32 %v2397, 7
        %v2399 = vsub.s32 1, %v2398
        %v2400 = vrot.slane %v243, %v2399
        %v2401 = vlaneseq
        %v2402 = vshrl.u32 %v2401, 7
        %v2403 = vsub.s32 2, %v2402
        %v2404 = vrot.slane %v243, %v2403
        %v2405 = vlaneseq
        %v2406 = vshrl.u32 %v2405, 7
        %v2407 = vsub.s32 3, %v2406
        %v2408 = vrot.slane %v243, %v2407
        %v2409 = vlaneseq
        %v2410 = vshrl.u32 %v2409, 7
        %v2411 = vsub.s32 4, %v2410
        %v2412 = vrot.slane %v243, %v2411
        %v2413 = vlaneseq
        %v2414 = vshrl.u32 %v2413, 7
        %v2415 = vsub.s32 5, %v2414
        %v2416 = vrot.slane %v243, %v2415
        %v2417 = vlaneseq
        %v2418 = vshrl.u32 %v2417, 7
        %v2419 = vsub.s32 6, %v2418
        %v2420 = vrot.slane %v243, %v2419
        %v2421 = vlaneseq
        %v2422 = vshrl.u32 %v2421, 7
        %v2423 = vsub.s32 7, %v2422
        %v2424 = vrot.slane %v243, %v2423
        %v2458 = vlaneseq
        %v2459 = vshrl.u32 %v2458, 7
        %v2460 = vsub.s32 0, %v2459
        %v2461 = vrot.slane %v2292, %v2460
        %v2462 = vlaneseq
        %v2463 = vshrl.u32 %v2462, 7
        %v2464 = vsub.s32 1, %v2463
        %v2465 = vrot.slane %v2292, %v2464
        %v2466 = vlaneseq
        %v2467 = vshrl.u32 %v2466, 7
        %v2468 = vsub.s32 2, %v2467
        %v2469 = vrot.slane %v2292, %v2468
        %v2470 = vlaneseq
        %v2471 = vshrl.u32 %v2470, 7
        %v2472 = vsub.s32 3, %v2471
        %v2473 = vrot.slane %v2292, %v2472
        %2478 = vmatprep.subr.mxu0 %v305
        %2479 = vmatpush1.msra.mxu0 %v304
        %2480 = vmatprep.subr.mxu0 %v301
        %2481 = vmatpush1.msra.mxu0 %v300
        %2482 = vmatprep.subr.mxu0 %v297
        %2483 = vmatpush1.msra.mxu0 %v296
        %2484 = vmatprep.subr.mxu0 %v293
        %2485 = vmatpush1.msra.mxu0 %v292
        %2486 = vmatprep.subr.mxu0 %v289
        %2487 = vmatpush1.msra.mxu0 %v288
        %2488 = vmatprep.subr.mxu0 %v285
        %2489 = vmatpush1.msra.mxu0 %v284
        %2490 = vmatprep.subr.mxu0 %v281
        %2491 = vmatpush1.msra.mxu0 %v280
        %2492 = vmatprep.subr.mxu0 %v277
        %2493 = vmatpush1.msra.mxu0 %v276
        %2494 = vmatprep.subr.mxu0 %v273
        %2495 = vmatpush1.msra.mxu0 %v272
        %2496 = vmatprep.subr.mxu0 %v269
        %2497 = vmatpush1.msra.mxu0 %v268
        %2498 = vmatprep.subr.mxu0 %v265
        %2499 = vmatpush1.msra.mxu0 %v264
        %2500 = vmatprep.subr.mxu0 %v261
        %2501 = vmatpush1.msra.mxu0 %v260
        %2502 = vmatprep.subr.mxu0 %v257
        %2503 = vmatpush1.msra.mxu0 %v256
        %2504 = vmatprep.subr.mxu0 %v253
        %2505 = vmatpush1.msra.mxu0 %v252
        %2506 = vmatprep.subr.mxu0 %v249
        %2507 = vmatpush1.msra.mxu0 %v248
        %2508 = vmatprep.subr.mxu0 %v245
        %2509 = vmatpush1.msra.mxu0 %v244
        %2510 = vmatprep.subr.mxu0 %v369
        %2511 = vmatpush2.msra.mxu0 %v368
        %2512 = vmatprep.subr.mxu0 %v365
        %2513 = vmatpush2.msra.mxu0 %v364
        %2514 = vmatprep.subr.mxu0 %v361
        %2515 = vmatpush2.msra.mxu0 %v360
        %2516 = vmatprep.subr.mxu0 %v357
        %2517 = vmatpush2.msra.mxu0 %v356
        %2518 = vmatprep.subr.mxu0 %v353
        %2519 = vmatpush2.msra.mxu0 %v352
        %2520 = vmatprep.subr.mxu0 %v349
        %2521 = vmatpush2.msra.mxu0 %v348
        %2522 = vmatprep.subr.mxu0 %v345
        %2523 = vmatpush2.msra.mxu0 %v344
        %2524 = vmatprep.subr.mxu0 %v341
        %2525 = vmatpush2.msra.mxu0 %v340
        %2526 = vmatprep.subr.mxu0 %v337
        %2527 = vmatpush2.msra.mxu0 %v336
        %2528 = vmatprep.subr.mxu0 %v333
        %2529 = vmatpush2.msra.mxu0 %v332
        %2530 = vmatprep.subr.mxu0 %v329
        %2531 = vmatpush2.msra.mxu0 %v328
        %2532 = vmatprep.subr.mxu0 %v325
        %2533 = vmatpush2.msra.mxu0 %v324
        %2534 = vmatprep.subr.mxu0 %v321
        %2535 = vmatpush2.msra.mxu0 %v320
        %2536 = vmatprep.subr.mxu0 %v317
        %2537 = vmatpush2.msra.mxu0 %v316
        %2538 = vmatprep.subr.mxu0 %v313
        %2539 = vmatpush2.msra.mxu0 %v312
        %2540 = vmatprep.subr.mxu0 %v309
        %2541 = vmatpush2.msra.mxu0 %v308
        %2542 = vmatprep.mubr.f32.mxu0 %v2304
        %2543 = vmatmul.mubr.f32.gmra.mxu0 %v2300
        %v2544 = vpop.f32.mrf.mxu0
        %v2545 = vadd.f32 %v2461, %v2544
        %v2546 = vpop.f32.mrf.mxu0
        %v2547 = vadd.f32 %v2465, %v2546
        %2548 = vdwg.mxu0
        %2549 = vmatprep.subr.mxu0 %v433
        %2550 = vmatpush1.msra.mxu0 %v432
        %2551 = vmatprep.subr.mxu0 %v429
        %2552 = vmatpush1.msra.mxu0 %v428
        %2553 = vmatprep.subr.mxu0 %v425
        %2554 = vmatpush1.msra.mxu0 %v424
        %2555 = vmatprep.subr.mxu0 %v421
        %2556 = vmatpush1.msra.mxu0 %v420
        %2557 = vmatprep.subr.mxu0 %v417
        %2558 = vmatpush1.msra.mxu0 %v416
        %2559 = vmatprep.subr.mxu0 %v413
        %2560 = vmatpush1.msra.mxu0 %v412
        %2561 = vmatprep.subr.mxu0 %v409
        %2562 = vmatpush1.msra.mxu0 %v408
        %2563 = vmatprep.subr.mxu0 %v405
        %2564 = vmatpush1.msra.mxu0 %v404
        %2565 = vmatprep.subr.mxu0 %v401
        %2566 = vmatpush1.msra.mxu0 %v400
        %2567 = vmatprep.subr.mxu0 %v397
        %2568 = vmatpush1.msra.mxu0 %v396
        %2569 = vmatprep.subr.mxu0 %v393
        %2570 = vmatpush1.msra.mxu0 %v392
        %2571 = vmatprep.subr.mxu0 %v389
        %2572 = vmatpush1.msra.mxu0 %v388
        %2573 = vmatprep.subr.mxu0 %v385
        %2574 = vmatpush1.msra.mxu0 %v384
        %2575 = vmatprep.subr.mxu0 %v381
        %2576 = vmatpush1.msra.mxu0 %v380
        %2577 = vmatprep.subr.mxu0 %v377
        %2578 = vmatpush1.msra.mxu0 %v376
        %2579 = vmatprep.subr.mxu0 %v373
        %2580 = vmatpush1.msra.mxu0 %v372
        %2581 = vmatprep.subr.mxu0 %v497
        %2582 = vmatpush2.msra.mxu0 %v496
        %2583 = vmatprep.subr.mxu0 %v493
        %2584 = vmatpush2.msra.mxu0 %v492
        %2585 = vmatprep.subr.mxu0 %v489
        %2586 = vmatpush2.msra.mxu0 %v488
        %2587 = vmatprep.subr.mxu0 %v485
        %2588 = vmatpush2.msra.mxu0 %v484
        %2589 = vmatprep.subr.mxu0 %v481
        %2590 = vmatpush2.msra.mxu0 %v480
        %2591 = vmatprep.subr.mxu0 %v477
        %2592 = vmatpush2.msra.mxu0 %v476
        %2593 = vmatprep.subr.mxu0 %v473
        %2594 = vmatpush2.msra.mxu0 %v472
        %2595 = vmatprep.subr.mxu0 %v469
        %2596 = vmatpush2.msra.mxu0 %v468
        %2597 = vmatprep.subr.mxu0 %v465
        %2598 = vmatpush2.msra.mxu0 %v464
        %2599 = vmatprep.subr.mxu0 %v461
        %2600 = vmatpush2.msra.mxu0 %v460
        %2601 = vmatprep.subr.mxu0 %v457
        %2602 = vmatpush2.msra.mxu0 %v456
        %2603 = vmatprep.subr.mxu0 %v453
        %2604 = vmatpush2.msra.mxu0 %v452
        %2605 = vmatprep.subr.mxu0 %v449
        %2606 = vmatpush2.msra.mxu0 %v448
        %2607 = vmatprep.subr.mxu0 %v445
        %2608 = vmatpush2.msra.mxu0 %v444
        %2609 = vmatprep.subr.mxu0 %v441
        %2610 = vmatpush2.msra.mxu0 %v440
        %2611 = vmatprep.subr.mxu0 %v437
        %2612 = vmatpush2.msra.mxu0 %v436
        %2613 = vmatprep.mubr.f32.mxu0 %v2312
        %2614 = vmatmul.mubr.f32.gmra.mxu0 %v2308
        %v2615 = vpop.f32.mrf.mxu0
        %v2616 = vadd.f32 %v2545, %v2615
        %v2617 = vpop.f32.mrf.mxu0
        %v2618 = vadd.f32 %v2547, %v2617
        %2619 = vdwg.mxu0
        %2620 = vmatprep.subr.mxu0 %v561
        %2621 = vmatpush1.msra.mxu0 %v560
        %2622 = vmatprep.subr.mxu0 %v557
        %2623 = vmatpush1.msra.mxu0 %v556
        %2624 = vmatprep.subr.mxu0 %v553
        %2625 = vmatpush1.msra.mxu0 %v552
        %2626 = vmatprep.subr.mxu0 %v549
        %2627 = vmatpush1.msra.mxu0 %v548
        %2628 = vmatprep.subr.mxu0 %v545
        %2629 = vmatpush1.msra.mxu0 %v544
        %2630 = vmatprep.subr.mxu0 %v541
        %2631 = vmatpush1.msra.mxu0 %v540
        %2632 = vmatprep.subr.mxu0 %v537
        %2633 = vmatpush1.msra.mxu0 %v536
        %2634 = vmatprep.subr.mxu0 %v533
        %2635 = vmatpush1.msra.mxu0 %v532
        %2636 = vmatprep.subr.mxu0 %v529
        %2637 = vmatpush1.msra.mxu0 %v528
        %2638 = vmatprep.subr.mxu0 %v525
        %2639 = vmatpush1.msra.mxu0 %v524
        %2640 = vmatprep.subr.mxu0 %v521
        %2641 = vmatpush1.msra.mxu0 %v520
        %2642 = vmatprep.subr.mxu0 %v517
        %2643 = vmatpush1.msra.mxu0 %v516
        %2644 = vmatprep.subr.mxu0 %v513
        %2645 = vmatpush1.msra.mxu0 %v512
        %2646 = vmatprep.subr.mxu0 %v509
        %2647 = vmatpush1.msra.mxu0 %v508
        %2648 = vmatprep.subr.mxu0 %v505
        %2649 = vmatpush1.msra.mxu0 %v504
        %2650 = vmatprep.subr.mxu0 %v501
        %2651 = vmatpush1.msra.mxu0 %v500
        %2652 = vmatprep.subr.mxu0 %v625
        %2653 = vmatpush2.msra.mxu0 %v624
        %2654 = vmatprep.subr.mxu0 %v621
        %2655 = vmatpush2.msra.mxu0 %v620
        %2656 = vmatprep.subr.mxu0 %v617
        %2657 = vmatpush2.msra.mxu0 %v616
        %2658 = vmatprep.subr.mxu0 %v613
        %2659 = vmatpush2.msra.mxu0 %v612
        %2660 = vmatprep.subr.mxu0 %v609
        %2661 = vmatpush2.msra.mxu0 %v608
        %2662 = vmatprep.subr.mxu0 %v605
        %2663 = vmatpush2.msra.mxu0 %v604
        %2664 = vmatprep.subr.mxu0 %v601
        %2665 = vmatpush2.msra.mxu0 %v600
        %2666 = vmatprep.subr.mxu0 %v597
        %2667 = vmatpush2.msra.mxu0 %v596
        %2668 = vmatprep.subr.mxu0 %v593
        %2669 = vmatpush2.msra.mxu0 %v592
        %2670 = vmatprep.subr.mxu0 %v589
        %2671 = vmatpush2.msra.mxu0 %v588
        %2672 = vmatprep.subr.mxu0 %v585
        %2673 = vmatpush2.msra.mxu0 %v584
        %2674 = vmatprep.subr.mxu0 %v581
        %2675 = vmatpush2.msra.mxu0 %v580
        %2676 = vmatprep.subr.mxu0 %v577
        %2677 = vmatpush2.msra.mxu0 %v576
        %2678 = vmatprep.subr.mxu0 %v573
        %2679 = vmatpush2.msra.mxu0 %v572
        %2680 = vmatprep.subr.mxu0 %v569
        %2681 = vmatpush2.msra.mxu0 %v568
        %2682 = vmatprep.subr.mxu0 %v565
        %2683 = vmatpush2.msra.mxu0 %v564
        %2684 = vmatprep.mubr.f32.mxu0 %v2320
        %2685 = vmatmul.mubr.f32.gmra.mxu0 %v2316
        %v2686 = vpop.f32.mrf.mxu0
        %v2687 = vadd.f32 %v2616, %v2686
        %v2688 = vpop.f32.mrf.mxu0
        %v2689 = vadd.f32 %v2618, %v2688
        %2690 = vdwg.mxu0
        %2691 = vmatprep.subr.mxu0 %v689
        %2692 = vmatpush1.msra.mxu0 %v688
        %2693 = vmatprep.subr.mxu0 %v685
        %2694 = vmatpush1.msra.mxu0 %v684
        %2695 = vmatprep.subr.mxu0 %v681
        %2696 = vmatpush1.msra.mxu0 %v680
        %2697 = vmatprep.subr.mxu0 %v677
        %2698 = vmatpush1.msra.mxu0 %v676
        %2699 = vmatprep.subr.mxu0 %v673
        %2700 = vmatpush1.msra.mxu0 %v672
        %2701 = vmatprep.subr.mxu0 %v669
        %2702 = vmatpush1.msra.mxu0 %v668
        %2703 = vmatprep.subr.mxu0 %v665
        %2704 = vmatpush1.msra.mxu0 %v664
        %2705 = vmatprep.subr.mxu0 %v661
        %2706 = vmatpush1.msra.mxu0 %v660
        %2707 = vmatprep.subr.mxu0 %v657
        %2708 = vmatpush1.msra.mxu0 %v656
        %2709 = vmatprep.subr.mxu0 %v653
        %2710 = vmatpush1.msra.mxu0 %v652
        %2711 = vmatprep.subr.mxu0 %v649
        %2712 = vmatpush1.msra.mxu0 %v648
        %2713 = vmatprep.subr.mxu0 %v645
        %2714 = vmatpush1.msra.mxu0 %v644
        %2715 = vmatprep.subr.mxu0 %v641
        %2716 = vmatpush1.msra.mxu0 %v640
        %2717 = vmatprep.subr.mxu0 %v637
        %2718 = vmatpush1.msra.mxu0 %v636
        %2719 = vmatprep.subr.mxu0 %v633
        %2720 = vmatpush1.msra.mxu0 %v632
        %2721 = vmatprep.subr.mxu0 %v629
        %2722 = vmatpush1.msra.mxu0 %v628
        %2723 = vmatprep.subr.mxu0 %v753
        %2724 = vmatpush2.msra.mxu0 %v752
        %2725 = vmatprep.subr.mxu0 %v749
        %2726 = vmatpush2.msra.mxu0 %v748
        %2727 = vmatprep.subr.mxu0 %v745
        %2728 = vmatpush2.msra.mxu0 %v744
        %2729 = vmatprep.subr.mxu0 %v741
        %2730 = vmatpush2.msra.mxu0 %v740
        %2731 = vmatprep.subr.mxu0 %v737
        %2732 = vmatpush2.msra.mxu0 %v736
        %2733 = vmatprep.subr.mxu0 %v733
        %2734 = vmatpush2.msra.mxu0 %v732
        %2735 = vmatprep.subr.mxu0 %v729
        %2736 = vmatpush2.msra.mxu0 %v728
        %2737 = vmatprep.subr.mxu0 %v725
        %2738 = vmatpush2.msra.mxu0 %v724
        %2739 = vmatprep.subr.mxu0 %v721
        %2740 = vmatpush2.msra.mxu0 %v720
        %2741 = vmatprep.subr.mxu0 %v717
        %2742 = vmatpush2.msra.mxu0 %v716
        %2743 = vmatprep.subr.mxu0 %v713
        %2744 = vmatpush2.msra.mxu0 %v712
        %2745 = vmatprep.subr.mxu0 %v709
        %2746 = vmatpush2.msra.mxu0 %v708
        %2747 = vmatprep.subr.mxu0 %v705
        %2748 = vmatpush2.msra.mxu0 %v704
        %2749 = vmatprep.subr.mxu0 %v701
        %2750 = vmatpush2.msra.mxu0 %v700
        %2751 = vmatprep.subr.mxu0 %v697
        %2752 = vmatpush2.msra.mxu0 %v696
        %2753 = vmatprep.subr.mxu0 %v693
        %2754 = vmatpush2.msra.mxu0 %v692
        %2755 = vmatprep.mubr.f32.mxu0 %v2328
        %2756 = vmatmul.mubr.f32.gmra.mxu0 %v2324
        %v2757 = vpop.f32.mrf.mxu0
        %v2758 = vadd.f32 %v2687, %v2757
        %v2759 = vpop.f32.mrf.mxu0
        %v2760 = vadd.f32 %v2689, %v2759
        %2761 = vdwg.mxu0
        %2762 = vmatprep.subr.mxu0 %v817
        %2763 = vmatpush1.msra.mxu0 %v816
        %2764 = vmatprep.subr.mxu0 %v813
        %2765 = vmatpush1.msra.mxu0 %v812
        %2766 = vmatprep.subr.mxu0 %v809
        %2767 = vmatpush1.msra.mxu0 %v808
        %2768 = vmatprep.subr.mxu0 %v805
        %2769 = vmatpush1.msra.mxu0 %v804
        %2770 = vmatprep.subr.mxu0 %v801
        %2771 = vmatpush1.msra.mxu0 %v800
        %2772 = vmatprep.subr.mxu0 %v797
        %2773 = vmatpush1.msra.mxu0 %v796
        %2774 = vmatprep.subr.mxu0 %v793
        %2775 = vmatpush1.msra.mxu0 %v792
        %2776 = vmatprep.subr.mxu0 %v789
        %2777 = vmatpush1.msra.mxu0 %v788
        %2778 = vmatprep.subr.mxu0 %v785
        %2779 = vmatpush1.msra.mxu0 %v784
        %2780 = vmatprep.subr.mxu0 %v781
        %2781 = vmatpush1.msra.mxu0 %v780
        %2782 = vmatprep.subr.mxu0 %v777
        %2783 = vmatpush1.msra.mxu0 %v776
        %2784 = vmatprep.subr.mxu0 %v773
        %2785 = vmatpush1.msra.mxu0 %v772
        %2786 = vmatprep.subr.mxu0 %v769
        %2787 = vmatpush1.msra.mxu0 %v768
        %2788 = vmatprep.subr.mxu0 %v765
        %2789 = vmatpush1.msra.mxu0 %v764
        %2790 = vmatprep.subr.mxu0 %v761
        %2791 = vmatpush1.msra.mxu0 %v760
        %2792 = vmatprep.subr.mxu0 %v757
        %2793 = vmatpush1.msra.mxu0 %v756
        %2794 = vmatprep.subr.mxu0 %v881
        %2795 = vmatpush2.msra.mxu0 %v880
        %2796 = vmatprep.subr.mxu0 %v877
        %2797 = vmatpush2.msra.mxu0 %v876
        %2798 = vmatprep.subr.mxu0 %v873
        %2799 = vmatpush2.msra.mxu0 %v872
        %2800 = vmatprep.subr.mxu0 %v869
        %2801 = vmatpush2.msra.mxu0 %v868
        %2802 = vmatprep.subr.mxu0 %v865
        %2803 = vmatpush2.msra.mxu0 %v864
        %2804 = vmatprep.subr.mxu0 %v861
        %2805 = vmatpush2.msra.mxu0 %v860
        %2806 = vmatprep.subr.mxu0 %v857
        %2807 = vmatpush2.msra.mxu0 %v856
        %2808 = vmatprep.subr.mxu0 %v853
        %2809 = vmatpush2.msra.mxu0 %v852
        %2810 = vmatprep.subr.mxu0 %v849
        %2811 = vmatpush2.msra.mxu0 %v848
        %2812 = vmatprep.subr.mxu0 %v845
        %2813 = vmatpush2.msra.mxu0 %v844
        %2814 = vmatprep.subr.mxu0 %v841
        %2815 = vmatpush2.msra.mxu0 %v840
        %2816 = vmatprep.subr.mxu0 %v837
        %2817 = vmatpush2.msra.mxu0 %v836
        %2818 = vmatprep.subr.mxu0 %v833
        %2819 = vmatpush2.msra.mxu0 %v832
        %2820 = vmatprep.subr.mxu0 %v829
        %2821 = vmatpush2.msra.mxu0 %v828
        %2822 = vmatprep.subr.mxu0 %v825
        %2823 = vmatpush2.msra.mxu0 %v824
        %2824 = vmatprep.subr.mxu0 %v821
        %2825 = vmatpush2.msra.mxu0 %v820
        %2826 = vmatprep.mubr.f32.mxu0 %v2336
        %2827 = vmatmul.mubr.f32.gmra.mxu0 %v2332
        %v2828 = vpop.f32.mrf.mxu0
        %v2829 = vadd.f32 %v2758, %v2828
        %v2830 = vpop.f32.mrf.mxu0
        %v2831 = vadd.f32 %v2760, %v2830
        %2832 = vdwg.mxu0
        %2833 = vmatprep.subr.mxu0 %v945
        %2834 = vmatpush1.msra.mxu0 %v944
        %2835 = vmatprep.subr.mxu0 %v941
        %2836 = vmatpush1.msra.mxu0 %v940
        %2837 = vmatprep.subr.mxu0 %v937
        %2838 = vmatpush1.msra.mxu0 %v936
        %2839 = vmatprep.subr.mxu0 %v933
        %2840 = vmatpush1.msra.mxu0 %v932
        %2841 = vmatprep.subr.mxu0 %v929
        %2842 = vmatpush1.msra.mxu0 %v928
        %2843 = vmatprep.subr.mxu0 %v925
        %2844 = vmatpush1.msra.mxu0 %v924
        %2845 = vmatprep.subr.mxu0 %v921
        %2846 = vmatpush1.msra.mxu0 %v920
        %2847 = vmatprep.subr.mxu0 %v917
        %2848 = vmatpush1.msra.mxu0 %v916
        %2849 = vmatprep.subr.mxu0 %v913
        %2850 = vmatpush1.msra.mxu0 %v912
        %2851 = vmatprep.subr.mxu0 %v909
        %2852 = vmatpush1.msra.mxu0 %v908
        %2853 = vmatprep.subr.mxu0 %v905
        %2854 = vmatpush1.msra.mxu0 %v904
        %2855 = vmatprep.subr.mxu0 %v901
        %2856 = vmatpush1.msra.mxu0 %v900
        %2857 = vmatprep.subr.mxu0 %v897
        %2858 = vmatpush1.msra.mxu0 %v896
        %2859 = vmatprep.subr.mxu0 %v893
        %2860 = vmatpush1.msra.mxu0 %v892
        %2861 = vmatprep.subr.mxu0 %v889
        %2862 = vmatpush1.msra.mxu0 %v888
        %2863 = vmatprep.subr.mxu0 %v885
        %2864 = vmatpush1.msra.mxu0 %v884
        %2865 = vmatprep.subr.mxu0 %v1009
        %2866 = vmatpush2.msra.mxu0 %v1008
        %2867 = vmatprep.subr.mxu0 %v1005
        %2868 = vmatpush2.msra.mxu0 %v1004
        %2869 = vmatprep.subr.mxu0 %v1001
        %2870 = vmatpush2.msra.mxu0 %v1000
        %2871 = vmatprep.subr.mxu0 %v997
        %2872 = vmatpush2.msra.mxu0 %v996
        %2873 = vmatprep.subr.mxu0 %v993
        %2874 = vmatpush2.msra.mxu0 %v992
        %2875 = vmatprep.subr.mxu0 %v989
        %2876 = vmatpush2.msra.mxu0 %v988
        %2877 = vmatprep.subr.mxu0 %v985
        %2878 = vmatpush2.msra.mxu0 %v984
        %2879 = vmatprep.subr.mxu0 %v981
        %2880 = vmatpush2.msra.mxu0 %v980
        %2881 = vmatprep.subr.mxu0 %v977
        %2882 = vmatpush2.msra.mxu0 %v976
        %2883 = vmatprep.subr.mxu0 %v973
        %2884 = vmatpush2.msra.mxu0 %v972
        %2885 = vmatprep.subr.mxu0 %v969
        %2886 = vmatpush2.msra.mxu0 %v968
        %2887 = vmatprep.subr.mxu0 %v965
        %2888 = vmatpush2.msra.mxu0 %v964
        %2889 = vmatprep.subr.mxu0 %v961
        %2890 = vmatpush2.msra.mxu0 %v960
        %2891 = vmatprep.subr.mxu0 %v957
        %2892 = vmatpush2.msra.mxu0 %v956
        %2893 = vmatprep.subr.mxu0 %v953
        %2894 = vmatpush2.msra.mxu0 %v952
        %2895 = vmatprep.subr.mxu0 %v949
        %2896 = vmatpush2.msra.mxu0 %v948
        %2897 = vmatprep.mubr.f32.mxu0 %v2344
        %2898 = vmatmul.mubr.f32.gmra.mxu0 %v2340
        %v2899 = vpop.f32.mrf.mxu0
        %v2900 = vadd.f32 %v2829, %v2899
        %v2901 = vpop.f32.mrf.mxu0
        %v2902 = vadd.f32 %v2831, %v2901
        %2903 = vdwg.mxu0
        %2904 = vmatprep.subr.mxu0 %v1073
        %2905 = vmatpush1.msra.mxu0 %v1072
        %2906 = vmatprep.subr.mxu0 %v1069
        %2907 = vmatpush1.msra.mxu0 %v1068
        %2908 = vmatprep.subr.mxu0 %v1065
        %2909 = vmatpush1.msra.mxu0 %v1064
        %2910 = vmatprep.subr.mxu0 %v1061
        %2911 = vmatpush1.msra.mxu0 %v1060
        %2912 = vmatprep.subr.mxu0 %v1057
        %2913 = vmatpush1.msra.mxu0 %v1056
        %2914 = vmatprep.subr.mxu0 %v1053
        %2915 = vmatpush1.msra.mxu0 %v1052
        %2916 = vmatprep.subr.mxu0 %v1049
        %2917 = vmatpush1.msra.mxu0 %v1048
        %2918 = vmatprep.subr.mxu0 %v1045
        %2919 = vmatpush1.msra.mxu0 %v1044
        %2920 = vmatprep.subr.mxu0 %v1041
        %2921 = vmatpush1.msra.mxu0 %v1040
        %2922 = vmatprep.subr.mxu0 %v1037
        %2923 = vmatpush1.msra.mxu0 %v1036
        %2924 = vmatprep.subr.mxu0 %v1033
        %2925 = vmatpush1.msra.mxu0 %v1032
        %2926 = vmatprep.subr.mxu0 %v1029
        %2927 = vmatpush1.msra.mxu0 %v1028
        %2928 = vmatprep.subr.mxu0 %v1025
        %2929 = vmatpush1.msra.mxu0 %v1024
        %2930 = vmatprep.subr.mxu0 %v1021
        %2931 = vmatpush1.msra.mxu0 %v1020
        %2932 = vmatprep.subr.mxu0 %v1017
        %2933 = vmatpush1.msra.mxu0 %v1016
        %2934 = vmatprep.subr.mxu0 %v1013
        %2935 = vmatpush1.msra.mxu0 %v1012
        %2936 = vmatprep.subr.mxu0 %v1137
        %2937 = vmatpush2.msra.mxu0 %v1136
        %2938 = vmatprep.subr.mxu0 %v1133
        %2939 = vmatpush2.msra.mxu0 %v1132
        %2940 = vmatprep.subr.mxu0 %v1129
        %2941 = vmatpush2.msra.mxu0 %v1128
        %2942 = vmatprep.subr.mxu0 %v1125
        %2943 = vmatpush2.msra.mxu0 %v1124
        %2944 = vmatprep.subr.mxu0 %v1121
        %2945 = vmatpush2.msra.mxu0 %v1120
        %2946 = vmatprep.subr.mxu0 %v1117
        %2947 = vmatpush2.msra.mxu0 %v1116
        %2948 = vmatprep.subr.mxu0 %v1113
        %2949 = vmatpush2.msra.mxu0 %v1112
        %2950 = vmatprep.subr.mxu0 %v1109
        %2951 = vmatpush2.msra.mxu0 %v1108
        %2952 = vmatprep.subr.mxu0 %v1105
        %2953 = vmatpush2.msra.mxu0 %v1104
        %2954 = vmatprep.subr.mxu0 %v1101
        %2955 = vmatpush2.msra.mxu0 %v1100
        %2956 = vmatprep.subr.mxu0 %v1097
        %2957 = vmatpush2.msra.mxu0 %v1096
        %2958 = vmatprep.subr.mxu0 %v1093
        %2959 = vmatpush2.msra.mxu0 %v1092
        %2960 = vmatprep.subr.mxu0 %v1089
        %2961 = vmatpush2.msra.mxu0 %v1088
        %2962 = vmatprep.subr.mxu0 %v1085
        %2963 = vmatpush2.msra.mxu0 %v1084
        %2964 = vmatprep.subr.mxu0 %v1081
        %2965 = vmatpush2.msra.mxu0 %v1080
        %2966 = vmatprep.subr.mxu0 %v1077
        %2967 = vmatpush2.msra.mxu0 %v1076
        %2968 = vmatprep.mubr.f32.mxu0 %v2352
        %2969 = vmatmul.mubr.f32.gmra.mxu0 %v2348
        %v2970 = vpop.f32.mrf.mxu0
        %v2971 = vadd.f32 %v2900, %v2970
        %v2972 = vpop.f32.mrf.mxu0
        %v2973 = vadd.f32 %v2902, %v2972
        %2974 = vdwg.mxu0
        %2975 = vmatprep.subr.mxu0 %v1201
        %2976 = vmatpush1.msra.mxu0 %v1200
        %2977 = vmatprep.subr.mxu0 %v1197
        %2978 = vmatpush1.msra.mxu0 %v1196
        %2979 = vmatprep.subr.mxu0 %v1193
        %2980 = vmatpush1.msra.mxu0 %v1192
        %2981 = vmatprep.subr.mxu0 %v1189
        %2982 = vmatpush1.msra.mxu0 %v1188
        %2983 = vmatprep.subr.mxu0 %v1185
        %2984 = vmatpush1.msra.mxu0 %v1184
        %2985 = vmatprep.subr.mxu0 %v1181
        %2986 = vmatpush1.msra.mxu0 %v1180
        %2987 = vmatprep.subr.mxu0 %v1177
        %2988 = vmatpush1.msra.mxu0 %v1176
        %2989 = vmatprep.subr.mxu0 %v1173
        %2990 = vmatpush1.msra.mxu0 %v1172
        %2991 = vmatprep.subr.mxu0 %v1169
        %2992 = vmatpush1.msra.mxu0 %v1168
        %2993 = vmatprep.subr.mxu0 %v1165
        %2994 = vmatpush1.msra.mxu0 %v1164
        %2995 = vmatprep.subr.mxu0 %v1161
        %2996 = vmatpush1.msra.mxu0 %v1160
        %2997 = vmatprep.subr.mxu0 %v1157
        %2998 = vmatpush1.msra.mxu0 %v1156
        %2999 = vmatprep.subr.mxu0 %v1153
        %3000 = vmatpush1.msra.mxu0 %v1152
        %3001 = vmatprep.subr.mxu0 %v1149
        %3002 = vmatpush1.msra.mxu0 %v1148
        %3003 = vmatprep.subr.mxu0 %v1145
        %3004 = vmatpush1.msra.mxu0 %v1144
        %3005 = vmatprep.subr.mxu0 %v1141
        %3006 = vmatpush1.msra.mxu0 %v1140
        %3007 = vmatprep.subr.mxu0 %v1265
        %3008 = vmatpush2.msra.mxu0 %v1264
        %3009 = vmatprep.subr.mxu0 %v1261
        %3010 = vmatpush2.msra.mxu0 %v1260
        %3011 = vmatprep.subr.mxu0 %v1257
        %3012 = vmatpush2.msra.mxu0 %v1256
        %3013 = vmatprep.subr.mxu0 %v1253
        %3014 = vmatpush2.msra.mxu0 %v1252
        %3015 = vmatprep.subr.mxu0 %v1249
        %3016 = vmatpush2.msra.mxu0 %v1248
        %3017 = vmatprep.subr.mxu0 %v1245
        %3018 = vmatpush2.msra.mxu0 %v1244
        %3019 = vmatprep.subr.mxu0 %v1241
        %3020 = vmatpush2.msra.mxu0 %v1240
        %3021 = vmatprep.subr.mxu0 %v1237
        %3022 = vmatpush2.msra.mxu0 %v1236
        %3023 = vmatprep.subr.mxu0 %v1233
        %3024 = vmatpush2.msra.mxu0 %v1232
        %3025 = vmatprep.subr.mxu0 %v1229
        %3026 = vmatpush2.msra.mxu0 %v1228
        %3027 = vmatprep.subr.mxu0 %v1225
        %3028 = vmatpush2.msra.mxu0 %v1224
        %3029 = vmatprep.subr.mxu0 %v1221
        %3030 = vmatpush2.msra.mxu0 %v1220
        %3031 = vmatprep.subr.mxu0 %v1217
        %3032 = vmatpush2.msra.mxu0 %v1216
        %3033 = vmatprep.subr.mxu0 %v1213
        %3034 = vmatpush2.msra.mxu0 %v1212
        %3035 = vmatprep.subr.mxu0 %v1209
        %3036 = vmatpush2.msra.mxu0 %v1208
        %3037 = vmatprep.subr.mxu0 %v1205
        %3038 = vmatpush2.msra.mxu0 %v1204
        %3039 = vmatprep.mubr.f32.mxu0 %v2360
        %3040 = vmatmul.mubr.f32.gmra.mxu0 %v2356
        %v3041 = vpop.f32.mrf.mxu0
        %v3042 = vadd.f32 %v2971, %v3041
        %v3043 = vpop.f32.mrf.mxu0
        %v3044 = vadd.f32 %v2973, %v3043
        %3045 = vdwg.mxu0
        %3046 = vmatprep.subr.mxu0 %v1329
        %3047 = vmatpush1.msra.mxu0 %v1328
        %3048 = vmatprep.subr.mxu0 %v1325
        %3049 = vmatpush1.msra.mxu0 %v1324
        %3050 = vmatprep.subr.mxu0 %v1321
        %3051 = vmatpush1.msra.mxu0 %v1320
        %3052 = vmatprep.subr.mxu0 %v1317
        %3053 = vmatpush1.msra.mxu0 %v1316
        %3054 = vmatprep.subr.mxu0 %v1313
        %3055 = vmatpush1.msra.mxu0 %v1312
        %3056 = vmatprep.subr.mxu0 %v1309
        %3057 = vmatpush1.msra.mxu0 %v1308
        %3058 = vmatprep.subr.mxu0 %v1305
        %3059 = vmatpush1.msra.mxu0 %v1304
        %3060 = vmatprep.subr.mxu0 %v1301
        %3061 = vmatpush1.msra.mxu0 %v1300
        %3062 = vmatprep.subr.mxu0 %v1297
        %3063 = vmatpush1.msra.mxu0 %v1296
        %3064 = vmatprep.subr.mxu0 %v1293
        %3065 = vmatpush1.msra.mxu0 %v1292
        %3066 = vmatprep.subr.mxu0 %v1289
        %3067 = vmatpush1.msra.mxu0 %v1288
        %3068 = vmatprep.subr.mxu0 %v1285
        %3069 = vmatpush1.msra.mxu0 %v1284
        %3070 = vmatprep.subr.mxu0 %v1281
        %3071 = vmatpush1.msra.mxu0 %v1280
        %3072 = vmatprep.subr.mxu0 %v1277
        %3073 = vmatpush1.msra.mxu0 %v1276
        %3074 = vmatprep.subr.mxu0 %v1273
        %3075 = vmatpush1.msra.mxu0 %v1272
        %3076 = vmatprep.subr.mxu0 %v1269
        %3077 = vmatpush1.msra.mxu0 %v1268
        %3078 = vmatprep.subr.mxu0 %v1393
        %3079 = vmatpush2.msra.mxu0 %v1392
        %3080 = vmatprep.subr.mxu0 %v1389
        %3081 = vmatpush2.msra.mxu0 %v1388
        %3082 = vmatprep.subr.mxu0 %v1385
        %3083 = vmatpush2.msra.mxu0 %v1384
        %3084 = vmatprep.subr.mxu0 %v1381
        %3085 = vmatpush2.msra.mxu0 %v1380
        %3086 = vmatprep.subr.mxu0 %v1377
        %3087 = vmatpush2.msra.mxu0 %v1376
        %3088 = vmatprep.subr.mxu0 %v1373
        %3089 = vmatpush2.msra.mxu0 %v1372
        %3090 = vmatprep.subr.mxu0 %v1369
        %3091 = vmatpush2.msra.mxu0 %v1368
        %3092 = vmatprep.subr.mxu0 %v1365
        %3093 = vmatpush2.msra.mxu0 %v1364
        %3094 = vmatprep.subr.mxu0 %v1361
        %3095 = vmatpush2.msra.mxu0 %v1360
        %3096 = vmatprep.subr.mxu0 %v1357
        %3097 = vmatpush2.msra.mxu0 %v1356
        %3098 = vmatprep.subr.mxu0 %v1353
        %3099 = vmatpush2.msra.mxu0 %v1352
        %3100 = vmatprep.subr.mxu0 %v1349
        %3101 = vmatpush2.msra.mxu0 %v1348
        %3102 = vmatprep.subr.mxu0 %v1345
        %3103 = vmatpush2.msra.mxu0 %v1344
        %3104 = vmatprep.subr.mxu0 %v1341
        %3105 = vmatpush2.msra.mxu0 %v1340
        %3106 = vmatprep.subr.mxu0 %v1337
        %3107 = vmatpush2.msra.mxu0 %v1336
        %3108 = vmatprep.subr.mxu0 %v1333
        %3109 = vmatpush2.msra.mxu0 %v1332
        %3110 = vmatprep.mubr.f32.mxu0 %v2368
        %3111 = vmatmul.mubr.f32.gmra.mxu0 %v2364
        %v3112 = vpop.f32.mrf.mxu0
        %v3113 = vadd.f32 %v3042, %v3112
        %v3114 = vpop.f32.mrf.mxu0
        %v3115 = vadd.f32 %v3044, %v3114
        %3116 = vdwg.mxu0
        %3117 = vmatprep.subr.mxu0 %v1457
        %3118 = vmatpush1.msra.mxu0 %v1456
        %3119 = vmatprep.subr.mxu0 %v1453
        %3120 = vmatpush1.msra.mxu0 %v1452
        %3121 = vmatprep.subr.mxu0 %v1449
        %3122 = vmatpush1.msra.mxu0 %v1448
        %3123 = vmatprep.subr.mxu0 %v1445
        %3124 = vmatpush1.msra.mxu0 %v1444
        %3125 = vmatprep.subr.mxu0 %v1441
        %3126 = vmatpush1.msra.mxu0 %v1440
        %3127 = vmatprep.subr.mxu0 %v1437
        %3128 = vmatpush1.msra.mxu0 %v1436
        %3129 = vmatprep.subr.mxu0 %v1433
        %3130 = vmatpush1.msra.mxu0 %v1432
        %3131 = vmatprep.subr.mxu0 %v1429
        %3132 = vmatpush1.msra.mxu0 %v1428
        %3133 = vmatprep.subr.mxu0 %v1425
        %3134 = vmatpush1.msra.mxu0 %v1424
        %3135 = vmatprep.subr.mxu0 %v1421
        %3136 = vmatpush1.msra.mxu0 %v1420
        %3137 = vmatprep.subr.mxu0 %v1417
        %3138 = vmatpush1.msra.mxu0 %v1416
        %3139 = vmatprep.subr.mxu0 %v1413
        %3140 = vmatpush1.msra.mxu0 %v1412
        %3141 = vmatprep.subr.mxu0 %v1409
        %3142 = vmatpush1.msra.mxu0 %v1408
        %3143 = vmatprep.subr.mxu0 %v1405
        %3144 = vmatpush1.msra.mxu0 %v1404
        %3145 = vmatprep.subr.mxu0 %v1401
        %3146 = vmatpush1.msra.mxu0 %v1400
        %3147 = vmatprep.subr.mxu0 %v1397
        %3148 = vmatpush1.msra.mxu0 %v1396
        %3149 = vmatprep.subr.mxu0 %v1521
        %3150 = vmatpush2.msra.mxu0 %v1520
        %3151 = vmatprep.subr.mxu0 %v1517
        %3152 = vmatpush2.msra.mxu0 %v1516
        %3153 = vmatprep.subr.mxu0 %v1513
        %3154 = vmatpush2.msra.mxu0 %v1512
        %3155 = vmatprep.subr.mxu0 %v1509
        %3156 = vmatpush2.msra.mxu0 %v1508
        %3157 = vmatprep.subr.mxu0 %v1505
        %3158 = vmatpush2.msra.mxu0 %v1504
        %3159 = vmatprep.subr.mxu0 %v1501
        %3160 = vmatpush2.msra.mxu0 %v1500
        %3161 = vmatprep.subr.mxu0 %v1497
        %3162 = vmatpush2.msra.mxu0 %v1496
        %3163 = vmatprep.subr.mxu0 %v1493
        %3164 = vmatpush2.msra.mxu0 %v1492
        %3165 = vmatprep.subr.mxu0 %v1489
        %3166 = vmatpush2.msra.mxu0 %v1488
        %3167 = vmatprep.subr.mxu0 %v1485
        %3168 = vmatpush2.msra.mxu0 %v1484
        %3169 = vmatprep.subr.mxu0 %v1481
        %3170 = vmatpush2.msra.mxu0 %v1480
        %3171 = vmatprep.subr.mxu0 %v1477
        %3172 = vmatpush2.msra.mxu0 %v1476
        %3173 = vmatprep.subr.mxu0 %v1473
        %3174 = vmatpush2.msra.mxu0 %v1472
        %3175 = vmatprep.subr.mxu0 %v1469
        %3176 = vmatpush2.msra.mxu0 %v1468
        %3177 = vmatprep.subr.mxu0 %v1465
        %3178 = vmatpush2.msra.mxu0 %v1464
        %3179 = vmatprep.subr.mxu0 %v1461
        %3180 = vmatpush2.msra.mxu0 %v1460
        %3181 = vmatprep.mubr.f32.mxu0 %v2376
        %3182 = vmatmul.mubr.f32.gmra.mxu0 %v2372
        %v3183 = vpop.f32.mrf.mxu0
        %v3184 = vadd.f32 %v3113, %v3183
        %v3185 = vpop.f32.mrf.mxu0
        %v3186 = vadd.f32 %v3115, %v3185
        %3187 = vdwg.mxu0
        %3188 = vmatprep.subr.mxu0 %v1585
        %3189 = vmatpush1.msra.mxu0 %v1584
        %3190 = vmatprep.subr.mxu0 %v1581
        %3191 = vmatpush1.msra.mxu0 %v1580
        %3192 = vmatprep.subr.mxu0 %v1577
        %3193 = vmatpush1.msra.mxu0 %v1576
        %3194 = vmatprep.subr.mxu0 %v1573
        %3195 = vmatpush1.msra.mxu0 %v1572
        %3196 = vmatprep.subr.mxu0 %v1569
        %3197 = vmatpush1.msra.mxu0 %v1568
        %3198 = vmatprep.subr.mxu0 %v1565
        %3199 = vmatpush1.msra.mxu0 %v1564
        %3200 = vmatprep.subr.mxu0 %v1561
        %3201 = vmatpush1.msra.mxu0 %v1560
        %3202 = vmatprep.subr.mxu0 %v1557
        %3203 = vmatpush1.msra.mxu0 %v1556
        %3204 = vmatprep.subr.mxu0 %v1553
        %3205 = vmatpush1.msra.mxu0 %v1552
        %3206 = vmatprep.subr.mxu0 %v1549
        %3207 = vmatpush1.msra.mxu0 %v1548
        %3208 = vmatprep.subr.mxu0 %v1545
        %3209 = vmatpush1.msra.mxu0 %v1544
        %3210 = vmatprep.subr.mxu0 %v1541
        %3211 = vmatpush1.msra.mxu0 %v1540
        %3212 = vmatprep.subr.mxu0 %v1537
        %3213 = vmatpush1.msra.mxu0 %v1536
        %3214 = vmatprep.subr.mxu0 %v1533
        %3215 = vmatpush1.msra.mxu0 %v1532
        %3216 = vmatprep.subr.mxu0 %v1529
        %3217 = vmatpush1.msra.mxu0 %v1528
        %3218 = vmatprep.subr.mxu0 %v1525
        %3219 = vmatpush1.msra.mxu0 %v1524
        %3220 = vmatprep.subr.mxu0 %v1649
        %3221 = vmatpush2.msra.mxu0 %v1648
        %3222 = vmatprep.subr.mxu0 %v1645
        %3223 = vmatpush2.msra.mxu0 %v1644
        %3224 = vmatprep.subr.mxu0 %v1641
        %3225 = vmatpush2.msra.mxu0 %v1640
        %3226 = vmatprep.subr.mxu0 %v1637
        %3227 = vmatpush2.msra.mxu0 %v1636
        %3228 = vmatprep.subr.mxu0 %v1633
        %3229 = vmatpush2.msra.mxu0 %v1632
        %3230 = vmatprep.subr.mxu0 %v1629
        %3231 = vmatpush2.msra.mxu0 %v1628
        %3232 = vmatprep.subr.mxu0 %v1625
        %3233 = vmatpush2.msra.mxu0 %v1624
        %3234 = vmatprep.subr.mxu0 %v1621
        %3235 = vmatpush2.msra.mxu0 %v1620
        %3236 = vmatprep.subr.mxu0 %v1617
        %3237 = vmatpush2.msra.mxu0 %v1616
        %3238 = vmatprep.subr.mxu0 %v1613
        %3239 = vmatpush2.msra.mxu0 %v1612
        %3240 = vmatprep.subr.mxu0 %v1609
        %3241 = vmatpush2.msra.mxu0 %v1608
        %3242 = vmatprep.subr.mxu0 %v1605
        %3243 = vmatpush2.msra.mxu0 %v1604
        %3244 = vmatprep.subr.mxu0 %v1601
        %3245 = vmatpush2.msra.mxu0 %v1600
        %3246 = vmatprep.subr.mxu0 %v1597
        %3247 = vmatpush2.msra.mxu0 %v1596
        %3248 = vmatprep.subr.mxu0 %v1593
        %3249 = vmatpush2.msra.mxu0 %v1592
        %3250 = vmatprep.subr.mxu0 %v1589
        %3251 = vmatpush2.msra.mxu0 %v1588
        %3252 = vmatprep.mubr.f32.mxu0 %v2384
        %3253 = vmatmul.mubr.f32.gmra.mxu0 %v2380
        %v3254 = vpop.f32.mrf.mxu0
        %v3255 = vadd.f32 %v3184, %v3254
        %v3256 = vpop.f32.mrf.mxu0
        %v3257 = vadd.f32 %v3186, %v3256
        %3258 = vdwg.mxu0
        %3259 = vmatprep.subr.mxu0 %v1713
        %3260 = vmatpush1.msra.mxu0 %v1712
        %3261 = vmatprep.subr.mxu0 %v1709
        %3262 = vmatpush1.msra.mxu0 %v1708
        %3263 = vmatprep.subr.mxu0 %v1705
        %3264 = vmatpush1.msra.mxu0 %v1704
        %3265 = vmatprep.subr.mxu0 %v1701
        %3266 = vmatpush1.msra.mxu0 %v1700
        %3267 = vmatprep.subr.mxu0 %v1697
        %3268 = vmatpush1.msra.mxu0 %v1696
        %3269 = vmatprep.subr.mxu0 %v1693
        %3270 = vmatpush1.msra.mxu0 %v1692
        %3271 = vmatprep.subr.mxu0 %v1689
        %3272 = vmatpush1.msra.mxu0 %v1688
        %3273 = vmatprep.subr.mxu0 %v1685
        %3274 = vmatpush1.msra.mxu0 %v1684
        %3275 = vmatprep.subr.mxu0 %v1681
        %3276 = vmatpush1.msra.mxu0 %v1680
        %3277 = vmatprep.subr.mxu0 %v1677
        %3278 = vmatpush1.msra.mxu0 %v1676
        %3279 = vmatprep.subr.mxu0 %v1673
        %3280 = vmatpush1.msra.mxu0 %v1672
        %3281 = vmatprep.subr.mxu0 %v1669
        %3282 = vmatpush1.msra.mxu0 %v1668
        %3283 = vmatprep.subr.mxu0 %v1665
        %3284 = vmatpush1.msra.mxu0 %v1664
        %3285 = vmatprep.subr.mxu0 %v1661
        %3286 = vmatpush1.msra.mxu0 %v1660
        %3287 = vmatprep.subr.mxu0 %v1657
        %3288 = vmatpush1.msra.mxu0 %v1656
        %3289 = vmatprep.subr.mxu0 %v1653
        %3290 = vmatpush1.msra.mxu0 %v1652
        %3291 = vmatprep.subr.mxu0 %v1777
        %3292 = vmatpush2.msra.mxu0 %v1776
        %3293 = vmatprep.subr.mxu0 %v1773
        %3294 = vmatpush2.msra.mxu0 %v1772
        %3295 = vmatprep.subr.mxu0 %v1769
        %3296 = vmatpush2.msra.mxu0 %v1768
        %3297 = vmatprep.subr.mxu0 %v1765
        %3298 = vmatpush2.msra.mxu0 %v1764
        %3299 = vmatprep.subr.mxu0 %v1761
        %3300 = vmatpush2.msra.mxu0 %v1760
        %3301 = vmatprep.subr.mxu0 %v1757
        %3302 = vmatpush2.msra.mxu0 %v1756
        %3303 = vmatprep.subr.mxu0 %v1753
        %3304 = vmatpush2.msra.mxu0 %v1752
        %3305 = vmatprep.subr.mxu0 %v1749
        %3306 = vmatpush2.msra.mxu0 %v1748
        %3307 = vmatprep.subr.mxu0 %v1745
        %3308 = vmatpush2.msra.mxu0 %v1744
        %3309 = vmatprep.subr.mxu0 %v1741
        %3310 = vmatpush2.msra.mxu0 %v1740
        %3311 = vmatprep.subr.mxu0 %v1737
        %3312 = vmatpush2.msra.mxu0 %v1736
        %3313 = vmatprep.subr.mxu0 %v1733
        %3314 = vmatpush2.msra.mxu0 %v1732
        %3315 = vmatprep.subr.mxu0 %v1729
        %3316 = vmatpush2.msra.mxu0 %v1728
        %3317 = vmatprep.subr.mxu0 %v1725
        %3318 = vmatpush2.msra.mxu0 %v1724
        %3319 = vmatprep.subr.mxu0 %v1721
        %3320 = vmatpush2.msra.mxu0 %v1720
        %3321 = vmatprep.subr.mxu0 %v1717
        %3322 = vmatpush2.msra.mxu0 %v1716
        %3323 = vmatprep.mubr.f32.mxu0 %v2392
        %3324 = vmatmul.mubr.f32.gmra.mxu0 %v2388
        %v3325 = vpop.f32.mrf.mxu0
        %v3326 = vadd.f32 %v3255, %v3325
        %v3327 = vpop.f32.mrf.mxu0
        %v3328 = vadd.f32 %v3257, %v3327
        %3329 = vdwg.mxu0
        %3330 = vmatprep.subr.mxu0 %v1841
        %3331 = vmatpush1.msra.mxu0 %v1840
        %3332 = vmatprep.subr.mxu0 %v1837
        %3333 = vmatpush1.msra.mxu0 %v1836
        %3334 = vmatprep.subr.mxu0 %v1833
        %3335 = vmatpush1.msra.mxu0 %v1832
        %3336 = vmatprep.subr.mxu0 %v1829
        %3337 = vmatpush1.msra.mxu0 %v1828
        %3338 = vmatprep.subr.mxu0 %v1825
        %3339 = vmatpush1.msra.mxu0 %v1824
        %3340 = vmatprep.subr.mxu0 %v1821
        %3341 = vmatpush1.msra.mxu0 %v1820
        %3342 = vmatprep.subr.mxu0 %v1817
        %3343 = vmatpush1.msra.mxu0 %v1816
        %3344 = vmatprep.subr.mxu0 %v1813
        %3345 = vmatpush1.msra.mxu0 %v1812
        %3346 = vmatprep.subr.mxu0 %v1809
        %3347 = vmatpush1.msra.mxu0 %v1808
        %3348 = vmatprep.subr.mxu0 %v1805
        %3349 = vmatpush1.msra.mxu0 %v1804
        %3350 = vmatprep.subr.mxu0 %v1801
        %3351 = vmatpush1.msra.mxu0 %v1800
        %3352 = vmatprep.subr.mxu0 %v1797
        %3353 = vmatpush1.msra.mxu0 %v1796
        %3354 = vmatprep.subr.mxu0 %v1793
        %3355 = vmatpush1.msra.mxu0 %v1792
        %3356 = vmatprep.subr.mxu0 %v1789
        %3357 = vmatpush1.msra.mxu0 %v1788
        %3358 = vmatprep.subr.mxu0 %v1785
        %3359 = vmatpush1.msra.mxu0 %v1784
        %3360 = vmatprep.subr.mxu0 %v1781
        %3361 = vmatpush1.msra.mxu0 %v1780
        %3362 = vmatprep.subr.mxu0 %v1905
        %3363 = vmatpush2.msra.mxu0 %v1904
        %3364 = vmatprep.subr.mxu0 %v1901
        %3365 = vmatpush2.msra.mxu0 %v1900
        %3366 = vmatprep.subr.mxu0 %v1897
        %3367 = vmatpush2.msra.mxu0 %v1896
        %3368 = vmatprep.subr.mxu0 %v1893
        %3369 = vmatpush2.msra.mxu0 %v1892
        %3370 = vmatprep.subr.mxu0 %v1889
        %3371 = vmatpush2.msra.mxu0 %v1888
        %3372 = vmatprep.subr.mxu0 %v1885
        %3373 = vmatpush2.msra.mxu0 %v1884
        %3374 = vmatprep.subr.mxu0 %v1881
        %3375 = vmatpush2.msra.mxu0 %v1880
        %3376 = vmatprep.subr.mxu0 %v1877
        %3377 = vmatpush2.msra.mxu0 %v1876
        %3378 = vmatprep.subr.mxu0 %v1873
        %3379 = vmatpush2.msra.mxu0 %v1872
        %3380 = vmatprep.subr.mxu0 %v1869
        %3381 = vmatpush2.msra.mxu0 %v1868
        %3382 = vmatprep.subr.mxu0 %v1865
        %3383 = vmatpush2.msra.mxu0 %v1864
        %3384 = vmatprep.subr.mxu0 %v1861
        %3385 = vmatpush2.msra.mxu0 %v1860
        %3386 = vmatprep.subr.mxu0 %v1857
        %3387 = vmatpush2.msra.mxu0 %v1856
        %3388 = vmatprep.subr.mxu0 %v1853
        %3389 = vmatpush2.msra.mxu0 %v1852
        %3390 = vmatprep.subr.mxu0 %v1849
        %3391 = vmatpush2.msra.mxu0 %v1848
        %3392 = vmatprep.subr.mxu0 %v1845
        %3393 = vmatpush2.msra.mxu0 %v1844
        %3394 = vmatprep.mubr.f32.mxu0 %v2400
        %3395 = vmatmul.mubr.f32.gmra.mxu0 %v2396
        %v3396 = vpop.f32.mrf.mxu0
        %v3397 = vadd.f32 %v3326, %v3396
        %v3398 = vpop.f32.mrf.mxu0
        %v3399 = vadd.f32 %v3328, %v3398
        %3400 = vdwg.mxu0
        %3401 = vmatprep.subr.mxu0 %v1969
        %3402 = vmatpush1.msra.mxu0 %v1968
        %3403 = vmatprep.subr.mxu0 %v1965
        %3404 = vmatpush1.msra.mxu0 %v1964
        %3405 = vmatprep.subr.mxu0 %v1961
        %3406 = vmatpush1.msra.mxu0 %v1960
        %3407 = vmatprep.subr.mxu0 %v1957
        %3408 = vmatpush1.msra.mxu0 %v1956
        %3409 = vmatprep.subr.mxu0 %v1953
        %3410 = vmatpush1.msra.mxu0 %v1952
        %3411 = vmatprep.subr.mxu0 %v1949
        %3412 = vmatpush1.msra.mxu0 %v1948
        %3413 = vmatprep.subr.mxu0 %v1945
        %3414 = vmatpush1.msra.mxu0 %v1944
        %3415 = vmatprep.subr.mxu0 %v1941
        %3416 = vmatpush1.msra.mxu0 %v1940
        %3417 = vmatprep.subr.mxu0 %v1937
        %3418 = vmatpush1.msra.mxu0 %v1936
        %3419 = vmatprep.subr.mxu0 %v1933
        %3420 = vmatpush1.msra.mxu0 %v1932
        %3421 = vmatprep.subr.mxu0 %v1929
        %3422 = vmatpush1.msra.mxu0 %v1928
        %3423 = vmatprep.subr.mxu0 %v1925
        %3424 = vmatpush1.msra.mxu0 %v1924
        %3425 = vmatprep.subr.mxu0 %v1921
        %3426 = vmatpush1.msra.mxu0 %v1920
        %3427 = vmatprep.subr.mxu0 %v1917
        %3428 = vmatpush1.msra.mxu0 %v1916
        %3429 = vmatprep.subr.mxu0 %v1913
        %3430 = vmatpush1.msra.mxu0 %v1912
        %3431 = vmatprep.subr.mxu0 %v1909
        %3432 = vmatpush1.msra.mxu0 %v1908
        %3433 = vmatprep.subr.mxu0 %v2033
        %3434 = vmatpush2.msra.mxu0 %v2032
        %3435 = vmatprep.subr.mxu0 %v2029
        %3436 = vmatpush2.msra.mxu0 %v2028
        %3437 = vmatprep.subr.mxu0 %v2025
        %3438 = vmatpush2.msra.mxu0 %v2024
        %3439 = vmatprep.subr.mxu0 %v2021
        %3440 = vmatpush2.msra.mxu0 %v2020
        %3441 = vmatprep.subr.mxu0 %v2017
        %3442 = vmatpush2.msra.mxu0 %v2016
        %3443 = vmatprep.subr.mxu0 %v2013
        %3444 = vmatpush2.msra.mxu0 %v2012
        %3445 = vmatprep.subr.mxu0 %v2009
        %3446 = vmatpush2.msra.mxu0 %v2008
        %3447 = vmatprep.subr.mxu0 %v2005
        %3448 = vmatpush2.msra.mxu0 %v2004
        %3449 = vmatprep.subr.mxu0 %v2001
        %3450 = vmatpush2.msra.mxu0 %v2000
        %3451 = vmatprep.subr.mxu0 %v1997
        %3452 = vmatpush2.msra.mxu0 %v1996
        %3453 = vmatprep.subr.mxu0 %v1993
        %3454 = vmatpush2.msra.mxu0 %v1992
        %3455 = vmatprep.subr.mxu0 %v1989
        %3456 = vmatpush2.msra.mxu0 %v1988
        %3457 = vmatprep.subr.mxu0 %v1985
        %3458 = vmatpush2.msra.mxu0 %v1984
        %3459 = vmatprep.subr.mxu0 %v1981
        %3460 = vmatpush2.msra.mxu0 %v1980
        %3461 = vmatprep.subr.mxu0 %v1977
        %3462 = vmatpush2.msra.mxu0 %v1976
        %3463 = vmatprep.subr.mxu0 %v1973
        %3464 = vmatpush2.msra.mxu0 %v1972
        %3465 = vmatprep.mubr.f32.mxu0 %v2408
        %3466 = vmatmul.mubr.f32.gmra.mxu0 %v2404
        %v3467 = vpop.f32.mrf.mxu0
        %v3468 = vadd.f32 %v3397, %v3467
        %v3469 = vpop.f32.mrf.mxu0
        %v3470 = vadd.f32 %v3399, %v3469
        %3471 = vdwg.mxu0
        %3472 = vmatprep.subr.mxu0 %v2097
        %3473 = vmatpush1.msra.mxu0 %v2096
        %3474 = vmatprep.subr.mxu0 %v2093
        %3475 = vmatpush1.msra.mxu0 %v2092
        %3476 = vmatprep.subr.mxu0 %v2089
        %3477 = vmatpush1.msra.mxu0 %v2088
        %3478 = vmatprep.subr.mxu0 %v2085
        %3479 = vmatpush1.msra.mxu0 %v2084
        %3480 = vmatprep.subr.mxu0 %v2081
        %3481 = vmatpush1.msra.mxu0 %v2080
        %3482 = vmatprep.subr.mxu0 %v2077
        %3483 = vmatpush1.msra.mxu0 %v2076
        %3484 = vmatprep.subr.mxu0 %v2073
        %3485 = vmatpush1.msra.mxu0 %v2072
        %3486 = vmatprep.subr.mxu0 %v2069
        %3487 = vmatpush1.msra.mxu0 %v2068
        %3488 = vmatprep.subr.mxu0 %v2065
        %3489 = vmatpush1.msra.mxu0 %v2064
        %3490 = vmatprep.subr.mxu0 %v2061
        %3491 = vmatpush1.msra.mxu0 %v2060
        %3492 = vmatprep.subr.mxu0 %v2057
        %3493 = vmatpush1.msra.mxu0 %v2056
        %3494 = vmatprep.subr.mxu0 %v2053
        %3495 = vmatpush1.msra.mxu0 %v2052
        %3496 = vmatprep.subr.mxu0 %v2049
        %3497 = vmatpush1.msra.mxu0 %v2048
        %3498 = vmatprep.subr.mxu0 %v2045
        %3499 = vmatpush1.msra.mxu0 %v2044
        %3500 = vmatprep.subr.mxu0 %v2041
        %3501 = vmatpush1.msra.mxu0 %v2040
        %3502 = vmatprep.subr.mxu0 %v2037
        %3503 = vmatpush1.msra.mxu0 %v2036
        %3504 = vmatprep.subr.mxu0 %v2161
        %3505 = vmatpush2.msra.mxu0 %v2160
        %3506 = vmatprep.subr.mxu0 %v2157
        %3507 = vmatpush2.msra.mxu0 %v2156
        %3508 = vmatprep.subr.mxu0 %v2153
        %3509 = vmatpush2.msra.mxu0 %v2152
        %3510 = vmatprep.subr.mxu0 %v2149
        %3511 = vmatpush2.msra.mxu0 %v2148
        %3512 = vmatprep.subr.mxu0 %v2145
        %3513 = vmatpush2.msra.mxu0 %v2144
        %3514 = vmatprep.subr.mxu0 %v2141
        %3515 = vmatpush2.msra.mxu0 %v2140
        %3516 = vmatprep.subr.mxu0 %v2137
        %3517 = vmatpush2.msra.mxu0 %v2136
        %3518 = vmatprep.subr.mxu0 %v2133
        %3519 = vmatpush2.msra.mxu0 %v2132
        %3520 = vmatprep.subr.mxu0 %v2129
        %3521 = vmatpush2.msra.mxu0 %v2128
        %3522 = vmatprep.subr.mxu0 %v2125
        %3523 = vmatpush2.msra.mxu0 %v2124
        %3524 = vmatprep.subr.mxu0 %v2121
        %3525 = vmatpush2.msra.mxu0 %v2120
        %3526 = vmatprep.subr.mxu0 %v2117
        %3527 = vmatpush2.msra.mxu0 %v2116
        %3528 = vmatprep.subr.mxu0 %v2113
        %3529 = vmatpush2.msra.mxu0 %v2112
        %3530 = vmatprep.subr.mxu0 %v2109
        %3531 = vmatpush2.msra.mxu0 %v2108
        %3532 = vmatprep.subr.mxu0 %v2105
        %3533 = vmatpush2.msra.mxu0 %v2104
        %3534 = vmatprep.subr.mxu0 %v2101
        %3535 = vmatpush2.msra.mxu0 %v2100
        %3536 = vmatprep.mubr.f32.mxu0 %v2416
        %3537 = vmatmul.mubr.f32.gmra.mxu0 %v2412
        %v3538 = vpop.f32.mrf.mxu0
        %v3539 = vadd.f32 %v3468, %v3538
        %v3540 = vpop.f32.mrf.mxu0
        %v3541 = vadd.f32 %v3470, %v3540
        %3542 = vdwg.mxu0
        %3543 = vmatprep.subr.mxu0 %v2225
        %3544 = vmatpush1.msra.mxu0 %v2224
        %3545 = vmatprep.subr.mxu0 %v2221
        %3546 = vmatpush1.msra.mxu0 %v2220
        %3547 = vmatprep.subr.mxu0 %v2217
        %3548 = vmatpush1.msra.mxu0 %v2216
        %3549 = vmatprep.subr.mxu0 %v2213
        %3550 = vmatpush1.msra.mxu0 %v2212
        %3551 = vmatprep.subr.mxu0 %v2209
        %3552 = vmatpush1.msra.mxu0 %v2208
        %3553 = vmatprep.subr.mxu0 %v2205
        %3554 = vmatpush1.msra.mxu0 %v2204
        %3555 = vmatprep.subr.mxu0 %v2201
        %3556 = vmatpush1.msra.mxu0 %v2200
        %3557 = vmatprep.subr.mxu0 %v2197
        %3558 = vmatpush1.msra.mxu0 %v2196
        %3559 = vmatprep.subr.mxu0 %v2193
        %3560 = vmatpush1.msra.mxu0 %v2192
        %3561 = vmatprep.subr.mxu0 %v2189
        %3562 = vmatpush1.msra.mxu0 %v2188
        %3563 = vmatprep.subr.mxu0 %v2185
        %3564 = vmatpush1.msra.mxu0 %v2184
        %3565 = vmatprep.subr.mxu0 %v2181
        %3566 = vmatpush1.msra.mxu0 %v2180
        %3567 = vmatprep.subr.mxu0 %v2177
        %3568 = vmatpush1.msra.mxu0 %v2176
        %3569 = vmatprep.subr.mxu0 %v2173
        %3570 = vmatpush1.msra.mxu0 %v2172
        %3571 = vmatprep.subr.mxu0 %v2169
        %3572 = vmatpush1.msra.mxu0 %v2168
        %3573 = vmatprep.subr.mxu0 %v2165
        %3574 = vmatpush1.msra.mxu0 %v2164
        %3575 = vmatprep.subr.mxu0 %v2289
        %3576 = vmatpush2.msra.mxu0 %v2288
        %3577 = vmatprep.subr.mxu0 %v2285
        %3578 = vmatpush2.msra.mxu0 %v2284
        %3579 = vmatprep.subr.mxu0 %v2281
        %3580 = vmatpush2.msra.mxu0 %v2280
        %3581 = vmatprep.subr.mxu0 %v2277
        %3582 = vmatpush2.msra.mxu0 %v2276
        %3583 = vmatprep.subr.mxu0 %v2273
        %3584 = vmatpush2.msra.mxu0 %v2272
        %3585 = vmatprep.subr.mxu0 %v2269
        %3586 = vmatpush2.msra.mxu0 %v2268
        %3587 = vmatprep.subr.mxu0 %v2265
        %3588 = vmatpush2.msra.mxu0 %v2264
        %3589 = vmatprep.subr.mxu0 %v2261
        %3590 = vmatpush2.msra.mxu0 %v2260
        %3591 = vmatprep.subr.mxu0 %v2257
        %3592 = vmatpush2.msra.mxu0 %v2256
        %3593 = vmatprep.subr.mxu0 %v2253
        %3594 = vmatpush2.msra.mxu0 %v2252
        %3595 = vmatprep.subr.mxu0 %v2249
        %3596 = vmatpush2.msra.mxu0 %v2248
        %3597 = vmatprep.subr.mxu0 %v2245
        %3598 = vmatpush2.msra.mxu0 %v2244
        %3599 = vmatprep.subr.mxu0 %v2241
        %3600 = vmatpush2.msra.mxu0 %v2240
        %3601 = vmatprep.subr.mxu0 %v2237
        %3602 = vmatpush2.msra.mxu0 %v2236
        %3603 = vmatprep.subr.mxu0 %v2233
        %3604 = vmatpush2.msra.mxu0 %v2232
        %3605 = vmatprep.subr.mxu0 %v2229
        %3606 = vmatpush2.msra.mxu0 %v2228
        %3607 = vmatprep.mubr.f32.mxu0 %v2424
        %3608 = vmatmul.mubr.f32.gmra.mxu0 %v2420
        %v3609 = vpop.f32.mrf.mxu0
        %v3610 = vadd.f32 %v3539, %v3609
        %v3611 = vpop.f32.mrf.mxu0
        %v3612 = vadd.f32 %v3541, %v3611
        %3613 = vdwg.mxu0
        %3614 = vmatprep.subr.mxu0 %v307
        %3615 = vmatpush1.msra.mxu0 %v306
        %3616 = vmatprep.subr.mxu0 %v303
        %3617 = vmatpush1.msra.mxu0 %v302
        %3618 = vmatprep.subr.mxu0 %v299
        %3619 = vmatpush1.msra.mxu0 %v298
        %3620 = vmatprep.subr.mxu0 %v295
        %3621 = vmatpush1.msra.mxu0 %v294
        %3622 = vmatprep.subr.mxu0 %v291
        %3623 = vmatpush1.msra.mxu0 %v290
        %3624 = vmatprep.subr.mxu0 %v287
        %3625 = vmatpush1.msra.mxu0 %v286
        %3626 = vmatprep.subr.mxu0 %v283
        %3627 = vmatpush1.msra.mxu0 %v282
        %3628 = vmatprep.subr.mxu0 %v279
        %3629 = vmatpush1.msra.mxu0 %v278
        %3630 = vmatprep.subr.mxu0 %v275
        %3631 = vmatpush1.msra.mxu0 %v274
        %3632 = vmatprep.subr.mxu0 %v271
        %3633 = vmatpush1.msra.mxu0 %v270
        %3634 = vmatprep.subr.mxu0 %v267
        %3635 = vmatpush1.msra.mxu0 %v266
        %3636 = vmatprep.subr.mxu0 %v263
        %3637 = vmatpush1.msra.mxu0 %v262
        %3638 = vmatprep.subr.mxu0 %v259
        %3639 = vmatpush1.msra.mxu0 %v258
        %3640 = vmatprep.subr.mxu0 %v255
        %3641 = vmatpush1.msra.mxu0 %v254
        %3642 = vmatprep.subr.mxu0 %v251
        %3643 = vmatpush1.msra.mxu0 %v250
        %3644 = vmatprep.subr.mxu0 %v247
        %3645 = vmatpush1.msra.mxu0 %v246
        %3646 = vmatprep.subr.mxu0 %v371
        %3647 = vmatpush2.msra.mxu0 %v370
        %3648 = vmatprep.subr.mxu0 %v367
        %3649 = vmatpush2.msra.mxu0 %v366
        %3650 = vmatprep.subr.mxu0 %v363
        %3651 = vmatpush2.msra.mxu0 %v362
        %3652 = vmatprep.subr.mxu0 %v359
        %3653 = vmatpush2.msra.mxu0 %v358
        %3654 = vmatprep.subr.mxu0 %v355
        %3655 = vmatpush2.msra.mxu0 %v354
        %3656 = vmatprep.subr.mxu0 %v351
        %3657 = vmatpush2.msra.mxu0 %v350
        %3658 = vmatprep.subr.mxu0 %v347
        %3659 = vmatpush2.msra.mxu0 %v346
        %3660 = vmatprep.subr.mxu0 %v343
        %3661 = vmatpush2.msra.mxu0 %v342
        %3662 = vmatprep.subr.mxu0 %v339
        %3663 = vmatpush2.msra.mxu0 %v338
        %3664 = vmatprep.subr.mxu0 %v335
        %3665 = vmatpush2.msra.mxu0 %v334
        %3666 = vmatprep.subr.mxu0 %v331
        %3667 = vmatpush2.msra.mxu0 %v330
        %3668 = vmatprep.subr.mxu0 %v327
        %3669 = vmatpush2.msra.mxu0 %v326
        %3670 = vmatprep.subr.mxu0 %v323
        %3671 = vmatpush2.msra.mxu0 %v322
        %3672 = vmatprep.subr.mxu0 %v319
        %3673 = vmatpush2.msra.mxu0 %v318
        %3674 = vmatprep.subr.mxu0 %v315
        %3675 = vmatpush2.msra.mxu0 %v314
        %3676 = vmatprep.subr.mxu0 %v311
        %3677 = vmatpush2.msra.mxu0 %v310
        %3678 = vmatprep.mubr.f32.mxu0 %v2304
        %3679 = vmatmul.mubr.f32.gmra.mxu0 %v2300
        %v3680 = vpop.f32.mrf.mxu0
        %v3681 = vadd.f32 %v2469, %v3680
        %v3682 = vpop.f32.mrf.mxu0
        %v3683 = vadd.f32 %v2473, %v3682
        %3684 = vdwg.mxu0
        %3685 = vmatprep.subr.mxu0 %v435
        %3686 = vmatpush1.msra.mxu0 %v434
        %3687 = vmatprep.subr.mxu0 %v431
        %3688 = vmatpush1.msra.mxu0 %v430
        %3689 = vmatprep.subr.mxu0 %v427
        %3690 = vmatpush1.msra.mxu0 %v426
        %3691 = vmatprep.subr.mxu0 %v423
        %3692 = vmatpush1.msra.mxu0 %v422
        %3693 = vmatprep.subr.mxu0 %v419
        %3694 = vmatpush1.msra.mxu0 %v418
        %3695 = vmatprep.subr.mxu0 %v415
        %3696 = vmatpush1.msra.mxu0 %v414
        %3697 = vmatprep.subr.mxu0 %v411
        %3698 = vmatpush1.msra.mxu0 %v410
        %3699 = vmatprep.subr.mxu0 %v407
        %3700 = vmatpush1.msra.mxu0 %v406
        %3701 = vmatprep.subr.mxu0 %v403
        %3702 = vmatpush1.msra.mxu0 %v402
        %3703 = vmatprep.subr.mxu0 %v399
        %3704 = vmatpush1.msra.mxu0 %v398
        %3705 = vmatprep.subr.mxu0 %v395
        %3706 = vmatpush1.msra.mxu0 %v394
        %3707 = vmatprep.subr.mxu0 %v391
        %3708 = vmatpush1.msra.mxu0 %v390
        %3709 = vmatprep.subr.mxu0 %v387
        %3710 = vmatpush1.msra.mxu0 %v386
        %3711 = vmatprep.subr.mxu0 %v383
        %3712 = vmatpush1.msra.mxu0 %v382
        %3713 = vmatprep.subr.mxu0 %v379
        %3714 = vmatpush1.msra.mxu0 %v378
        %3715 = vmatprep.subr.mxu0 %v375
        %3716 = vmatpush1.msra.mxu0 %v374
        %3717 = vmatprep.subr.mxu0 %v499
        %3718 = vmatpush2.msra.mxu0 %v498
        %3719 = vmatprep.subr.mxu0 %v495
        %3720 = vmatpush2.msra.mxu0 %v494
        %3721 = vmatprep.subr.mxu0 %v491
        %3722 = vmatpush2.msra.mxu0 %v490
        %3723 = vmatprep.subr.mxu0 %v487
        %3724 = vmatpush2.msra.mxu0 %v486
        %3725 = vmatprep.subr.mxu0 %v483
        %3726 = vmatpush2.msra.mxu0 %v482
        %3727 = vmatprep.subr.mxu0 %v479
        %3728 = vmatpush2.msra.mxu0 %v478
        %3729 = vmatprep.subr.mxu0 %v475
        %3730 = vmatpush2.msra.mxu0 %v474
        %3731 = vmatprep.subr.mxu0 %v471
        %3732 = vmatpush2.msra.mxu0 %v470
        %3733 = vmatprep.subr.mxu0 %v467
        %3734 = vmatpush2.msra.mxu0 %v466
        %3735 = vmatprep.subr.mxu0 %v463
        %3736 = vmatpush2.msra.mxu0 %v462
        %3737 = vmatprep.subr.mxu0 %v459
        %3738 = vmatpush2.msra.mxu0 %v458
        %3739 = vmatprep.subr.mxu0 %v455
        %3740 = vmatpush2.msra.mxu0 %v454
        %3741 = vmatprep.subr.mxu0 %v451
        %3742 = vmatpush2.msra.mxu0 %v450
        %3743 = vmatprep.subr.mxu0 %v447
        %3744 = vmatpush2.msra.mxu0 %v446
        %3745 = vmatprep.subr.mxu0 %v443
        %3746 = vmatpush2.msra.mxu0 %v442
        %3747 = vmatprep.subr.mxu0 %v439
        %3748 = vmatpush2.msra.mxu0 %v438
        %3749 = vmatprep.mubr.f32.mxu0 %v2312
        %3750 = vmatmul.mubr.f32.gmra.mxu0 %v2308
        %v3751 = vpop.f32.mrf.mxu0
        %v3752 = vadd.f32 %v3681, %v3751
        %v3753 = vpop.f32.mrf.mxu0
        %v3754 = vadd.f32 %v3683, %v3753
        %3755 = vdwg.mxu0
        %3756 = vmatprep.subr.mxu0 %v563
        %3757 = vmatpush1.msra.mxu0 %v562
        %3758 = vmatprep.subr.mxu0 %v559
        %3759 = vmatpush1.msra.mxu0 %v558
        %3760 = vmatprep.subr.mxu0 %v555
        %3761 = vmatpush1.msra.mxu0 %v554
        %3762 = vmatprep.subr.mxu0 %v551
        %3763 = vmatpush1.msra.mxu0 %v550
        %3764 = vmatprep.subr.mxu0 %v547
        %3765 = vmatpush1.msra.mxu0 %v546
        %3766 = vmatprep.subr.mxu0 %v543
        %3767 = vmatpush1.msra.mxu0 %v542
        %3768 = vmatprep.subr.mxu0 %v539
        %3769 = vmatpush1.msra.mxu0 %v538
        %3770 = vmatprep.subr.mxu0 %v535
        %3771 = vmatpush1.msra.mxu0 %v534
        %3772 = vmatprep.subr.mxu0 %v531
        %3773 = vmatpush1.msra.mxu0 %v530
        %3774 = vmatprep.subr.mxu0 %v527
        %3775 = vmatpush1.msra.mxu0 %v526
        %3776 = vmatprep.subr.mxu0 %v523
        %3777 = vmatpush1.msra.mxu0 %v522
        %3778 = vmatprep.subr.mxu0 %v519
        %3779 = vmatpush1.msra.mxu0 %v518
        %3780 = vmatprep.subr.mxu0 %v515
        %3781 = vmatpush1.msra.mxu0 %v514
        %3782 = vmatprep.subr.mxu0 %v511
        %3783 = vmatpush1.msra.mxu0 %v510
        %3784 = vmatprep.subr.mxu0 %v507
        %3785 = vmatpush1.msra.mxu0 %v506
        %3786 = vmatprep.subr.mxu0 %v503
        %3787 = vmatpush1.msra.mxu0 %v502
        %3788 = vmatprep.subr.mxu0 %v627
        %3789 = vmatpush2.msra.mxu0 %v626
        %3790 = vmatprep.subr.mxu0 %v623
        %3791 = vmatpush2.msra.mxu0 %v622
        %3792 = vmatprep.subr.mxu0 %v619
        %3793 = vmatpush2.msra.mxu0 %v618
        %3794 = vmatprep.subr.mxu0 %v615
        %3795 = vmatpush2.msra.mxu0 %v614
        %3796 = vmatprep.subr.mxu0 %v611
        %3797 = vmatpush2.msra.mxu0 %v610
        %3798 = vmatprep.subr.mxu0 %v607
        %3799 = vmatpush2.msra.mxu0 %v606
        %3800 = vmatprep.subr.mxu0 %v603
        %3801 = vmatpush2.msra.mxu0 %v602
        %3802 = vmatprep.subr.mxu0 %v599
        %3803 = vmatpush2.msra.mxu0 %v598
        %3804 = vmatprep.subr.mxu0 %v595
        %3805 = vmatpush2.msra.mxu0 %v594
        %3806 = vmatprep.subr.mxu0 %v591
        %3807 = vmatpush2.msra.mxu0 %v590
        %3808 = vmatprep.subr.mxu0 %v587
        %3809 = vmatpush2.msra.mxu0 %v586
        %3810 = vmatprep.subr.mxu0 %v583
        %3811 = vmatpush2.msra.mxu0 %v582
        %3812 = vmatprep.subr.mxu0 %v579
        %3813 = vmatpush2.msra.mxu0 %v578
        %3814 = vmatprep.subr.mxu0 %v575
        %3815 = vmatpush2.msra.mxu0 %v574
        %3816 = vmatprep.subr.mxu0 %v571
        %3817 = vmatpush2.msra.mxu0 %v570
        %3818 = vmatprep.subr.mxu0 %v567
        %3819 = vmatpush2.msra.mxu0 %v566
        %3820 = vmatprep.mubr.f32.mxu0 %v2320
        %3821 = vmatmul.mubr.f32.gmra.mxu0 %v2316
        %v3822 = vpop.f32.mrf.mxu0
        %v3823 = vadd.f32 %v3752, %v3822
        %v3824 = vpop.f32.mrf.mxu0
        %v3825 = vadd.f32 %v3754, %v3824
        %3826 = vdwg.mxu0
        %3827 = vmatprep.subr.mxu0 %v691
        %3828 = vmatpush1.msra.mxu0 %v690
        %3829 = vmatprep.subr.mxu0 %v687
        %3830 = vmatpush1.msra.mxu0 %v686
        %3831 = vmatprep.subr.mxu0 %v683
        %3832 = vmatpush1.msra.mxu0 %v682
        %3833 = vmatprep.subr.mxu0 %v679
        %3834 = vmatpush1.msra.mxu0 %v678
        %3835 = vmatprep.subr.mxu0 %v675
        %3836 = vmatpush1.msra.mxu0 %v674
        %3837 = vmatprep.subr.mxu0 %v671
        %3838 = vmatpush1.msra.mxu0 %v670
        %3839 = vmatprep.subr.mxu0 %v667
        %3840 = vmatpush1.msra.mxu0 %v666
        %3841 = vmatprep.subr.mxu0 %v663
        %3842 = vmatpush1.msra.mxu0 %v662
        %3843 = vmatprep.subr.mxu0 %v659
        %3844 = vmatpush1.msra.mxu0 %v658
        %3845 = vmatprep.subr.mxu0 %v655
        %3846 = vmatpush1.msra.mxu0 %v654
        %3847 = vmatprep.subr.mxu0 %v651
        %3848 = vmatpush1.msra.mxu0 %v650
        %3849 = vmatprep.subr.mxu0 %v647
        %3850 = vmatpush1.msra.mxu0 %v646
        %3851 = vmatprep.subr.mxu0 %v643
        %3852 = vmatpush1.msra.mxu0 %v642
        %3853 = vmatprep.subr.mxu0 %v639
        %3854 = vmatpush1.msra.mxu0 %v638
        %3855 = vmatprep.subr.mxu0 %v635
        %3856 = vmatpush1.msra.mxu0 %v634
        %3857 = vmatprep.subr.mxu0 %v631
        %3858 = vmatpush1.msra.mxu0 %v630
        %3859 = vmatprep.subr.mxu0 %v755
        %3860 = vmatpush2.msra.mxu0 %v754
        %3861 = vmatprep.subr.mxu0 %v751
        %3862 = vmatpush2.msra.mxu0 %v750
        %3863 = vmatprep.subr.mxu0 %v747
        %3864 = vmatpush2.msra.mxu0 %v746
        %3865 = vmatprep.subr.mxu0 %v743
        %3866 = vmatpush2.msra.mxu0 %v742
        %3867 = vmatprep.subr.mxu0 %v739
        %3868 = vmatpush2.msra.mxu0 %v738
        %3869 = vmatprep.subr.mxu0 %v735
        %3870 = vmatpush2.msra.mxu0 %v734
        %3871 = vmatprep.subr.mxu0 %v731
        %3872 = vmatpush2.msra.mxu0 %v730
        %3873 = vmatprep.subr.mxu0 %v727
        %3874 = vmatpush2.msra.mxu0 %v726
        %3875 = vmatprep.subr.mxu0 %v723
        %3876 = vmatpush2.msra.mxu0 %v722
        %3877 = vmatprep.subr.mxu0 %v719
        %3878 = vmatpush2.msra.mxu0 %v718
        %3879 = vmatprep.subr.mxu0 %v715
        %3880 = vmatpush2.msra.mxu0 %v714
        %3881 = vmatprep.subr.mxu0 %v711
        %3882 = vmatpush2.msra.mxu0 %v710
        %3883 = vmatprep.subr.mxu0 %v707
        %3884 = vmatpush2.msra.mxu0 %v706
        %3885 = vmatprep.subr.mxu0 %v703
        %3886 = vmatpush2.msra.mxu0 %v702
        %3887 = vmatprep.subr.mxu0 %v699
        %3888 = vmatpush2.msra.mxu0 %v698
        %3889 = vmatprep.subr.mxu0 %v695
        %3890 = vmatpush2.msra.mxu0 %v694
        %3891 = vmatprep.mubr.f32.mxu0 %v2328
        %3892 = vmatmul.mubr.f32.gmra.mxu0 %v2324
        %v3893 = vpop.f32.mrf.mxu0
        %v3894 = vadd.f32 %v3823, %v3893
        %v3895 = vpop.f32.mrf.mxu0
        %v3896 = vadd.f32 %v3825, %v3895
        %3897 = vdwg.mxu0
        %3898 = vmatprep.subr.mxu0 %v819
        %3899 = vmatpush1.msra.mxu0 %v818
        %3900 = vmatprep.subr.mxu0 %v815
        %3901 = vmatpush1.msra.mxu0 %v814
        %3902 = vmatprep.subr.mxu0 %v811
        %3903 = vmatpush1.msra.mxu0 %v810
        %3904 = vmatprep.subr.mxu0 %v807
        %3905 = vmatpush1.msra.mxu0 %v806
        %3906 = vmatprep.subr.mxu0 %v803
        %3907 = vmatpush1.msra.mxu0 %v802
        %3908 = vmatprep.subr.mxu0 %v799
        %3909 = vmatpush1.msra.mxu0 %v798
        %3910 = vmatprep.subr.mxu0 %v795
        %3911 = vmatpush1.msra.mxu0 %v794
        %3912 = vmatprep.subr.mxu0 %v791
        %3913 = vmatpush1.msra.mxu0 %v790
        %3914 = vmatprep.subr.mxu0 %v787
        %3915 = vmatpush1.msra.mxu0 %v786
        %3916 = vmatprep.subr.mxu0 %v783
        %3917 = vmatpush1.msra.mxu0 %v782
        %3918 = vmatprep.subr.mxu0 %v779
        %3919 = vmatpush1.msra.mxu0 %v778
        %3920 = vmatprep.subr.mxu0 %v775
        %3921 = vmatpush1.msra.mxu0 %v774
        %3922 = vmatprep.subr.mxu0 %v771
        %3923 = vmatpush1.msra.mxu0 %v770
        %3924 = vmatprep.subr.mxu0 %v767
        %3925 = vmatpush1.msra.mxu0 %v766
        %3926 = vmatprep.subr.mxu0 %v763
        %3927 = vmatpush1.msra.mxu0 %v762
        %3928 = vmatprep.subr.mxu0 %v759
        %3929 = vmatpush1.msra.mxu0 %v758
        %3930 = vmatprep.subr.mxu0 %v883
        %3931 = vmatpush2.msra.mxu0 %v882
        %3932 = vmatprep.subr.mxu0 %v879
        %3933 = vmatpush2.msra.mxu0 %v878
        %3934 = vmatprep.subr.mxu0 %v875
        %3935 = vmatpush2.msra.mxu0 %v874
        %3936 = vmatprep.subr.mxu0 %v871
        %3937 = vmatpush2.msra.mxu0 %v870
        %3938 = vmatprep.subr.mxu0 %v867
        %3939 = vmatpush2.msra.mxu0 %v866
        %3940 = vmatprep.subr.mxu0 %v863
        %3941 = vmatpush2.msra.mxu0 %v862
        %3942 = vmatprep.subr.mxu0 %v859
        %3943 = vmatpush2.msra.mxu0 %v858
        %3944 = vmatprep.subr.mxu0 %v855
        %3945 = vmatpush2.msra.mxu0 %v854
        %3946 = vmatprep.subr.mxu0 %v851
        %3947 = vmatpush2.msra.mxu0 %v850
        %3948 = vmatprep.subr.mxu0 %v847
        %3949 = vmatpush2.msra.mxu0 %v846
        %3950 = vmatprep.subr.mxu0 %v843
        %3951 = vmatpush2.msra.mxu0 %v842
        %3952 = vmatprep.subr.mxu0 %v839
        %3953 = vmatpush2.msra.mxu0 %v838
        %3954 = vmatprep.subr.mxu0 %v835
        %3955 = vmatpush2.msra.mxu0 %v834
        %3956 = vmatprep.subr.mxu0 %v831
        %3957 = vmatpush2.msra.mxu0 %v830
        %3958 = vmatprep.subr.mxu0 %v827
        %3959 = vmatpush2.msra.mxu0 %v826
        %3960 = vmatprep.subr.mxu0 %v823
        %3961 = vmatpush2.msra.mxu0 %v822
        %3962 = vmatprep.mubr.f32.mxu0 %v2336
        %3963 = vmatmul.mubr.f32.gmra.mxu0 %v2332
        %v3964 = vpop.f32.mrf.mxu0
        %v3965 = vadd.f32 %v3894, %v3964
        %v3966 = vpop.f32.mrf.mxu0
        %v3967 = vadd.f32 %v3896, %v3966
        %3968 = vdwg.mxu0
        %3969 = vmatprep.subr.mxu0 %v947
        %3970 = vmatpush1.msra.mxu0 %v946
        %3971 = vmatprep.subr.mxu0 %v943
        %3972 = vmatpush1.msra.mxu0 %v942
        %3973 = vmatprep.subr.mxu0 %v939
        %3974 = vmatpush1.msra.mxu0 %v938
        %3975 = vmatprep.subr.mxu0 %v935
        %3976 = vmatpush1.msra.mxu0 %v934
        %3977 = vmatprep.subr.mxu0 %v931
        %3978 = vmatpush1.msra.mxu0 %v930
        %3979 = vmatprep.subr.mxu0 %v927
        %3980 = vmatpush1.msra.mxu0 %v926
        %3981 = vmatprep.subr.mxu0 %v923
        %3982 = vmatpush1.msra.mxu0 %v922
        %3983 = vmatprep.subr.mxu0 %v919
        %3984 = vmatpush1.msra.mxu0 %v918
        %3985 = vmatprep.subr.mxu0 %v915
        %3986 = vmatpush1.msra.mxu0 %v914
        %3987 = vmatprep.subr.mxu0 %v911
        %3988 = vmatpush1.msra.mxu0 %v910
        %3989 = vmatprep.subr.mxu0 %v907
        %3990 = vmatpush1.msra.mxu0 %v906
        %3991 = vmatprep.subr.mxu0 %v903
        %3992 = vmatpush1.msra.mxu0 %v902
        %3993 = vmatprep.subr.mxu0 %v899
        %3994 = vmatpush1.msra.mxu0 %v898
        %3995 = vmatprep.subr.mxu0 %v895
        %3996 = vmatpush1.msra.mxu0 %v894
        %3997 = vmatprep.subr.mxu0 %v891
        %3998 = vmatpush1.msra.mxu0 %v890
        %3999 = vmatprep.subr.mxu0 %v887
        %4000 = vmatpush1.msra.mxu0 %v886
        %4001 = vmatprep.subr.mxu0 %v1011
        %4002 = vmatpush2.msra.mxu0 %v1010
        %4003 = vmatprep.subr.mxu0 %v1007
        %4004 = vmatpush2.msra.mxu0 %v1006
        %4005 = vmatprep.subr.mxu0 %v1003
        %4006 = vmatpush2.msra.mxu0 %v1002
        %4007 = vmatprep.subr.mxu0 %v999
        %4008 = vmatpush2.msra.mxu0 %v998
        %4009 = vmatprep.subr.mxu0 %v995
        %4010 = vmatpush2.msra.mxu0 %v994
        %4011 = vmatprep.subr.mxu0 %v991
        %4012 = vmatpush2.msra.mxu0 %v990
        %4013 = vmatprep.subr.mxu0 %v987
        %4014 = vmatpush2.msra.mxu0 %v986
        %4015 = vmatprep.subr.mxu0 %v983
        %4016 = vmatpush2.msra.mxu0 %v982
        %4017 = vmatprep.subr.mxu0 %v979
        %4018 = vmatpush2.msra.mxu0 %v978
        %4019 = vmatprep.subr.mxu0 %v975
        %4020 = vmatpush2.msra.mxu0 %v974
        %4021 = vmatprep.subr.mxu0 %v971
        %4022 = vmatpush2.msra.mxu0 %v970
        %4023 = vmatprep.subr.mxu0 %v967
        %4024 = vmatpush2.msra.mxu0 %v966
        %4025 = vmatprep.subr.mxu0 %v963
        %4026 = vmatpush2.msra.mxu0 %v962
        %4027 = vmatprep.subr.mxu0 %v959
        %4028 = vmatpush2.msra.mxu0 %v958
        %4029 = vmatprep.subr.mxu0 %v955
        %4030 = vmatpush2.msra.mxu0 %v954
        %4031 = vmatprep.subr.mxu0 %v951
        %4032 = vmatpush2.msra.mxu0 %v950
        %4033 = vmatprep.mubr.f32.mxu0 %v2344
        %4034 = vmatmul.mubr.f32.gmra.mxu0 %v2340
        %v4035 = vpop.f32.mrf.mxu0
        %v4036 = vadd.f32 %v3965, %v4035
        %v4037 = vpop.f32.mrf.mxu0
        %v4038 = vadd.f32 %v3967, %v4037
        %4039 = vdwg.mxu0
        %4040 = vmatprep.subr.mxu0 %v1075
        %4041 = vmatpush1.msra.mxu0 %v1074
        %4042 = vmatprep.subr.mxu0 %v1071
        %4043 = vmatpush1.msra.mxu0 %v1070
        %4044 = vmatprep.subr.mxu0 %v1067
        %4045 = vmatpush1.msra.mxu0 %v1066
        %4046 = vmatprep.subr.mxu0 %v1063
        %4047 = vmatpush1.msra.mxu0 %v1062
        %4048 = vmatprep.subr.mxu0 %v1059
        %4049 = vmatpush1.msra.mxu0 %v1058
        %4050 = vmatprep.subr.mxu0 %v1055
        %4051 = vmatpush1.msra.mxu0 %v1054
        %4052 = vmatprep.subr.mxu0 %v1051
        %4053 = vmatpush1.msra.mxu0 %v1050
        %4054 = vmatprep.subr.mxu0 %v1047
        %4055 = vmatpush1.msra.mxu0 %v1046
        %4056 = vmatprep.subr.mxu0 %v1043
        %4057 = vmatpush1.msra.mxu0 %v1042
        %4058 = vmatprep.subr.mxu0 %v1039
        %4059 = vmatpush1.msra.mxu0 %v1038
        %4060 = vmatprep.subr.mxu0 %v1035
        %4061 = vmatpush1.msra.mxu0 %v1034
        %4062 = vmatprep.subr.mxu0 %v1031
        %4063 = vmatpush1.msra.mxu0 %v1030
        %4064 = vmatprep.subr.mxu0 %v1027
        %4065 = vmatpush1.msra.mxu0 %v1026
        %4066 = vmatprep.subr.mxu0 %v1023
        %4067 = vmatpush1.msra.mxu0 %v1022
        %4068 = vmatprep.subr.mxu0 %v1019
        %4069 = vmatpush1.msra.mxu0 %v1018
        %4070 = vmatprep.subr.mxu0 %v1015
        %4071 = vmatpush1.msra.mxu0 %v1014
        %4072 = vmatprep.subr.mxu0 %v1139
        %4073 = vmatpush2.msra.mxu0 %v1138
        %4074 = vmatprep.subr.mxu0 %v1135
        %4075 = vmatpush2.msra.mxu0 %v1134
        %4076 = vmatprep.subr.mxu0 %v1131
        %4077 = vmatpush2.msra.mxu0 %v1130
        %4078 = vmatprep.subr.mxu0 %v1127
        %4079 = vmatpush2.msra.mxu0 %v1126
        %4080 = vmatprep.subr.mxu0 %v1123
        %4081 = vmatpush2.msra.mxu0 %v1122
        %4082 = vmatprep.subr.mxu0 %v1119
        %4083 = vmatpush2.msra.mxu0 %v1118
        %4084 = vmatprep.subr.mxu0 %v1115
        %4085 = vmatpush2.msra.mxu0 %v1114
        %4086 = vmatprep.subr.mxu0 %v1111
        %4087 = vmatpush2.msra.mxu0 %v1110
        %4088 = vmatprep.subr.mxu0 %v1107
        %4089 = vmatpush2.msra.mxu0 %v1106
        %4090 = vmatprep.subr.mxu0 %v1103
        %4091 = vmatpush2.msra.mxu0 %v1102
        %4092 = vmatprep.subr.mxu0 %v1099
        %4093 = vmatpush2.msra.mxu0 %v1098
        %4094 = vmatprep.subr.mxu0 %v1095
        %4095 = vmatpush2.msra.mxu0 %v1094
        %4096 = vmatprep.subr.mxu0 %v1091
        %4097 = vmatpush2.msra.mxu0 %v1090
        %4098 = vmatprep.subr.mxu0 %v1087
        %4099 = vmatpush2.msra.mxu0 %v1086
        %4100 = vmatprep.subr.mxu0 %v1083
        %4101 = vmatpush2.msra.mxu0 %v1082
        %4102 = vmatprep.subr.mxu0 %v1079
        %4103 = vmatpush2.msra.mxu0 %v1078
        %4104 = vmatprep.mubr.f32.mxu0 %v2352
        %4105 = vmatmul.mubr.f32.gmra.mxu0 %v2348
        %v4106 = vpop.f32.mrf.mxu0
        %v4107 = vadd.f32 %v4036, %v4106
        %v4108 = vpop.f32.mrf.mxu0
        %v4109 = vadd.f32 %v4038, %v4108
        %4110 = vdwg.mxu0
        %4111 = vmatprep.subr.mxu0 %v1203
        %4112 = vmatpush1.msra.mxu0 %v1202
        %4113 = vmatprep.subr.mxu0 %v1199
        %4114 = vmatpush1.msra.mxu0 %v1198
        %4115 = vmatprep.subr.mxu0 %v1195
        %4116 = vmatpush1.msra.mxu0 %v1194
        %4117 = vmatprep.subr.mxu0 %v1191
        %4118 = vmatpush1.msra.mxu0 %v1190
        %4119 = vmatprep.subr.mxu0 %v1187
        %4120 = vmatpush1.msra.mxu0 %v1186
        %4121 = vmatprep.subr.mxu0 %v1183
        %4122 = vmatpush1.msra.mxu0 %v1182
        %4123 = vmatprep.subr.mxu0 %v1179
        %4124 = vmatpush1.msra.mxu0 %v1178
        %4125 = vmatprep.subr.mxu0 %v1175
        %4126 = vmatpush1.msra.mxu0 %v1174
        %4127 = vmatprep.subr.mxu0 %v1171
        %4128 = vmatpush1.msra.mxu0 %v1170
        %4129 = vmatprep.subr.mxu0 %v1167
        %4130 = vmatpush1.msra.mxu0 %v1166
        %4131 = vmatprep.subr.mxu0 %v1163
        %4132 = vmatpush1.msra.mxu0 %v1162
        %4133 = vmatprep.subr.mxu0 %v1159
        %4134 = vmatpush1.msra.mxu0 %v1158
        %4135 = vmatprep.subr.mxu0 %v1155
        %4136 = vmatpush1.msra.mxu0 %v1154
        %4137 = vmatprep.subr.mxu0 %v1151
        %4138 = vmatpush1.msra.mxu0 %v1150
        %4139 = vmatprep.subr.mxu0 %v1147
        %4140 = vmatpush1.msra.mxu0 %v1146
        %4141 = vmatprep.subr.mxu0 %v1143
        %4142 = vmatpush1.msra.mxu0 %v1142
        %4143 = vmatprep.subr.mxu0 %v1267
        %4144 = vmatpush2.msra.mxu0 %v1266
        %4145 = vmatprep.subr.mxu0 %v1263
        %4146 = vmatpush2.msra.mxu0 %v1262
        %4147 = vmatprep.subr.mxu0 %v1259
        %4148 = vmatpush2.msra.mxu0 %v1258
        %4149 = vmatprep.subr.mxu0 %v1255
        %4150 = vmatpush2.msra.mxu0 %v1254
        %4151 = vmatprep.subr.mxu0 %v1251
        %4152 = vmatpush2.msra.mxu0 %v1250
        %4153 = vmatprep.subr.mxu0 %v1247
        %4154 = vmatpush2.msra.mxu0 %v1246
        %4155 = vmatprep.subr.mxu0 %v1243
        %4156 = vmatpush2.msra.mxu0 %v1242
        %4157 = vmatprep.subr.mxu0 %v1239
        %4158 = vmatpush2.msra.mxu0 %v1238
        %4159 = vmatprep.subr.mxu0 %v1235
        %4160 = vmatpush2.msra.mxu0 %v1234
        %4161 = vmatprep.subr.mxu0 %v1231
        %4162 = vmatpush2.msra.mxu0 %v1230
        %4163 = vmatprep.subr.mxu0 %v1227
        %4164 = vmatpush2.msra.mxu0 %v1226
        %4165 = vmatprep.subr.mxu0 %v1223
        %4166 = vmatpush2.msra.mxu0 %v1222
        %4167 = vmatprep.subr.mxu0 %v1219
        %4168 = vmatpush2.msra.mxu0 %v1218
        %4169 = vmatprep.subr.mxu0 %v1215
        %4170 = vmatpush2.msra.mxu0 %v1214
        %4171 = vmatprep.subr.mxu0 %v1211
        %4172 = vmatpush2.msra.mxu0 %v1210
        %4173 = vmatprep.subr.mxu0 %v1207
        %4174 = vmatpush2.msra.mxu0 %v1206
        %4175 = vmatprep.mubr.f32.mxu0 %v2360
        %4176 = vmatmul.mubr.f32.gmra.mxu0 %v2356
        %v4177 = vpop.f32.mrf.mxu0
        %v4178 = vadd.f32 %v4107, %v4177
        %v4179 = vpop.f32.mrf.mxu0
        %v4180 = vadd.f32 %v4109, %v4179
        %4181 = vdwg.mxu0
        %4182 = vmatprep.subr.mxu0 %v1331
        %4183 = vmatpush1.msra.mxu0 %v1330
        %4184 = vmatprep.subr.mxu0 %v1327
        %4185 = vmatpush1.msra.mxu0 %v1326
        %4186 = vmatprep.subr.mxu0 %v1323
        %4187 = vmatpush1.msra.mxu0 %v1322
        %4188 = vmatprep.subr.mxu0 %v1319
        %4189 = vmatpush1.msra.mxu0 %v1318
        %4190 = vmatprep.subr.mxu0 %v1315
        %4191 = vmatpush1.msra.mxu0 %v1314
        %4192 = vmatprep.subr.mxu0 %v1311
        %4193 = vmatpush1.msra.mxu0 %v1310
        %4194 = vmatprep.subr.mxu0 %v1307
        %4195 = vmatpush1.msra.mxu0 %v1306
        %4196 = vmatprep.subr.mxu0 %v1303
        %4197 = vmatpush1.msra.mxu0 %v1302
        %4198 = vmatprep.subr.mxu0 %v1299
        %4199 = vmatpush1.msra.mxu0 %v1298
        %4200 = vmatprep.subr.mxu0 %v1295
        %4201 = vmatpush1.msra.mxu0 %v1294
        %4202 = vmatprep.subr.mxu0 %v1291
        %4203 = vmatpush1.msra.mxu0 %v1290
        %4204 = vmatprep.subr.mxu0 %v1287
        %4205 = vmatpush1.msra.mxu0 %v1286
        %4206 = vmatprep.subr.mxu0 %v1283
        %4207 = vmatpush1.msra.mxu0 %v1282
        %4208 = vmatprep.subr.mxu0 %v1279
        %4209 = vmatpush1.msra.mxu0 %v1278
        %4210 = vmatprep.subr.mxu0 %v1275
        %4211 = vmatpush1.msra.mxu0 %v1274
        %4212 = vmatprep.subr.mxu0 %v1271
        %4213 = vmatpush1.msra.mxu0 %v1270
        %4214 = vmatprep.subr.mxu0 %v1395
        %4215 = vmatpush2.msra.mxu0 %v1394
        %4216 = vmatprep.subr.mxu0 %v1391
        %4217 = vmatpush2.msra.mxu0 %v1390
        %4218 = vmatprep.subr.mxu0 %v1387
        %4219 = vmatpush2.msra.mxu0 %v1386
        %4220 = vmatprep.subr.mxu0 %v1383
        %4221 = vmatpush2.msra.mxu0 %v1382
        %4222 = vmatprep.subr.mxu0 %v1379
        %4223 = vmatpush2.msra.mxu0 %v1378
        %4224 = vmatprep.subr.mxu0 %v1375
        %4225 = vmatpush2.msra.mxu0 %v1374
        %4226 = vmatprep.subr.mxu0 %v1371
        %4227 = vmatpush2.msra.mxu0 %v1370
        %4228 = vmatprep.subr.mxu0 %v1367
        %4229 = vmatpush2.msra.mxu0 %v1366
        %4230 = vmatprep.subr.mxu0 %v1363
        %4231 = vmatpush2.msra.mxu0 %v1362
        %4232 = vmatprep.subr.mxu0 %v1359
        %4233 = vmatpush2.msra.mxu0 %v1358
        %4234 = vmatprep.subr.mxu0 %v1355
        %4235 = vmatpush2.msra.mxu0 %v1354
        %4236 = vmatprep.subr.mxu0 %v1351
        %4237 = vmatpush2.msra.mxu0 %v1350
        %4238 = vmatprep.subr.mxu0 %v1347
        %4239 = vmatpush2.msra.mxu0 %v1346
        %4240 = vmatprep.subr.mxu0 %v1343
        %4241 = vmatpush2.msra.mxu0 %v1342
        %4242 = vmatprep.subr.mxu0 %v1339
        %4243 = vmatpush2.msra.mxu0 %v1338
        %4244 = vmatprep.subr.mxu0 %v1335
        %4245 = vmatpush2.msra.mxu0 %v1334
        %4246 = vmatprep.mubr.f32.mxu0 %v2368
        %4247 = vmatmul.mubr.f32.gmra.mxu0 %v2364
        %v4248 = vpop.f32.mrf.mxu0
        %v4249 = vadd.f32 %v4178, %v4248
        %v4250 = vpop.f32.mrf.mxu0
        %v4251 = vadd.f32 %v4180, %v4250
        %4252 = vdwg.mxu0
        %4253 = vmatprep.subr.mxu0 %v1459
        %4254 = vmatpush1.msra.mxu0 %v1458
        %4255 = vmatprep.subr.mxu0 %v1455
        %4256 = vmatpush1.msra.mxu0 %v1454
        %4257 = vmatprep.subr.mxu0 %v1451
        %4258 = vmatpush1.msra.mxu0 %v1450
        %4259 = vmatprep.subr.mxu0 %v1447
        %4260 = vmatpush1.msra.mxu0 %v1446
        %4261 = vmatprep.subr.mxu0 %v1443
        %4262 = vmatpush1.msra.mxu0 %v1442
        %4263 = vmatprep.subr.mxu0 %v1439
        %4264 = vmatpush1.msra.mxu0 %v1438
        %4265 = vmatprep.subr.mxu0 %v1435
        %4266 = vmatpush1.msra.mxu0 %v1434
        %4267 = vmatprep.subr.mxu0 %v1431
        %4268 = vmatpush1.msra.mxu0 %v1430
        %4269 = vmatprep.subr.mxu0 %v1427
        %4270 = vmatpush1.msra.mxu0 %v1426
        %4271 = vmatprep.subr.mxu0 %v1423
        %4272 = vmatpush1.msra.mxu0 %v1422
        %4273 = vmatprep.subr.mxu0 %v1419
        %4274 = vmatpush1.msra.mxu0 %v1418
        %4275 = vmatprep.subr.mxu0 %v1415
        %4276 = vmatpush1.msra.mxu0 %v1414
        %4277 = vmatprep.subr.mxu0 %v1411
        %4278 = vmatpush1.msra.mxu0 %v1410
        %4279 = vmatprep.subr.mxu0 %v1407
        %4280 = vmatpush1.msra.mxu0 %v1406
        %4281 = vmatprep.subr.mxu0 %v1403
        %4282 = vmatpush1.msra.mxu0 %v1402
        %4283 = vmatprep.subr.mxu0 %v1399
        %4284 = vmatpush1.msra.mxu0 %v1398
        %4285 = vmatprep.subr.mxu0 %v1523
        %4286 = vmatpush2.msra.mxu0 %v1522
        %4287 = vmatprep.subr.mxu0 %v1519
        %4288 = vmatpush2.msra.mxu0 %v1518
        %4289 = vmatprep.subr.mxu0 %v1515
        %4290 = vmatpush2.msra.mxu0 %v1514
        %4291 = vmatprep.subr.mxu0 %v1511
        %4292 = vmatpush2.msra.mxu0 %v1510
        %4293 = vmatprep.subr.mxu0 %v1507
        %4294 = vmatpush2.msra.mxu0 %v1506
        %4295 = vmatprep.subr.mxu0 %v1503
        %4296 = vmatpush2.msra.mxu0 %v1502
        %4297 = vmatprep.subr.mxu0 %v1499
        %4298 = vmatpush2.msra.mxu0 %v1498
        %4299 = vmatprep.subr.mxu0 %v1495
        %4300 = vmatpush2.msra.mxu0 %v1494
        %4301 = vmatprep.subr.mxu0 %v1491
        %4302 = vmatpush2.msra.mxu0 %v1490
        %4303 = vmatprep.subr.mxu0 %v1487
        %4304 = vmatpush2.msra.mxu0 %v1486
        %4305 = vmatprep.subr.mxu0 %v1483
        %4306 = vmatpush2.msra.mxu0 %v1482
        %4307 = vmatprep.subr.mxu0 %v1479
        %4308 = vmatpush2.msra.mxu0 %v1478
        %4309 = vmatprep.subr.mxu0 %v1475
        %4310 = vmatpush2.msra.mxu0 %v1474
        %4311 = vmatprep.subr.mxu0 %v1471
        %4312 = vmatpush2.msra.mxu0 %v1470
        %4313 = vmatprep.subr.mxu0 %v1467
        %4314 = vmatpush2.msra.mxu0 %v1466
        %4315 = vmatprep.subr.mxu0 %v1463
        %4316 = vmatpush2.msra.mxu0 %v1462
        %4317 = vmatprep.mubr.f32.mxu0 %v2376
        %4318 = vmatmul.mubr.f32.gmra.mxu0 %v2372
        %v4319 = vpop.f32.mrf.mxu0
        %v4320 = vadd.f32 %v4249, %v4319
        %v4321 = vpop.f32.mrf.mxu0
        %v4322 = vadd.f32 %v4251, %v4321
        %4323 = vdwg.mxu0
        %4324 = vmatprep.subr.mxu0 %v1587
        %4325 = vmatpush1.msra.mxu0 %v1586
        %4326 = vmatprep.subr.mxu0 %v1583
        %4327 = vmatpush1.msra.mxu0 %v1582
        %4328 = vmatprep.subr.mxu0 %v1579
        %4329 = vmatpush1.msra.mxu0 %v1578
        %4330 = vmatprep.subr.mxu0 %v1575
        %4331 = vmatpush1.msra.mxu0 %v1574
        %4332 = vmatprep.subr.mxu0 %v1571
        %4333 = vmatpush1.msra.mxu0 %v1570
        %4334 = vmatprep.subr.mxu0 %v1567
        %4335 = vmatpush1.msra.mxu0 %v1566
        %4336 = vmatprep.subr.mxu0 %v1563
        %4337 = vmatpush1.msra.mxu0 %v1562
        %4338 = vmatprep.subr.mxu0 %v1559
        %4339 = vmatpush1.msra.mxu0 %v1558
        %4340 = vmatprep.subr.mxu0 %v1555
        %4341 = vmatpush1.msra.mxu0 %v1554
        %4342 = vmatprep.subr.mxu0 %v1551
        %4343 = vmatpush1.msra.mxu0 %v1550
        %4344 = vmatprep.subr.mxu0 %v1547
        %4345 = vmatpush1.msra.mxu0 %v1546
        %4346 = vmatprep.subr.mxu0 %v1543
        %4347 = vmatpush1.msra.mxu0 %v1542
        %4348 = vmatprep.subr.mxu0 %v1539
        %4349 = vmatpush1.msra.mxu0 %v1538
        %4350 = vmatprep.subr.mxu0 %v1535
        %4351 = vmatpush1.msra.mxu0 %v1534
        %4352 = vmatprep.subr.mxu0 %v1531
        %4353 = vmatpush1.msra.mxu0 %v1530
        %4354 = vmatprep.subr.mxu0 %v1527
        %4355 = vmatpush1.msra.mxu0 %v1526
        %4356 = vmatprep.subr.mxu0 %v1651
        %4357 = vmatpush2.msra.mxu0 %v1650
        %4358 = vmatprep.subr.mxu0 %v1647
        %4359 = vmatpush2.msra.mxu0 %v1646
        %4360 = vmatprep.subr.mxu0 %v1643
        %4361 = vmatpush2.msra.mxu0 %v1642
        %4362 = vmatprep.subr.mxu0 %v1639
        %4363 = vmatpush2.msra.mxu0 %v1638
        %4364 = vmatprep.subr.mxu0 %v1635
        %4365 = vmatpush2.msra.mxu0 %v1634
        %4366 = vmatprep.subr.mxu0 %v1631
        %4367 = vmatpush2.msra.mxu0 %v1630
        %4368 = vmatprep.subr.mxu0 %v1627
        %4369 = vmatpush2.msra.mxu0 %v1626
        %4370 = vmatprep.subr.mxu0 %v1623
        %4371 = vmatpush2.msra.mxu0 %v1622
        %4372 = vmatprep.subr.mxu0 %v1619
        %4373 = vmatpush2.msra.mxu0 %v1618
        %4374 = vmatprep.subr.mxu0 %v1615
        %4375 = vmatpush2.msra.mxu0 %v1614
        %4376 = vmatprep.subr.mxu0 %v1611
        %4377 = vmatpush2.msra.mxu0 %v1610
        %4378 = vmatprep.subr.mxu0 %v1607
        %4379 = vmatpush2.msra.mxu0 %v1606
        %4380 = vmatprep.subr.mxu0 %v1603
        %4381 = vmatpush2.msra.mxu0 %v1602
        %4382 = vmatprep.subr.mxu0 %v1599
        %4383 = vmatpush2.msra.mxu0 %v1598
        %4384 = vmatprep.subr.mxu0 %v1595
        %4385 = vmatpush2.msra.mxu0 %v1594
        %4386 = vmatprep.subr.mxu0 %v1591
        %4387 = vmatpush2.msra.mxu0 %v1590
        %4388 = vmatprep.mubr.f32.mxu0 %v2384
        %4389 = vmatmul.mubr.f32.gmra.mxu0 %v2380
        %v4390 = vpop.f32.mrf.mxu0
        %v4391 = vadd.f32 %v4320, %v4390
        %v4392 = vpop.f32.mrf.mxu0
        %v4393 = vadd.f32 %v4322, %v4392
        %4394 = vdwg.mxu0
        %4395 = vmatprep.subr.mxu0 %v1715
        %4396 = vmatpush1.msra.mxu0 %v1714
        %4397 = vmatprep.subr.mxu0 %v1711
        %4398 = vmatpush1.msra.mxu0 %v1710
        %4399 = vmatprep.subr.mxu0 %v1707
        %4400 = vmatpush1.msra.mxu0 %v1706
        %4401 = vmatprep.subr.mxu0 %v1703
        %4402 = vmatpush1.msra.mxu0 %v1702
        %4403 = vmatprep.subr.mxu0 %v1699
        %4404 = vmatpush1.msra.mxu0 %v1698
        %4405 = vmatprep.subr.mxu0 %v1695
        %4406 = vmatpush1.msra.mxu0 %v1694
        %4407 = vmatprep.subr.mxu0 %v1691
        %4408 = vmatpush1.msra.mxu0 %v1690
        %4409 = vmatprep.subr.mxu0 %v1687
        %4410 = vmatpush1.msra.mxu0 %v1686
        %4411 = vmatprep.subr.mxu0 %v1683
        %4412 = vmatpush1.msra.mxu0 %v1682
        %4413 = vmatprep.subr.mxu0 %v1679
        %4414 = vmatpush1.msra.mxu0 %v1678
        %4415 = vmatprep.subr.mxu0 %v1675
        %4416 = vmatpush1.msra.mxu0 %v1674
        %4417 = vmatprep.subr.mxu0 %v1671
        %4418 = vmatpush1.msra.mxu0 %v1670
        %4419 = vmatprep.subr.mxu0 %v1667
        %4420 = vmatpush1.msra.mxu0 %v1666
        %4421 = vmatprep.subr.mxu0 %v1663
        %4422 = vmatpush1.msra.mxu0 %v1662
        %4423 = vmatprep.subr.mxu0 %v1659
        %4424 = vmatpush1.msra.mxu0 %v1658
        %4425 = vmatprep.subr.mxu0 %v1655
        %4426 = vmatpush1.msra.mxu0 %v1654
        %4427 = vmatprep.subr.mxu0 %v1779
        %4428 = vmatpush2.msra.mxu0 %v1778
        %4429 = vmatprep.subr.mxu0 %v1775
        %4430 = vmatpush2.msra.mxu0 %v1774
        %4431 = vmatprep.subr.mxu0 %v1771
        %4432 = vmatpush2.msra.mxu0 %v1770
        %4433 = vmatprep.subr.mxu0 %v1767
        %4434 = vmatpush2.msra.mxu0 %v1766
        %4435 = vmatprep.subr.mxu0 %v1763
        %4436 = vmatpush2.msra.mxu0 %v1762
        %4437 = vmatprep.subr.mxu0 %v1759
        %4438 = vmatpush2.msra.mxu0 %v1758
        %4439 = vmatprep.subr.mxu0 %v1755
        %4440 = vmatpush2.msra.mxu0 %v1754
        %4441 = vmatprep.subr.mxu0 %v1751
        %4442 = vmatpush2.msra.mxu0 %v1750
        %4443 = vmatprep.subr.mxu0 %v1747
        %4444 = vmatpush2.msra.mxu0 %v1746
        %4445 = vmatprep.subr.mxu0 %v1743
        %4446 = vmatpush2.msra.mxu0 %v1742
        %4447 = vmatprep.subr.mxu0 %v1739
        %4448 = vmatpush2.msra.mxu0 %v1738
        %4449 = vmatprep.subr.mxu0 %v1735
        %4450 = vmatpush2.msra.mxu0 %v1734
        %4451 = vmatprep.subr.mxu0 %v1731
        %4452 = vmatpush2.msra.mxu0 %v1730
        %4453 = vmatprep.subr.mxu0 %v1727
        %4454 = vmatpush2.msra.mxu0 %v1726
        %4455 = vmatprep.subr.mxu0 %v1723
        %4456 = vmatpush2.msra.mxu0 %v1722
        %4457 = vmatprep.subr.mxu0 %v1719
        %4458 = vmatpush2.msra.mxu0 %v1718
        %4459 = vmatprep.mubr.f32.mxu0 %v2392
        %4460 = vmatmul.mubr.f32.gmra.mxu0 %v2388
        %v4461 = vpop.f32.mrf.mxu0
        %v4462 = vadd.f32 %v4391, %v4461
        %v4463 = vpop.f32.mrf.mxu0
        %v4464 = vadd.f32 %v4393, %v4463
        %4465 = vdwg.mxu0
        %4466 = vmatprep.subr.mxu0 %v1843
        %4467 = vmatpush1.msra.mxu0 %v1842
        %4468 = vmatprep.subr.mxu0 %v1839
        %4469 = vmatpush1.msra.mxu0 %v1838
        %4470 = vmatprep.subr.mxu0 %v1835
        %4471 = vmatpush1.msra.mxu0 %v1834
        %4472 = vmatprep.subr.mxu0 %v1831
        %4473 = vmatpush1.msra.mxu0 %v1830
        %4474 = vmatprep.subr.mxu0 %v1827
        %4475 = vmatpush1.msra.mxu0 %v1826
        %4476 = vmatprep.subr.mxu0 %v1823
        %4477 = vmatpush1.msra.mxu0 %v1822
        %4478 = vmatprep.subr.mxu0 %v1819
        %4479 = vmatpush1.msra.mxu0 %v1818
        %4480 = vmatprep.subr.mxu0 %v1815
        %4481 = vmatpush1.msra.mxu0 %v1814
        %4482 = vmatprep.subr.mxu0 %v1811
        %4483 = vmatpush1.msra.mxu0 %v1810
        %4484 = vmatprep.subr.mxu0 %v1807
        %4485 = vmatpush1.msra.mxu0 %v1806
        %4486 = vmatprep.subr.mxu0 %v1803
        %4487 = vmatpush1.msra.mxu0 %v1802
        %4488 = vmatprep.subr.mxu0 %v1799
        %4489 = vmatpush1.msra.mxu0 %v1798
        %4490 = vmatprep.subr.mxu0 %v1795
        %4491 = vmatpush1.msra.mxu0 %v1794
        %4492 = vmatprep.subr.mxu0 %v1791
        %4493 = vmatpush1.msra.mxu0 %v1790
        %4494 = vmatprep.subr.mxu0 %v1787
        %4495 = vmatpush1.msra.mxu0 %v1786
        %4496 = vmatprep.subr.mxu0 %v1783
        %4497 = vmatpush1.msra.mxu0 %v1782
        %4498 = vmatprep.subr.mxu0 %v1907
        %4499 = vmatpush2.msra.mxu0 %v1906
        %4500 = vmatprep.subr.mxu0 %v1903
        %4501 = vmatpush2.msra.mxu0 %v1902
        %4502 = vmatprep.subr.mxu0 %v1899
        %4503 = vmatpush2.msra.mxu0 %v1898
        %4504 = vmatprep.subr.mxu0 %v1895
        %4505 = vmatpush2.msra.mxu0 %v1894
        %4506 = vmatprep.subr.mxu0 %v1891
        %4507 = vmatpush2.msra.mxu0 %v1890
        %4508 = vmatprep.subr.mxu0 %v1887
        %4509 = vmatpush2.msra.mxu0 %v1886
        %4510 = vmatprep.subr.mxu0 %v1883
        %4511 = vmatpush2.msra.mxu0 %v1882
        %4512 = vmatprep.subr.mxu0 %v1879
        %4513 = vmatpush2.msra.mxu0 %v1878
        %4514 = vmatprep.subr.mxu0 %v1875
        %4515 = vmatpush2.msra.mxu0 %v1874
        %4516 = vmatprep.subr.mxu0 %v1871
        %4517 = vmatpush2.msra.mxu0 %v1870
        %4518 = vmatprep.subr.mxu0 %v1867
        %4519 = vmatpush2.msra.mxu0 %v1866
        %4520 = vmatprep.subr.mxu0 %v1863
        %4521 = vmatpush2.msra.mxu0 %v1862
        %4522 = vmatprep.subr.mxu0 %v1859
        %4523 = vmatpush2.msra.mxu0 %v1858
        %4524 = vmatprep.subr.mxu0 %v1855
        %4525 = vmatpush2.msra.mxu0 %v1854
        %4526 = vmatprep.subr.mxu0 %v1851
        %4527 = vmatpush2.msra.mxu0 %v1850
        %4528 = vmatprep.subr.mxu0 %v1847
        %4529 = vmatpush2.msra.mxu0 %v1846
        %4530 = vmatprep.mubr.f32.mxu0 %v2400
        %4531 = vmatmul.mubr.f32.gmra.mxu0 %v2396
        %v4532 = vpop.f32.mrf.mxu0
        %v4533 = vadd.f32 %v4462, %v4532
        %v4534 = vpop.f32.mrf.mxu0
        %v4535 = vadd.f32 %v4464, %v4534
        %4536 = vdwg.mxu0
        %4537 = vmatprep.subr.mxu0 %v1971
        %4538 = vmatpush1.msra.mxu0 %v1970
        %4539 = vmatprep.subr.mxu0 %v1967
        %4540 = vmatpush1.msra.mxu0 %v1966
        %4541 = vmatprep.subr.mxu0 %v1963
        %4542 = vmatpush1.msra.mxu0 %v1962
        %4543 = vmatprep.subr.mxu0 %v1959
        %4544 = vmatpush1.msra.mxu0 %v1958
        %4545 = vmatprep.subr.mxu0 %v1955
        %4546 = vmatpush1.msra.mxu0 %v1954
        %4547 = vmatprep.subr.mxu0 %v1951
        %4548 = vmatpush1.msra.mxu0 %v1950
        %4549 = vmatprep.subr.mxu0 %v1947
        %4550 = vmatpush1.msra.mxu0 %v1946
        %4551 = vmatprep.subr.mxu0 %v1943
        %4552 = vmatpush1.msra.mxu0 %v1942
        %4553 = vmatprep.subr.mxu0 %v1939
        %4554 = vmatpush1.msra.mxu0 %v1938
        %4555 = vmatprep.subr.mxu0 %v1935
        %4556 = vmatpush1.msra.mxu0 %v1934
        %4557 = vmatprep.subr.mxu0 %v1931
        %4558 = vmatpush1.msra.mxu0 %v1930
        %4559 = vmatprep.subr.mxu0 %v1927
        %4560 = vmatpush1.msra.mxu0 %v1926
        %4561 = vmatprep.subr.mxu0 %v1923
        %4562 = vmatpush1.msra.mxu0 %v1922
        %4563 = vmatprep.subr.mxu0 %v1919
        %4564 = vmatpush1.msra.mxu0 %v1918
        %4565 = vmatprep.subr.mxu0 %v1915
        %4566 = vmatpush1.msra.mxu0 %v1914
        %4567 = vmatprep.subr.mxu0 %v1911
        %4568 = vmatpush1.msra.mxu0 %v1910
        %4569 = vmatprep.subr.mxu0 %v2035
        %4570 = vmatpush2.msra.mxu0 %v2034
        %4571 = vmatprep.subr.mxu0 %v2031
        %4572 = vmatpush2.msra.mxu0 %v2030
        %4573 = vmatprep.subr.mxu0 %v2027
        %4574 = vmatpush2.msra.mxu0 %v2026
        %4575 = vmatprep.subr.mxu0 %v2023
        %4576 = vmatpush2.msra.mxu0 %v2022
        %4577 = vmatprep.subr.mxu0 %v2019
        %4578 = vmatpush2.msra.mxu0 %v2018
        %4579 = vmatprep.subr.mxu0 %v2015
        %4580 = vmatpush2.msra.mxu0 %v2014
        %4581 = vmatprep.subr.mxu0 %v2011
        %4582 = vmatpush2.msra.mxu0 %v2010
        %4583 = vmatprep.subr.mxu0 %v2007
        %4584 = vmatpush2.msra.mxu0 %v2006
        %4585 = vmatprep.subr.mxu0 %v2003
        %4586 = vmatpush2.msra.mxu0 %v2002
        %4587 = vmatprep.subr.mxu0 %v1999
        %4588 = vmatpush2.msra.mxu0 %v1998
        %4589 = vmatprep.subr.mxu0 %v1995
        %4590 = vmatpush2.msra.mxu0 %v1994
        %4591 = vmatprep.subr.mxu0 %v1991
        %4592 = vmatpush2.msra.mxu0 %v1990
        %4593 = vmatprep.subr.mxu0 %v1987
        %4594 = vmatpush2.msra.mxu0 %v1986
        %4595 = vmatprep.subr.mxu0 %v1983
        %4596 = vmatpush2.msra.mxu0 %v1982
        %4597 = vmatprep.subr.mxu0 %v1979
        %4598 = vmatpush2.msra.mxu0 %v1978
        %4599 = vmatprep.subr.mxu0 %v1975
        %4600 = vmatpush2.msra.mxu0 %v1974
        %4601 = vmatprep.mubr.f32.mxu0 %v2408
        %4602 = vmatmul.mubr.f32.gmra.mxu0 %v2404
        %v4603 = vpop.f32.mrf.mxu0
        %v4604 = vadd.f32 %v4533, %v4603
        %v4605 = vpop.f32.mrf.mxu0
        %v4606 = vadd.f32 %v4535, %v4605
        %4607 = vdwg.mxu0
        %4608 = vmatprep.subr.mxu0 %v2099
        %4609 = vmatpush1.msra.mxu0 %v2098
        %4610 = vmatprep.subr.mxu0 %v2095
        %4611 = vmatpush1.msra.mxu0 %v2094
        %4612 = vmatprep.subr.mxu0 %v2091
        %4613 = vmatpush1.msra.mxu0 %v2090
        %4614 = vmatprep.subr.mxu0 %v2087
        %4615 = vmatpush1.msra.mxu0 %v2086
        %4616 = vmatprep.subr.mxu0 %v2083
        %4617 = vmatpush1.msra.mxu0 %v2082
        %4618 = vmatprep.subr.mxu0 %v2079
        %4619 = vmatpush1.msra.mxu0 %v2078
        %4620 = vmatprep.subr.mxu0 %v2075
        %4621 = vmatpush1.msra.mxu0 %v2074
        %4622 = vmatprep.subr.mxu0 %v2071
        %4623 = vmatpush1.msra.mxu0 %v2070
        %4624 = vmatprep.subr.mxu0 %v2067
        %4625 = vmatpush1.msra.mxu0 %v2066
        %4626 = vmatprep.subr.mxu0 %v2063
        %4627 = vmatpush1.msra.mxu0 %v2062
        %4628 = vmatprep.subr.mxu0 %v2059
        %4629 = vmatpush1.msra.mxu0 %v2058
        %4630 = vmatprep.subr.mxu0 %v2055
        %4631 = vmatpush1.msra.mxu0 %v2054
        %4632 = vmatprep.subr.mxu0 %v2051
        %4633 = vmatpush1.msra.mxu0 %v2050
        %4634 = vmatprep.subr.mxu0 %v2047
        %4635 = vmatpush1.msra.mxu0 %v2046
        %4636 = vmatprep.subr.mxu0 %v2043
        %4637 = vmatpush1.msra.mxu0 %v2042
        %4638 = vmatprep.subr.mxu0 %v2039
        %4639 = vmatpush1.msra.mxu0 %v2038
        %4640 = vmatprep.subr.mxu0 %v2163
        %4641 = vmatpush2.msra.mxu0 %v2162
        %4642 = vmatprep.subr.mxu0 %v2159
        %4643 = vmatpush2.msra.mxu0 %v2158
        %4644 = vmatprep.subr.mxu0 %v2155
        %4645 = vmatpush2.msra.mxu0 %v2154
        %4646 = vmatprep.subr.mxu0 %v2151
        %4647 = vmatpush2.msra.mxu0 %v2150
        %4648 = vmatprep.subr.mxu0 %v2147
        %4649 = vmatpush2.msra.mxu0 %v2146
        %4650 = vmatprep.subr.mxu0 %v2143
        %4651 = vmatpush2.msra.mxu0 %v2142
        %4652 = vmatprep.subr.mxu0 %v2139
        %4653 = vmatpush2.msra.mxu0 %v2138
        %4654 = vmatprep.subr.mxu0 %v2135
        %4655 = vmatpush2.msra.mxu0 %v2134
        %4656 = vmatprep.subr.mxu0 %v2131
        %4657 = vmatpush2.msra.mxu0 %v2130
        %4658 = vmatprep.subr.mxu0 %v2127
        %4659 = vmatpush2.msra.mxu0 %v2126
        %4660 = vmatprep.subr.mxu0 %v2123
        %4661 = vmatpush2.msra.mxu0 %v2122
        %4662 = vmatprep.subr.mxu0 %v2119
        %4663 = vmatpush2.msra.mxu0 %v2118
        %4664 = vmatprep.subr.mxu0 %v2115
        %4665 = vmatpush2.msra.mxu0 %v2114
        %4666 = vmatprep.subr.mxu0 %v2111
        %4667 = vmatpush2.msra.mxu0 %v2110
        %4668 = vmatprep.subr.mxu0 %v2107
        %4669 = vmatpush2.msra.mxu0 %v2106
        %4670 = vmatprep.subr.mxu0 %v2103
        %4671 = vmatpush2.msra.mxu0 %v2102
        %4672 = vmatprep.mubr.f32.mxu0 %v2416
        %4673 = vmatmul.mubr.f32.gmra.mxu0 %v2412
        %v4674 = vpop.f32.mrf.mxu0
        %v4675 = vadd.f32 %v4604, %v4674
        %v4676 = vpop.f32.mrf.mxu0
        %v4677 = vadd.f32 %v4606, %v4676
        %4678 = vdwg.mxu0
        %4679 = vmatprep.subr.mxu0 %v2227
        %4680 = vmatpush1.msra.mxu0 %v2226
        %4681 = vmatprep.subr.mxu0 %v2223
        %4682 = vmatpush1.msra.mxu0 %v2222
        %4683 = vmatprep.subr.mxu0 %v2219
        %4684 = vmatpush1.msra.mxu0 %v2218
        %4685 = vmatprep.subr.mxu0 %v2215
        %4686 = vmatpush1.msra.mxu0 %v2214
        %4687 = vmatprep.subr.mxu0 %v2211
        %4688 = vmatpush1.msra.mxu0 %v2210
        %4689 = vmatprep.subr.mxu0 %v2207
        %4690 = vmatpush1.msra.mxu0 %v2206
        %4691 = vmatprep.subr.mxu0 %v2203
        %4692 = vmatpush1.msra.mxu0 %v2202
        %4693 = vmatprep.subr.mxu0 %v2199
        %4694 = vmatpush1.msra.mxu0 %v2198
        %4695 = vmatprep.subr.mxu0 %v2195
        %4696 = vmatpush1.msra.mxu0 %v2194
        %4697 = vmatprep.subr.mxu0 %v2191
        %4698 = vmatpush1.msra.mxu0 %v2190
        %4699 = vmatprep.subr.mxu0 %v2187
        %4700 = vmatpush1.msra.mxu0 %v2186
        %4701 = vmatprep.subr.mxu0 %v2183
        %4702 = vmatpush1.msra.mxu0 %v2182
        %4703 = vmatprep.subr.mxu0 %v2179
        %4704 = vmatpush1.msra.mxu0 %v2178
        %4705 = vmatprep.subr.mxu0 %v2175
        %4706 = vmatpush1.msra.mxu0 %v2174
        %4707 = vmatprep.subr.mxu0 %v2171
        %4708 = vmatpush1.msra.mxu0 %v2170
        %4709 = vmatprep.subr.mxu0 %v2167
        %4710 = vmatpush1.msra.mxu0 %v2166
        %4711 = vmatprep.subr.mxu0 %v2291
        %4712 = vmatpush2.msra.mxu0 %v2290
        %4713 = vmatprep.subr.mxu0 %v2287
        %4714 = vmatpush2.msra.mxu0 %v2286
        %4715 = vmatprep.subr.mxu0 %v2283
        %4716 = vmatpush2.msra.mxu0 %v2282
        %4717 = vmatprep.subr.mxu0 %v2279
        %4718 = vmatpush2.msra.mxu0 %v2278
        %4719 = vmatprep.subr.mxu0 %v2275
        %4720 = vmatpush2.msra.mxu0 %v2274
        %4721 = vmatprep.subr.mxu0 %v2271
        %4722 = vmatpush2.msra.mxu0 %v2270
        %4723 = vmatprep.subr.mxu0 %v2267
        %4724 = vmatpush2.msra.mxu0 %v2266
        %4725 = vmatprep.subr.mxu0 %v2263
        %4726 = vmatpush2.msra.mxu0 %v2262
        %4727 = vmatprep.subr.mxu0 %v2259
        %4728 = vmatpush2.msra.mxu0 %v2258
        %4729 = vmatprep.subr.mxu0 %v2255
        %4730 = vmatpush2.msra.mxu0 %v2254
        %4731 = vmatprep.subr.mxu0 %v2251
        %4732 = vmatpush2.msra.mxu0 %v2250
        %4733 = vmatprep.subr.mxu0 %v2247
        %4734 = vmatpush2.msra.mxu0 %v2246
        %4735 = vmatprep.subr.mxu0 %v2243
        %4736 = vmatpush2.msra.mxu0 %v2242
        %4737 = vmatprep.subr.mxu0 %v2239
        %4738 = vmatpush2.msra.mxu0 %v2238
        %4739 = vmatprep.subr.mxu0 %v2235
        %4740 = vmatpush2.msra.mxu0 %v2234
        %4741 = vmatprep.subr.mxu0 %v2231
        %4742 = vmatpush2.msra.mxu0 %v2230
        %4743 = vmatprep.mubr.f32.mxu0 %v2424
        %4744 = vmatmul.mubr.f32.gmra.mxu0 %v2420
        %v4745 = vpop.f32.mrf.mxu0
        %v4746 = vadd.f32 %v4675, %v4745
        %v4747 = vpop.f32.mrf.mxu0
        %v4748 = vadd.f32 %v4677, %v4747
        %4749 = vdwg.mxu0
        %v4750 = vmax.f32 %v3610, 1.0
        %v4751 = vmax.f32 %v3612, 1.0
        %v4752 = vmax.f32 %v4746, 1.0
        %v4753 = vmax.f32 %v4748, 1.0
        %v4754 = vmin.f32 %v4750, 1.0
        %v4755 = vmin.f32 %v4751, 1.0
        %v4756 = vmin.f32 %v4752, 1.0
        %v4757 = vmin.f32 %v4753, 1.0
        %v4762 = vcombine.low %v4754, %v4755
        %v4763 = vcombine.low %v4756, %v4757
        %v4765 = vunpack.c.l.s4 1966171168
        %v4766 = vunpack.c.0.s8 %v4765
        %v4767 = vlaneseq
        %v4768 = vshrl.u32 %v4767, 7
        %v4769 = vsub.s32 %v4766, %v4768
        %v4770 = vrot.slane %v4762, %v4769
        %v4772 = vunpack.c.l.s4 1966171168
        %v4773 = vunpack.c.0.s8 %v4772
        %v4774 = vlaneseq
        %v4775 = vshrl.u32 %v4774, 7
        %v4776 = vsub.s32 %v4773, %v4775
        %v4777 = vrot.slane %v4763, %v4776
        %v4778 = vcombine.low %v4770, %v4777
        %v4780 = vunpack.c.l.s4 1966171168
        %v4781 = vunpack.c.0.s8 %v4780
        %v4782 = vlaneseq
        %v4783 = vshrl.u32 %v4782, 7
        %v4784 = vsub.s32 %v4781, %v4783
        %v4785 = vrot.slane %v4778, %v4784
        %v4787 = vlaneseq
        %vm4788 = vcmp.ge.s32.totalorder %v4787, 0
        %vm4789 = vcmp.lt.s32.totalorder %v4787, 512
        %vm4790 = vmand %vm4788, %vm4789
        %4791 = vst.msk [vmem:[%s236] sm:$0xf] %vm4790, %v4785
        %s4792 = sand.u32 %s102, 1
        %s4793 = scalar_lea.sflag [#allocation4], %s4792
        %s4794 = sand.u32 %s102, 1
        %s4795 = smul.addr %s4794, 4
        %s4796 = scalar_lea.vmem [#allocation8], %s4795
        // Predicated region
        $region45: #{tpu_custom_call.1} parent=31 // pred_check
          %p4797 = pneg %p112
        $region46: #{tpu_custom_call.1} parent=31 // pred_check_branch
          %4799 = sbr.rel (%p4797) target = $region48
        $region47: #{tpu_custom_call.1} parent=31 // pred_region
          %s4800 = smul.u32 4, %s21
          %s4802 = ssub.s32 64, 64
          %4803 = vsyncadd %s4793, %s4802
          %s4804 = smul.addr %s4800, 16
          %s4805 = scalar_lea.hbm %s3, %s4804
          %s4807 = sshll.u32 %s4796, 4
          %s4808 = int_to_ptr.vmem [resolvable:$true] %s4807
          %4810 = dma.vmem_to_hbm [thread:$0]  %s4808, 64, %s4805, %s4793
        $region48: #{tpu_custom_call.1} parent=31 // pred_fallthru
          _
      $region32: #{tpu_custom_call.1} parent=5 // pred_fallthru
        _
      %p4811 = scmp.le.s32.totalorder 2, %s16
      // Predicated region
      $region49: #{tpu_custom_call.1} parent=5 // pred_check
        %p4812 = pneg %p4811
      $region50: #{tpu_custom_call.1} parent=5 // pred_check_branch
        %4814 = sbr.rel (%p4812) target = $region52
      $region51: #{tpu_custom_call.1} parent=5 // pred_region
        %s4815 = ssub.s32 %s16, 2
        // Predicated region
        $region53: #{tpu_custom_call.1} parent=51 // pred_check
          %p4816 = pneg %p118
        $region54: #{tpu_custom_call.1} parent=51 // pred_check_branch
          %4818 = sbr.rel (%p4816) target = $region56
        $region55: #{tpu_custom_call.1} parent=51 // pred_region
          %s4819 = sand.u32 %s103, 1
          %s4820 = scalar_lea.sflag [#allocation4], %s4819
          %s4821 = sand.u32 %s103, 1
          %s4822 = smul.addr %s4821, 4
          %s4823 = scalar_lea.vmem [#allocation8], %s4822
          %4824 = dma.done %s4820, 64
        $region56: #{tpu_custom_call.1} parent=51 // pred_fallthru
          _
      $region52: #{tpu_custom_call.1} parent=5 // pred_fallthru
        _
    $region6: #{tpu_custom_call.1} parent=1 // loop_footer
      %s20 = sadd.s32 1, %s16
    $region7: #{tpu_custom_call.1} parent=1 // loop_footer_branch
      %15 = sbr.rel target = $region3
    $region8: #{tpu_custom_call.1} parent=1 // loop_exit
      _
    %4825 = vsyncpa [#allocation3], 1
    %s4826 = scalar_lea.sflag [#allocation3], 1
    %4827 = vsyncpa %s4826, 1
    %4828 = vsyncpa [#allocation6], 1
    %s4829 = scalar_lea.sflag [#allocation6], 1
    %4830 = vsyncpa %s4829, 1
    %4831 = vsyncpa [#allocation4], 1
    %s4832 = scalar_lea.sflag [#allocation4], 1
    %4833 = vsyncpa %s4832, 1

</llo_original>
